<compile_context>
chip_gen: v5e
topology: v5e:2x2
jax: 0.10.0
libtpu: 0.0.40
codegen_flags: <defaults>
</compile_context>

<pallas_src>
import jax
import jax.numpy as jnp
from jax.experimental import pallas as pl
from jax.experimental.pallas import tpu as pltpu

HID1 = 256       # fc1 out
HID2 = 128       # fc2 out / LSTM input
LSTM_H = 128     # LSTM hidden
EPS = 1e-12


def _leaky_relu(x, slope=0.2):
    return jnp.where(x >= 0, x, slope * x)


def _round_up(n, m):
    return ((n + m - 1) // m) * m


def _encoder_kernel(x_ref, w1_ref, b1_ref, w2_ref, b2_ref,
                    wih_ref, whh_ref, blstm_ref, w3_ref, b3_ref,
                    out_ref,
                    gates_ref, lstm_ref):
    Bb, Tp, _ = x_ref.shape
    H = LSTM_H

    # ---- F.normalize: L2 norm over the time axis, per batch row -------------
    xs = []
    for b in range(Bb):                                    # static, trace-time
        xb = x_ref[b]                                      # (Tp, D)
        nrm = jnp.sqrt(jnp.sum(xb * xb, axis=0, keepdims=True))   # (1, D)
        xs.append(xb / jnp.maximum(nrm, EPS))
    # rows ordered r = b*Tp + t (batch-major); free concat since Tp % 8 == 0
    x2 = jnp.concatenate(xs, axis=0) if Bb > 1 else xs[0]  # (Bb*Tp, D)

    # ---- fc1 + leaky, fc2 + leaky: all Bb*Tp rows in one MXU call each ------
    h1 = _leaky_relu(
        jnp.dot(x2, w1_ref[...], preferred_element_type=jnp.float32) + b1_ref[...])
    h2 = _leaky_relu(
        jnp.dot(h1, w2_ref[...], preferred_element_type=jnp.float32) + b2_ref[...])

    # ---- LSTM input projection hoisted out of the recurrence ----------------
    gin = (jnp.dot(h2, wih_ref[...], preferred_element_type=jnp.float32)
           + blstm_ref[...])                               # (Bb*Tp, 4H)
    for b in range(Bb):
        gates_ref[b] = gin[b * Tp:(b + 1) * Tp, :]         # (Tp, 4H) per batch

    # ---- recurrence: h/c carried in vregs, one small matmul per step --------
    whh = whh_ref[...]

    def step(t, carry):
        h, c = carry
        if Bb > 1:
            g_in = jnp.concatenate(
                [gates_ref[b, pl.ds(t, 1), :] for b in range(Bb)], axis=0)  # (Bb, 4H)
        else:
            g_in = gates_ref[0, pl.ds(t, 1), :]
        g = g_in + jnp.dot(h, whh, preferred_element_type=jnp.float32)
        i = jax.nn.sigmoid(g[:, 0 * H:1 * H])
        f = jax.nn.sigmoid(g[:, 1 * H:2 * H])
        gg = jnp.tanh(g[:, 2 * H:3 * H])
        o = jax.nn.sigmoid(g[:, 3 * H:4 * H])
        c_new = f * c + i * gg
        h_new = o * jnp.tanh(c_new)
        for b in range(Bb):
            lstm_ref[b, pl.ds(t, 1), :] = h_new[b:b + 1, :]
        return h_new, c_new

    h0 = jnp.zeros((Bb, H), jnp.float32)
    c0 = jnp.zeros((Bb, H), jnp.float32)
    if Tp <= 32:
        carry = (h0, c0)
        for t in range(Tp):            # full unroll: gives the scheduler visibility
            carry = step(t, carry)
    else:
        jax.lax.fori_loop(0, Tp, step, (h0, c0), unroll=8)

    # ---- fc3 on all rows at once ---------------------------------------------
    hs = (jnp.concatenate([lstm_ref[b] for b in range(Bb)], axis=0)
          if Bb > 1 else lstm_ref[0])                      # (Bb*Tp, H)
    y = jnp.dot(hs, w3_ref[...], preferred_element_type=jnp.float32) + b3_ref[...]
    for b in range(Bb):
        out_ref[b] = y[b * Tp:(b + 1) * Tp, :]


def expression_encoder(x, params, block_b=None):
    """x: (B, T, D) with D = n_vertices*3. Returns (B, T, latent_dim).

    block_b: batch rows handled per grid program (default: whole batch).
    On a 2-TensorCore chip (v7x) pick block_b = B//2 so both cores get work.
    """
    B, T, D0 = x.shape
    L0 = params["w3"].shape[1]
    if block_b is None:
        block_b = B
    assert B % block_b == 0, "block_b must divide B"

    # Lane/sublane-friendly padding (zero padding is semantics-preserving:
    # padded features are zero through fc1, padded trailing timesteps only
    # influence LSTM states after the real sequence and are sliced away).
    Dp = _round_up(D0, 128)
    Lp = _round_up(L0, 128)
    Tp = _round_up(T, 8)

    xp = jnp.pad(x, ((0, 0), (0, Tp - T), (0, Dp - D0))) if (Tp != T or Dp != D0) else x
    w1 = jnp.pad(params["w1"], ((0, Dp - D0), (0, 0))) if Dp != D0 else params["w1"]
    w3 = jnp.pad(params["w3"], ((0, 0), (0, Lp - L0))) if Lp != L0 else params["w3"]
    b3 = jnp.pad(params["b3"], ((0, 0), (0, Lp - L0))) if Lp != L0 else params["b3"]

    grid_b = B // block_b

    def w_spec(shape):
        zeros = (0,) * len(shape)
        return pl.BlockSpec(shape, lambda g, _z=zeros: _z)

    out = pl.pallas_call(
        _encoder_kernel,
        out_shape=jax.ShapeDtypeStruct((B, Tp, Lp), jnp.float32),
        grid_spec=pltpu.PrefetchScalarGridSpec(
            num_scalar_prefetch=0,
            grid=(grid_b,),
            in_specs=[
                pl.BlockSpec((block_b, Tp, Dp), lambda g: (g, 0, 0)),
                w_spec((Dp, HID1)), w_spec((1, HID1)),
                w_spec((HID1, HID2)), w_spec((1, HID2)),
                w_spec((HID2, 4 * LSTM_H)), w_spec((LSTM_H, 4 * LSTM_H)),
                w_spec((1, 4 * LSTM_H)),
                w_spec((HID2, Lp)), w_spec((1, Lp)),
            ],
            out_specs=pl.BlockSpec((block_b, Tp, Lp), lambda g: (g, 0, 0)),
            scratch_shapes=[
                pltpu.VMEM((block_b, Tp, 4 * LSTM_H), jnp.float32),  # hoisted gates
                pltpu.VMEM((block_b, Tp, LSTM_H), jnp.float32),      # LSTM outputs
            ],
        ),
        compiler_params=pltpu.CompilerParams(
            dimension_semantics=("parallel",),
            # ~2.5 MB used at these sizes; 32 MiB gives headroom for larger
            # block_b*T blocks while staying under every chip's physical VMEM.
            vmem_limit_bytes=32 * 1024 * 1024),
    )(xp, w1, params["b1"], params["w2"], params["b2"],
      params["wih"], params["whh"], params["blstm"], w3, b3)

    return out[:, :T, :L0]


def init_params(key, n_vertices, latent_dim):
    """Deterministic synthetic weights. Note: blstm = (b_ih + b_hh) combined."""
    D = n_vertices * 3
    ks = jax.random.split(key, 9)
    s = 0.05
    rnd = lambda k, shape: (jax.random.normal(k, shape, jnp.float32) * s)
    return {
        "w1": rnd(ks[0], (D, HID1)),         "b1": rnd(ks[1], (1, HID1)),
        "w2": rnd(ks[2], (HID1, HID2)),      "b2": rnd(ks[3], (1, HID2)),
        "wih": rnd(ks[4], (HID2, 4 * LSTM_H)),
        "whh": rnd(ks[5], (LSTM_H, 4 * LSTM_H)),
        "blstm": rnd(ks[6], (1, 4 * LSTM_H)),
        "w3": rnd(ks[7], (HID2, latent_dim)), "b3": rnd(ks[8], (1, latent_dim)),
    }


def reference_forward(x4, p):
    """Pure-JAX reference matching the PyTorch forward (x4: (B, T, V, 3))."""
    norm = jnp.sqrt(jnp.sum(x4 * x4, axis=1, keepdims=True))
    xn = x4 / jnp.maximum(norm, EPS)
    B, T, V, _ = x4.shape
    h = xn.reshape(B, T, V * 3)
    h = _leaky_relu(h @ p["w1"] + p["b1"])
    h = _leaky_relu(h @ p["w2"] + p["b2"])

    def cell(carry, x_t):                      # x_t: (B, 128)
        hh, cc = carry
        gates = x_t @ p["wih"] + hh @ p["whh"] + p["blstm"][0]
        i = jax.nn.sigmoid(gates[:, 0 * LSTM_H:1 * LSTM_H])
        f = jax.nn.sigmoid(gates[:, 1 * LSTM_H:2 * LSTM_H])
        g = jnp.tanh(gates[:, 2 * LSTM_H:3 * LSTM_H])
        o = jax.nn.sigmoid(gates[:, 3 * LSTM_H:4 * LSTM_H])
        cc = f * cc + i * g
        hh = o * jnp.tanh(cc)
        return (hh, cc), hh

    init = (jnp.zeros((B, LSTM_H), jnp.float32),
            jnp.zeros((B, LSTM_H), jnp.float32))
    _, outs = jax.lax.scan(cell, init, jnp.swapaxes(h, 0, 1))
    outs = jnp.swapaxes(outs, 0, 1)            # (B, T, 128)
    return outs @ p["w3"] + p["b3"]


if __name__ == "__main__":
    B, T, V, LATENT = 2, 8, 128, 128           # D = V*3 = 384
    key = jax.random.PRNGKey(0)
    kx, kp = jax.random.split(key)

    x4 = jax.random.normal(kx, (B, T, V, 3), jnp.float32)   # mesh vertices
    params = init_params(kp, n_vertices=V, latent_dim=LATENT)

    x_flat = x4.reshape(B, T, V * 3)
    out = jax.block_until_ready(expression_encoder(x_flat, params))

    ref = jax.block_until_ready(reference_forward(x4, params))
    assert out.shape == (B, T, LATENT), out.shape
    err = float(jnp.max(jnp.abs(out - ref)))
    assert jnp.allclose(out, ref, atol=1e-4, rtol=1e-4), err

    print("KERNEL_OK")
</pallas_src>

<mosaic_0001>
module attributes {stable_mosaic.version = 11 : i64} {
  func.func @_encoder_kernel(%arg0: i32, %arg1: memref<2x8x384xf32, #tpu.memory_space<vmem>>, %arg2: memref<384x256xf32, #tpu.memory_space<vmem>>, %arg3: memref<1x256xf32, #tpu.memory_space<vmem>>, %arg4: memref<256x128xf32, #tpu.memory_space<vmem>>, %arg5: memref<1x128xf32, #tpu.memory_space<vmem>>, %arg6: memref<128x512xf32, #tpu.memory_space<vmem>>, %arg7: memref<128x512xf32, #tpu.memory_space<vmem>>, %arg8: memref<1x512xf32, #tpu.memory_space<vmem>>, %arg9: memref<128x128xf32, #tpu.memory_space<vmem>>, %arg10: memref<1x128xf32, #tpu.memory_space<vmem>>, %arg11: memref<2x8x128xf32, #tpu.memory_space<vmem>>, %arg12: memref<2x8x512xf32, #tpu.memory_space<vmem>>, %arg13: memref<2x8x128xf32, #tpu.memory_space<vmem>>) attributes {dimension_semantics = [#tpu.dimension_semantics<parallel>], iteration_bounds = array<i64: 1>, scalar_prefetch = 0 : i64, scratch_operands = 2 : i64, tpu.core_type = #tpu.core_type<tc>, window_params = [{transform_indices = @transform_0, window_bounds = array<i64: 2, 8, 384>}, {pipeline_mode = #tpu.pipeline_mode<synchronous>, transform_indices = @transform_1, window_bounds = array<i64: 384, 256>}, {pipeline_mode = #tpu.pipeline_mode<synchronous>, transform_indices = @transform_2, window_bounds = array<i64: 1, 256>}, {pipeline_mode = #tpu.pipeline_mode<synchronous>, transform_indices = @transform_3, window_bounds = array<i64: 256, 128>}, {pipeline_mode = #tpu.pipeline_mode<synchronous>, transform_indices = @transform_4, window_bounds = array<i64: 1, 128>}, {pipeline_mode = #tpu.pipeline_mode<synchronous>, transform_indices = @transform_5, window_bounds = array<i64: 128, 512>}, {pipeline_mode = #tpu.pipeline_mode<synchronous>, transform_indices = @transform_6, window_bounds = array<i64: 128, 512>}, {pipeline_mode = #tpu.pipeline_mode<synchronous>, transform_indices = @transform_7, window_bounds = array<i64: 1, 512>}, {pipeline_mode = #tpu.pipeline_mode<synchronous>, transform_indices = @transform_8, window_bounds = array<i64: 128, 128>}, {pipeline_mode = #tpu.pipeline_mode<synchronous>, transform_indices = @transform_9, window_bounds = array<i64: 1, 128>}, {transform_indices = @transform_10, window_bounds = array<i64: 2, 8, 128>}]} {
    %c0 = arith.constant 0 : index
    %c0_0 = arith.constant 0 : index
    %c0_1 = arith.constant 0 : index
    %0 = vector.load %arg1[%c0, %c0_0, %c0_1] : memref<2x8x384xf32, #tpu.memory_space<vmem>>, vector<1x8x384xf32>
    %1 = vector.shape_cast %0 : vector<1x8x384xf32> to vector<8x384xf32>
    %2 = arith.mulf %1, %1 : vector<8x384xf32>
    %cst = arith.constant dense<0.000000e+00> : vector<384xf32>
    %3 = vector.multi_reduction <add>, %2, %cst [0] : vector<8x384xf32> to vector<384xf32>
    %4 = vector.shape_cast %3 : vector<384xf32> to vector<1x384xf32>
    %5 = math.sqrt %4 : vector<1x384xf32>
    %cst_2 = arith.constant 9.99999996E-13 : f32
    %6 = vector.broadcast %cst_2 : f32 to vector<1x384xf32>
    %7 = arith.maximumf %5, %6 : vector<1x384xf32>
    %8 = vector.broadcast %7 : vector<1x384xf32> to vector<8x384xf32>
    %9 = arith.divf %1, %8 : vector<8x384xf32>
    %c1 = arith.constant 1 : index
    %c0_3 = arith.constant 0 : index
    %c0_4 = arith.constant 0 : index
    %10 = vector.load %arg1[%c1, %c0_3, %c0_4] : memref<2x8x384xf32, #tpu.memory_space<vmem>>, vector<1x8x384xf32>
    %11 = vector.shape_cast %10 : vector<1x8x384xf32> to vector<8x384xf32>
    %12 = arith.mulf %11, %11 : vector<8x384xf32>
    %cst_5 = arith.constant dense<0.000000e+00> : vector<384xf32>
    %13 = vector.multi_reduction <add>, %12, %cst_5 [0] : vector<8x384xf32> to vector<384xf32>
    %14 = vector.shape_cast %13 : vector<384xf32> to vector<1x384xf32>
    %15 = math.sqrt %14 : vector<1x384xf32>
    %cst_6 = arith.constant 9.99999996E-13 : f32
    %16 = vector.broadcast %cst_6 : f32 to vector<1x384xf32>
    %17 = arith.maximumf %15, %16 : vector<1x384xf32>
    %18 = vector.broadcast %17 : vector<1x384xf32> to vector<8x384xf32>
    %19 = arith.divf %11, %18 : vector<8x384xf32>
    %20 = tpu.concatenate %9, %19 in 0 : vector<8x384xf32>, vector<8x384xf32> -> vector<16x384xf32>
    %c0_7 = arith.constant 0 : index
    %c0_8 = arith.constant 0 : index
    %21 = vector.load %arg2[%c0_7, %c0_8] : memref<384x256xf32, #tpu.memory_space<vmem>>, vector<384x256xf32>
    %cst_9 = arith.constant dense<0.000000e+00> : vector<16x256xf32>
    %22 = tpu.matmul %20, %21, %cst_9 {dimension_numbers = #tpu.dot_dimension_numbers<[1], [0], [0], [1], [0, 0, 1, 1], [], []>} : vector<16x384xf32>, vector<384x256xf32>, vector<16x256xf32> -> vector<16x256xf32>
    %c0_10 = arith.constant 0 : index
    %c0_11 = arith.constant 0 : index
    %23 = vector.load %arg3[%c0_10, %c0_11] : memref<1x256xf32, #tpu.memory_space<vmem>>, vector<1x256xf32>
    %24 = vector.broadcast %23 : vector<1x256xf32> to vector<16x256xf32>
    %25 = arith.addf %22, %24 : vector<16x256xf32>
    %cst_12 = arith.constant 0.000000e+00 : f32
    %26 = vector.broadcast %cst_12 : f32 to vector<16x256xf32>
    %27 = arith.cmpf oge, %25, %26 : vector<16x256xf32>
    %cst_13 = arith.constant 2.000000e-01 : f32
    %28 = vector.broadcast %cst_13 : f32 to vector<16x256xf32>
    %29 = arith.mulf %28, %25 : vector<16x256xf32>
    %30 = arith.select %27, %25, %29 : vector<16x256xi1>, vector<16x256xf32>
    %c0_14 = arith.constant 0 : index
    %c0_15 = arith.constant 0 : index
    %31 = vector.load %arg4[%c0_14, %c0_15] : memref<256x128xf32, #tpu.memory_space<vmem>>, vector<256x128xf32>
    %cst_16 = arith.constant dense<0.000000e+00> : vector<16x128xf32>
    %32 = tpu.matmul %30, %31, %cst_16 {dimension_numbers = #tpu.dot_dimension_numbers<[1], [0], [0], [1], [0, 0, 1, 1], [], []>} : vector<16x256xf32>, vector<256x128xf32>, vector<16x128xf32> -> vector<16x128xf32>
    %c0_17 = arith.constant 0 : index
    %c0_18 = arith.constant 0 : index
    %33 = vector.load %arg5[%c0_17, %c0_18] : memref<1x128xf32, #tpu.memory_space<vmem>>, vector<1x128xf32>
    %34 = vector.broadcast %33 : vector<1x128xf32> to vector<16x128xf32>
    %35 = arith.addf %32, %34 : vector<16x128xf32>
    %cst_19 = arith.constant 0.000000e+00 : f32
    %36 = vector.broadcast %cst_19 : f32 to vector<16x128xf32>
    %37 = arith.cmpf oge, %35, %36 : vector<16x128xf32>
    %cst_20 = arith.constant 2.000000e-01 : f32
    %38 = vector.broadcast %cst_20 : f32 to vector<16x128xf32>
    %39 = arith.mulf %38, %35 : vector<16x128xf32>
    %40 = arith.select %37, %35, %39 : vector<16x128xi1>, vector<16x128xf32>
    %c0_21 = arith.constant 0 : index
    %c0_22 = arith.constant 0 : index
    %41 = vector.load %arg6[%c0_21, %c0_22] : memref<128x512xf32, #tpu.memory_space<vmem>>, vector<128x512xf32>
    %cst_23 = arith.constant dense<0.000000e+00> : vector<16x512xf32>
    %42 = tpu.matmul %40, %41, %cst_23 {dimension_numbers = #tpu.dot_dimension_numbers<[1], [0], [0], [1], [0, 0, 1, 1], [], []>} : vector<16x128xf32>, vector<128x512xf32>, vector<16x512xf32> -> vector<16x512xf32>
    %c0_24 = arith.constant 0 : index
    %c0_25 = arith.constant 0 : index
    %43 = vector.load %arg8[%c0_24, %c0_25] : memref<1x512xf32, #tpu.memory_space<vmem>>, vector<1x512xf32>
    %44 = vector.broadcast %43 : vector<1x512xf32> to vector<16x512xf32>
    %45 = arith.addf %42, %44 : vector<16x512xf32>
    %46 = vector.extract_strided_slice %45 {offsets = [0, 0], sizes = [8, 512], strides = [1, 1]} : vector<16x512xf32> to vector<8x512xf32>
    %c0_26 = arith.constant 0 : index
    %c0_27 = arith.constant 0 : index
    %c0_28 = arith.constant 0 : index
    %47 = vector.load %arg12[%c0_26, %c0_27, %c0_28] : memref<2x8x512xf32, #tpu.memory_space<vmem>>, vector<1x8x512xf32>
    %48 = vector.shape_cast %47 : vector<1x8x512xf32> to vector<8x512xf32>
    %49 = vector.shape_cast %46 : vector<8x512xf32> to vector<1x8x512xf32>
    tpu.vector_store %arg12[%c0_26, %c0_27, %c0_28], %49 {strides = array<i32>} : memref<2x8x512xf32, #tpu.memory_space<vmem>>, vector<1x8x512xf32>,
    %50 = vector.extract_strided_slice %45 {offsets = [8, 0], sizes = [8, 512], strides = [1, 1]} : vector<16x512xf32> to vector<8x512xf32>
    %c1_29 = arith.constant 1 : index
    %c0_30 = arith.constant 0 : index
    %c0_31 = arith.constant 0 : index
    %51 = vector.load %arg12[%c1_29, %c0_30, %c0_31] : memref<2x8x512xf32, #tpu.memory_space<vmem>>, vector<1x8x512xf32>
    %52 = vector.shape_cast %51 : vector<1x8x512xf32> to vector<8x512xf32>
    %53 = vector.shape_cast %50 : vector<8x512xf32> to vector<1x8x512xf32>
    tpu.vector_store %arg12[%c1_29, %c0_30, %c0_31], %53 {strides = array<i32>} : memref<2x8x512xf32, #tpu.memory_space<vmem>>, vector<1x8x512xf32>,
    %c0_32 = arith.constant 0 : index
    %c0_33 = arith.constant 0 : index
    %54 = vector.load %arg7[%c0_32, %c0_33] : memref<128x512xf32, #tpu.memory_space<vmem>>, vector<128x512xf32>
    %cst_34 = arith.constant 0.000000e+00 : f32
    %55 = vector.broadcast %cst_34 : f32 to vector<2x128xf32>
    %cst_35 = arith.constant 0.000000e+00 : f32
    %56 = vector.broadcast %cst_35 : f32 to vector<2x128xf32>
    %c0_36 = arith.constant 0 : index
    %c0_37 = arith.constant 0 : index
    %c0_38 = arith.constant 0 : index
    %57 = vector.load %arg12[%c0_36, %c0_37, %c0_38] : memref<2x8x512xf32, #tpu.memory_space<vmem>>, vector<1x1x512xf32>
    %58 = vector.shape_cast %57 : vector<1x1x512xf32> to vector<1x512xf32>
    %c1_39 = arith.constant 1 : index
    %c0_40 = arith.constant 0 : index
    %c0_41 = arith.constant 0 : index
    %59 = vector.load %arg12[%c1_39, %c0_40, %c0_41] : memref<2x8x512xf32, #tpu.memory_space<vmem>>, vector<1x1x512xf32>
    %60 = vector.shape_cast %59 : vector<1x1x512xf32> to vector<1x512xf32>
    %61 = tpu.concatenate %58, %60 in 0 : vector<1x512xf32>, vector<1x512xf32> -> vector<2x512xf32>
    %cst_42 = arith.constant dense<0.000000e+00> : vector<2x512xf32>
    %62 = tpu.matmul %55, %54, %cst_42 {dimension_numbers = #tpu.dot_dimension_numbers<[1], [0], [0], [1], [0, 0, 1, 1], [], []>} : vector<2x128xf32>, vector<128x512xf32>, vector<2x512xf32> -> vector<2x512xf32>
    %63 = arith.addf %61, %62 : vector<2x512xf32>
    %64 = vector.extract_strided_slice %63 {offsets = [0, 0], sizes = [2, 128], strides = [1, 1]} : vector<2x512xf32> to vector<2x128xf32>
    %65 = arith.negf %64 : vector<2x128xf32>
    %66 = math.exp %65 : vector<2x128xf32>
    %cst_43 = arith.constant 1.000000e+00 : f32
    %67 = vector.broadcast %cst_43 : f32 to vector<2x128xf32>
    %68 = arith.addf %67, %66 : vector<2x128xf32>
    %69 = arith.divf %67, %68 : vector<2x128xf32>
    %70 = vector.extract_strided_slice %63 {offsets = [0, 128], sizes = [2, 128], strides = [1, 1]} : vector<2x512xf32> to vector<2x128xf32>
    %71 = arith.negf %70 : vector<2x128xf32>
    %72 = math.exp %71 : vector<2x128xf32>
    %cst_44 = arith.constant 1.000000e+00 : f32
    %73 = vector.broadcast %cst_44 : f32 to vector<2x128xf32>
    %74 = arith.addf %73, %72 : vector<2x128xf32>
    %75 = arith.divf %73, %74 : vector<2x128xf32>
    %76 = vector.extract_strided_slice %63 {offsets = [0, 256], sizes = [2, 128], strides = [1, 1]} : vector<2x512xf32> to vector<2x128xf32>
    %77 = math.tanh %76 : vector<2x128xf32>
    %78 = vector.extract_strided_slice %63 {offsets = [0, 384], sizes = [2, 128], strides = [1, 1]} : vector<2x512xf32> to vector<2x128xf32>
    %79 = arith.negf %78 : vector<2x128xf32>
    %80 = math.exp %79 : vector<2x128xf32>
    %cst_45 = arith.constant 1.000000e+00 : f32
    %81 = vector.broadcast %cst_45 : f32 to vector<2x128xf32>
    %82 = arith.addf %81, %80 : vector<2x128xf32>
    %83 = arith.divf %81, %82 : vector<2x128xf32>
    %84 = arith.mulf %75, %56 : vector<2x128xf32>
    %85 = arith.mulf %69, %77 : vector<2x128xf32>
    %86 = arith.addf %84, %85 : vector<2x128xf32>
    %87 = math.tanh %86 : vector<2x128xf32>
    %88 = arith.mulf %83, %87 : vector<2x128xf32>
    %89 = vector.extract_strided_slice %88 {offsets = [0, 0], sizes = [1, 128], strides = [1, 1]} : vector<2x128xf32> to vector<1x128xf32>
    %c0_46 = arith.constant 0 : index
    %c0_47 = arith.constant 0 : index
    %c0_48 = arith.constant 0 : index
    %90 = vector.load %arg13[%c0_46, %c0_47, %c0_48] : memref<2x8x128xf32, #tpu.memory_space<vmem>>, vector<1x1x128xf32>
    %91 = vector.shape_cast %90 : vector<1x1x128xf32> to vector<1x128xf32>
    %92 = vector.shape_cast %89 : vector<1x128xf32> to vector<1x1x128xf32>
    tpu.vector_store %arg13[%c0_46, %c0_47, %c0_48], %92 {strides = array<i32>} : memref<2x8x128xf32, #tpu.memory_space<vmem>>, vector<1x1x128xf32>,
    %93 = vector.extract_strided_slice %88 {offsets = [1, 0], sizes = [1, 128], strides = [1, 1]} : vector<2x128xf32> to vector<1x128xf32>
    %c1_49 = arith.constant 1 : index
    %c0_50 = arith.constant 0 : index
    %c0_51 = arith.constant 0 : index
    %94 = vector.load %arg13[%c1_49, %c0_50, %c0_51] : memref<2x8x128xf32, #tpu.memory_space<vmem>>, vector<1x1x128xf32>
    %95 = vector.shape_cast %94 : vector<1x1x128xf32> to vector<1x128xf32>
    %96 = vector.shape_cast %93 : vector<1x128xf32> to vector<1x1x128xf32>
    tpu.vector_store %arg13[%c1_49, %c0_50, %c0_51], %96 {strides = array<i32>} : memref<2x8x128xf32, #tpu.memory_space<vmem>>, vector<1x1x128xf32>,
    %c0_52 = arith.constant 0 : index
    %c1_53 = arith.constant 1 : index
    %c0_54 = arith.constant 0 : index
    %97 = vector.load %arg12[%c0_52, %c1_53, %c0_54] : memref<2x8x512xf32, #tpu.memory_space<vmem>>, vector<1x1x512xf32>
    %98 = vector.shape_cast %97 : vector<1x1x512xf32> to vector<1x512xf32>
    %c1_55 = arith.constant 1 : index
    %c1_56 = arith.constant 1 : index
    %c0_57 = arith.constant 0 : index
    %99 = vector.load %arg12[%c1_55, %c1_56, %c0_57] : memref<2x8x512xf32, #tpu.memory_space<vmem>>, vector<1x1x512xf32>
    %100 = vector.shape_cast %99 : vector<1x1x512xf32> to vector<1x512xf32>
    %101 = tpu.concatenate %98, %100 in 0 : vector<1x512xf32>, vector<1x512xf32> -> vector<2x512xf32>
    %cst_58 = arith.constant dense<0.000000e+00> : vector<2x512xf32>
    %102 = tpu.matmul %88, %54, %cst_58 {dimension_numbers = #tpu.dot_dimension_numbers<[1], [0], [0], [1], [0, 0, 1, 1], [], []>} : vector<2x128xf32>, vector<128x512xf32>, vector<2x512xf32> -> vector<2x512xf32>
    %103 = arith.addf %101, %102 : vector<2x512xf32>
    %104 = vector.extract_strided_slice %103 {offsets = [0, 0], sizes = [2, 128], strides = [1, 1]} : vector<2x512xf32> to vector<2x128xf32>
    %105 = arith.negf %104 : vector<2x128xf32>
    %106 = math.exp %105 : vector<2x128xf32>
    %cst_59 = arith.constant 1.000000e+00 : f32
    %107 = vector.broadcast %cst_59 : f32 to vector<2x128xf32>
    %108 = arith.addf %107, %106 : vector<2x128xf32>
    %109 = arith.divf %107, %108 : vector<2x128xf32>
    %110 = vector.extract_strided_slice %103 {offsets = [0, 128], sizes = [2, 128], strides = [1, 1]} : vector<2x512xf32> to vector<2x128xf32>
    %111 = arith.negf %110 : vector<2x128xf32>
    %112 = math.exp %111 : vector<2x128xf32>
    %cst_60 = arith.constant 1.000000e+00 : f32
    %113 = vector.broadcast %cst_60 : f32 to vector<2x128xf32>
    %114 = arith.addf %113, %112 : vector<2x128xf32>
    %115 = arith.divf %113, %114 : vector<2x128xf32>
    %116 = vector.extract_strided_slice %103 {offsets = [0, 256], sizes = [2, 128], strides = [1, 1]} : vector<2x512xf32> to vector<2x128xf32>
    %117 = math.tanh %116 : vector<2x128xf32>
    %118 = vector.extract_strided_slice %103 {offsets = [0, 384], sizes = [2, 128], strides = [1, 1]} : vector<2x512xf32> to vector<2x128xf32>
    %119 = arith.negf %118 : vector<2x128xf32>
    %120 = math.exp %119 : vector<2x128xf32>
    %cst_61 = arith.constant 1.000000e+00 : f32
    %121 = vector.broadcast %cst_61 : f32 to vector<2x128xf32>
    %122 = arith.addf %121, %120 : vector<2x128xf32>
    %123 = arith.divf %121, %122 : vector<2x128xf32>
    %124 = arith.mulf %115, %86 : vector<2x128xf32>
    %125 = arith.mulf %109, %117 : vector<2x128xf32>
    %126 = arith.addf %124, %125 : vector<2x128xf32>
    %127 = math.tanh %126 : vector<2x128xf32>
    %128 = arith.mulf %123, %127 : vector<2x128xf32>
    %129 = vector.extract_strided_slice %128 {offsets = [0, 0], sizes = [1, 128], strides = [1, 1]} : vector<2x128xf32> to vector<1x128xf32>
    %c0_62 = arith.constant 0 : index
    %c1_63 = arith.constant 1 : index
    %c0_64 = arith.constant 0 : index
    %130 = vector.load %arg13[%c0_62, %c1_63, %c0_64] : memref<2x8x128xf32, #tpu.memory_space<vmem>>, vector<1x1x128xf32>
    %131 = vector.shape_cast %130 : vector<1x1x128xf32> to vector<1x128xf32>
    %132 = vector.shape_cast %129 : vector<1x128xf32> to vector<1x1x128xf32>
    tpu.vector_store %arg13[%c0_62, %c1_63, %c0_64], %132 {strides = array<i32>} : memref<2x8x128xf32, #tpu.memory_space<vmem>>, vector<1x1x128xf32>,
    %133 = vector.extract_strided_slice %128 {offsets = [1, 0], sizes = [1, 128], strides = [1, 1]} : vector<2x128xf32> to vector<1x128xf32>
    %c1_65 = arith.constant 1 : index
    %c1_66 = arith.constant 1 : index
    %c0_67 = arith.constant 0 : index
    %134 = vector.load %arg13[%c1_65, %c1_66, %c0_67] : memref<2x8x128xf32, #tpu.memory_space<vmem>>, vector<1x1x128xf32>
    %135 = vector.shape_cast %134 : vector<1x1x128xf32> to vector<1x128xf32>
    %136 = vector.shape_cast %133 : vector<1x128xf32> to vector<1x1x128xf32>
    tpu.vector_store %arg13[%c1_65, %c1_66, %c0_67], %136 {strides = array<i32>} : memref<2x8x128xf32, #tpu.memory_space<vmem>>, vector<1x1x128xf32>,
    %c0_68 = arith.constant 0 : index
    %c2 = arith.constant 2 : index
    %c0_69 = arith.constant 0 : index
    %137 = vector.load %arg12[%c0_68, %c2, %c0_69] : memref<2x8x512xf32, #tpu.memory_space<vmem>>, vector<1x1x512xf32>
    %138 = vector.shape_cast %137 : vector<1x1x512xf32> to vector<1x512xf32>
    %c1_70 = arith.constant 1 : index
    %c2_71 = arith.constant 2 : index
    %c0_72 = arith.constant 0 : index
    %139 = vector.load %arg12[%c1_70, %c2_71, %c0_72] : memref<2x8x512xf32, #tpu.memory_space<vmem>>, vector<1x1x512xf32>
    %140 = vector.shape_cast %139 : vector<1x1x512xf32> to vector<1x512xf32>
    %141 = tpu.concatenate %138, %140 in 0 : vector<1x512xf32>, vector<1x512xf32> -> vector<2x512xf32>
    %cst_73 = arith.constant dense<0.000000e+00> : vector<2x512xf32>
    %142 = tpu.matmul %128, %54, %cst_73 {dimension_numbers = #tpu.dot_dimension_numbers<[1], [0], [0], [1], [0, 0, 1, 1], [], []>} : vector<2x128xf32>, vector<128x512xf32>, vector<2x512xf32> -> vector<2x512xf32>
    %143 = arith.addf %141, %142 : vector<2x512xf32>
    %144 = vector.extract_strided_slice %143 {offsets = [0, 0], sizes = [2, 128], strides = [1, 1]} : vector<2x512xf32> to vector<2x128xf32>
    %145 = arith.negf %144 : vector<2x128xf32>
    %146 = math.exp %145 : vector<2x128xf32>
    %cst_74 = arith.constant 1.000000e+00 : f32
    %147 = vector.broadcast %cst_74 : f32 to vector<2x128xf32>
    %148 = arith.addf %147, %146 : vector<2x128xf32>
    %149 = arith.divf %147, %148 : vector<2x128xf32>
    %150 = vector.extract_strided_slice %143 {offsets = [0, 128], sizes = [2, 128], strides = [1, 1]} : vector<2x512xf32> to vector<2x128xf32>
    %151 = arith.negf %150 : vector<2x128xf32>
    %152 = math.exp %151 : vector<2x128xf32>
    %cst_75 = arith.constant 1.000000e+00 : f32
    %153 = vector.broadcast %cst_75 : f32 to vector<2x128xf32>
    %154 = arith.addf %153, %152 : vector<2x128xf32>
    %155 = arith.divf %153, %154 : vector<2x128xf32>
    %156 = vector.extract_strided_slice %143 {offsets = [0, 256], sizes = [2, 128], strides = [1, 1]} : vector<2x512xf32> to vector<2x128xf32>
    %157 = math.tanh %156 : vector<2x128xf32>
    %158 = vector.extract_strided_slice %143 {offsets = [0, 384], sizes = [2, 128], strides = [1, 1]} : vector<2x512xf32> to vector<2x128xf32>
    %159 = arith.negf %158 : vector<2x128xf32>
    %160 = math.exp %159 : vector<2x128xf32>
    %cst_76 = arith.constant 1.000000e+00 : f32
    %161 = vector.broadcast %cst_76 : f32 to vector<2x128xf32>
    %162 = arith.addf %161, %160 : vector<2x128xf32>
    %163 = arith.divf %161, %162 : vector<2x128xf32>
    %164 = arith.mulf %155, %126 : vector<2x128xf32>
    %165 = arith.mulf %149, %157 : vector<2x128xf32>
    %166 = arith.addf %164, %165 : vector<2x128xf32>
    %167 = math.tanh %166 : vector<2x128xf32>
    %168 = arith.mulf %163, %167 : vector<2x128xf32>
    %169 = vector.extract_strided_slice %168 {offsets = [0, 0], sizes = [1, 128], strides = [1, 1]} : vector<2x128xf32> to vector<1x128xf32>
    %c0_77 = arith.constant 0 : index
    %c2_78 = arith.constant 2 : index
    %c0_79 = arith.constant 0 : index
    %170 = vector.load %arg13[%c0_77, %c2_78, %c0_79] : memref<2x8x128xf32, #tpu.memory_space<vmem>>, vector<1x1x128xf32>
    %171 = vector.shape_cast %170 : vector<1x1x128xf32> to vector<1x128xf32>
    %172 = vector.shape_cast %169 : vector<1x128xf32> to vector<1x1x128xf32>
    tpu.vector_store %arg13[%c0_77, %c2_78, %c0_79], %172 {strides = array<i32>} : memref<2x8x128xf32, #tpu.memory_space<vmem>>, vector<1x1x128xf32>,
    %173 = vector.extract_strided_slice %168 {offsets = [1, 0], sizes = [1, 128], strides = [1, 1]} : vector<2x128xf32> to vector<1x128xf32>
    %c1_80 = arith.constant 1 : index
    %c2_81 = arith.constant 2 : index
    %c0_82 = arith.constant 0 : index
    %174 = vector.load %arg13[%c1_80, %c2_81, %c0_82] : memref<2x8x128xf32, #tpu.memory_space<vmem>>, vector<1x1x128xf32>
    %175 = vector.shape_cast %174 : vector<1x1x128xf32> to vector<1x128xf32>
    %176 = vector.shape_cast %173 : vector<1x128xf32> to vector<1x1x128xf32>
    tpu.vector_store %arg13[%c1_80, %c2_81, %c0_82], %176 {strides = array<i32>} : memref<2x8x128xf32, #tpu.memory_space<vmem>>, vector<1x1x128xf32>,
    %c0_83 = arith.constant 0 : index
    %c3 = arith.constant 3 : index
    %c0_84 = arith.constant 0 : index
    %177 = vector.load %arg12[%c0_83, %c3, %c0_84] : memref<2x8x512xf32, #tpu.memory_space<vmem>>, vector<1x1x512xf32>
    %178 = vector.shape_cast %177 : vector<1x1x512xf32> to vector<1x512xf32>
    %c1_85 = arith.constant 1 : index
    %c3_86 = arith.constant 3 : index
    %c0_87 = arith.constant 0 : index
    %179 = vector.load %arg12[%c1_85, %c3_86, %c0_87] : memref<2x8x512xf32, #tpu.memory_space<vmem>>, vector<1x1x512xf32>
    %180 = vector.shape_cast %179 : vector<1x1x512xf32> to vector<1x512xf32>
    %181 = tpu.concatenate %178, %180 in 0 : vector<1x512xf32>, vector<1x512xf32> -> vector<2x512xf32>
    %cst_88 = arith.constant dense<0.000000e+00> : vector<2x512xf32>
    %182 = tpu.matmul %168, %54, %cst_88 {dimension_numbers = #tpu.dot_dimension_numbers<[1], [0], [0], [1], [0, 0, 1, 1], [], []>} : vector<2x128xf32>, vector<128x512xf32>, vector<2x512xf32> -> vector<2x512xf32>
    %183 = arith.addf %181, %182 : vector<2x512xf32>
    %184 = vector.extract_strided_slice %183 {offsets = [0, 0], sizes = [2, 128], strides = [1, 1]} : vector<2x512xf32> to vector<2x128xf32>
    %185 = arith.negf %184 : vector<2x128xf32>
    %186 = math.exp %185 : vector<2x128xf32>
    %cst_89 = arith.constant 1.000000e+00 : f32
    %187 = vector.broadcast %cst_89 : f32 to vector<2x128xf32>
    %188 = arith.addf %187, %186 : vector<2x128xf32>
    %189 = arith.divf %187, %188 : vector<2x128xf32>
    %190 = vector.extract_strided_slice %183 {offsets = [0, 128], sizes = [2, 128], strides = [1, 1]} : vector<2x512xf32> to vector<2x128xf32>
    %191 = arith.negf %190 : vector<2x128xf32>
    %192 = math.exp %191 : vector<2x128xf32>
    %cst_90 = arith.constant 1.000000e+00 : f32
    %193 = vector.broadcast %cst_90 : f32 to vector<2x128xf32>
    %194 = arith.addf %193, %192 : vector<2x128xf32>
    %195 = arith.divf %193, %194 : vector<2x128xf32>
    %196 = vector.extract_strided_slice %183 {offsets = [0, 256], sizes = [2, 128], strides = [1, 1]} : vector<2x512xf32> to vector<2x128xf32>
    %197 = math.tanh %196 : vector<2x128xf32>
    %198 = vector.extract_strided_slice %183 {offsets = [0, 384], sizes = [2, 128], strides = [1, 1]} : vector<2x512xf32> to vector<2x128xf32>
    %199 = arith.negf %198 : vector<2x128xf32>
    %200 = math.exp %199 : vector<2x128xf32>
    %cst_91 = arith.constant 1.000000e+00 : f32
    %201 = vector.broadcast %cst_91 : f32 to vector<2x128xf32>
    %202 = arith.addf %201, %200 : vector<2x128xf32>
    %203 = arith.divf %201, %202 : vector<2x128xf32>
    %204 = arith.mulf %195, %166 : vector<2x128xf32>
    %205 = arith.mulf %189, %197 : vector<2x128xf32>
    %206 = arith.addf %204, %205 : vector<2x128xf32>
    %207 = math.tanh %206 : vector<2x128xf32>
    %208 = arith.mulf %203, %207 : vector<2x128xf32>
    %209 = vector.extract_strided_slice %208 {offsets = [0, 0], sizes = [1, 128], strides = [1, 1]} : vector<2x128xf32> to vector<1x128xf32>
    %c0_92 = arith.constant 0 : index
    %c3_93 = arith.constant 3 : index
    %c0_94 = arith.constant 0 : index
    %210 = vector.load %arg13[%c0_92, %c3_93, %c0_94] : memref<2x8x128xf32, #tpu.memory_space<vmem>>, vector<1x1x128xf32>
    %211 = vector.shape_cast %210 : vector<1x1x128xf32> to vector<1x128xf32>
    %212 = vector.shape_cast %209 : vector<1x128xf32> to vector<1x1x128xf32>
    tpu.vector_store %arg13[%c0_92, %c3_93, %c0_94], %212 {strides = array<i32>} : memref<2x8x128xf32, #tpu.memory_space<vmem>>, vector<1x1x128xf32>,
    %213 = vector.extract_strided_slice %208 {offsets = [1, 0], sizes = [1, 128], strides = [1, 1]} : vector<2x128xf32> to vector<1x128xf32>
    %c1_95 = arith.constant 1 : index
    %c3_96 = arith.constant 3 : index
    %c0_97 = arith.constant 0 : index
    %214 = vector.load %arg13[%c1_95, %c3_96, %c0_97] : memref<2x8x128xf32, #tpu.memory_space<vmem>>, vector<1x1x128xf32>
    %215 = vector.shape_cast %214 : vector<1x1x128xf32> to vector<1x128xf32>
    %216 = vector.shape_cast %213 : vector<1x128xf32> to vector<1x1x128xf32>
    tpu.vector_store %arg13[%c1_95, %c3_96, %c0_97], %216 {strides = array<i32>} : memref<2x8x128xf32, #tpu.memory_space<vmem>>, vector<1x1x128xf32>,
    %c0_98 = arith.constant 0 : index
    %c4 = arith.constant 4 : index
    %c0_99 = arith.constant 0 : index
    %217 = vector.load %arg12[%c0_98, %c4, %c0_99] : memref<2x8x512xf32, #tpu.memory_space<vmem>>, vector<1x1x512xf32>
    %218 = vector.shape_cast %217 : vector<1x1x512xf32> to vector<1x512xf32>
    %c1_100 = arith.constant 1 : index
    %c4_101 = arith.constant 4 : index
    %c0_102 = arith.constant 0 : index
    %219 = vector.load %arg12[%c1_100, %c4_101, %c0_102] : memref<2x8x512xf32, #tpu.memory_space<vmem>>, vector<1x1x512xf32>
    %220 = vector.shape_cast %219 : vector<1x1x512xf32> to vector<1x512xf32>
    %221 = tpu.concatenate %218, %220 in 0 : vector<1x512xf32>, vector<1x512xf32> -> vector<2x512xf32>
    %cst_103 = arith.constant dense<0.000000e+00> : vector<2x512xf32>
    %222 = tpu.matmul %208, %54, %cst_103 {dimension_numbers = #tpu.dot_dimension_numbers<[1], [0], [0], [1], [0, 0, 1, 1], [], []>} : vector<2x128xf32>, vector<128x512xf32>, vector<2x512xf32> -> vector<2x512xf32>
    %223 = arith.addf %221, %222 : vector<2x512xf32>
    %224 = vector.extract_strided_slice %223 {offsets = [0, 0], sizes = [2, 128], strides = [1, 1]} : vector<2x512xf32> to vector<2x128xf32>
    %225 = arith.negf %224 : vector<2x128xf32>
    %226 = math.exp %225 : vector<2x128xf32>
    %cst_104 = arith.constant 1.000000e+00 : f32
    %227 = vector.broadcast %cst_104 : f32 to vector<2x128xf32>
    %228 = arith.addf %227, %226 : vector<2x128xf32>
    %229 = arith.divf %227, %228 : vector<2x128xf32>
    %230 = vector.extract_strided_slice %223 {offsets = [0, 128], sizes = [2, 128], strides = [1, 1]} : vector<2x512xf32> to vector<2x128xf32>
    %231 = arith.negf %230 : vector<2x128xf32>
    %232 = math.exp %231 : vector<2x128xf32>
    %cst_105 = arith.constant 1.000000e+00 : f32
    %233 = vector.broadcast %cst_105 : f32 to vector<2x128xf32>
    %234 = arith.addf %233, %232 : vector<2x128xf32>
    %235 = arith.divf %233, %234 : vector<2x128xf32>
    %236 = vector.extract_strided_slice %223 {offsets = [0, 256], sizes = [2, 128], strides = [1, 1]} : vector<2x512xf32> to vector<2x128xf32>
    %237 = math.tanh %236 : vector<2x128xf32>
    %238 = vector.extract_strided_slice %223 {offsets = [0, 384], sizes = [2, 128], strides = [1, 1]} : vector<2x512xf32> to vector<2x128xf32>
    %239 = arith.negf %238 : vector<2x128xf32>
    %240 = math.exp %239 : vector<2x128xf32>
    %cst_106 = arith.constant 1.000000e+00 : f32
    %241 = vector.broadcast %cst_106 : f32 to vector<2x128xf32>
    %242 = arith.addf %241, %240 : vector<2x128xf32>
    %243 = arith.divf %241, %242 : vector<2x128xf32>
    %244 = arith.mulf %235, %206 : vector<2x128xf32>
    %245 = arith.mulf %229, %237 : vector<2x128xf32>
    %246 = arith.addf %244, %245 : vector<2x128xf32>
    %247 = math.tanh %246 : vector<2x128xf32>
    %248 = arith.mulf %243, %247 : vector<2x128xf32>
    %249 = vector.extract_strided_slice %248 {offsets = [0, 0], sizes = [1, 128], strides = [1, 1]} : vector<2x128xf32> to vector<1x128xf32>
    %c0_107 = arith.constant 0 : index
    %c4_108 = arith.constant 4 : index
    %c0_109 = arith.constant 0 : index
    %250 = vector.load %arg13[%c0_107, %c4_108, %c0_109] : memref<2x8x128xf32, #tpu.memory_space<vmem>>, vector<1x1x128xf32>
    %251 = vector.shape_cast %250 : vector<1x1x128xf32> to vector<1x128xf32>
    %252 = vector.shape_cast %249 : vector<1x128xf32> to vector<1x1x128xf32>
    tpu.vector_store %arg13[%c0_107, %c4_108, %c0_109], %252 {strides = array<i32>} : memref<2x8x128xf32, #tpu.memory_space<vmem>>, vector<1x1x128xf32>,
    %253 = vector.extract_strided_slice %248 {offsets = [1, 0], sizes = [1, 128], strides = [1, 1]} : vector<2x128xf32> to vector<1x128xf32>
    %c1_110 = arith.constant 1 : index
    %c4_111 = arith.constant 4 : index
    %c0_112 = arith.constant 0 : index
    %254 = vector.load %arg13[%c1_110, %c4_111, %c0_112] : memref<2x8x128xf32, #tpu.memory_space<vmem>>, vector<1x1x128xf32>
    %255 = vector.shape_cast %254 : vector<1x1x128xf32> to vector<1x128xf32>
    %256 = vector.shape_cast %253 : vector<1x128xf32> to vector<1x1x128xf32>
    tpu.vector_store %arg13[%c1_110, %c4_111, %c0_112], %256 {strides = array<i32>} : memref<2x8x128xf32, #tpu.memory_space<vmem>>, vector<1x1x128xf32>,
    %c0_113 = arith.constant 0 : index
    %c5 = arith.constant 5 : index
    %c0_114 = arith.constant 0 : index
    %257 = vector.load %arg12[%c0_113, %c5, %c0_114] : memref<2x8x512xf32, #tpu.memory_space<vmem>>, vector<1x1x512xf32>
    %258 = vector.shape_cast %257 : vector<1x1x512xf32> to vector<1x512xf32>
    %c1_115 = arith.constant 1 : index
    %c5_116 = arith.constant 5 : index
    %c0_117 = arith.constant 0 : index
    %259 = vector.load %arg12[%c1_115, %c5_116, %c0_117] : memref<2x8x512xf32, #tpu.memory_space<vmem>>, vector<1x1x512xf32>
    %260 = vector.shape_cast %259 : vector<1x1x512xf32> to vector<1x512xf32>
    %261 = tpu.concatenate %258, %260 in 0 : vector<1x512xf32>, vector<1x512xf32> -> vector<2x512xf32>
    %cst_118 = arith.constant dense<0.000000e+00> : vector<2x512xf32>
    %262 = tpu.matmul %248, %54, %cst_118 {dimension_numbers = #tpu.dot_dimension_numbers<[1], [0], [0], [1], [0, 0, 1, 1], [], []>} : vector<2x128xf32>, vector<128x512xf32>, vector<2x512xf32> -> vector<2x512xf32>
    %263 = arith.addf %261, %262 : vector<2x512xf32>
    %264 = vector.extract_strided_slice %263 {offsets = [0, 0], sizes = [2, 128], strides = [1, 1]} : vector<2x512xf32> to vector<2x128xf32>
    %265 = arith.negf %264 : vector<2x128xf32>
    %266 = math.exp %265 : vector<2x128xf32>
    %cst_119 = arith.constant 1.000000e+00 : f32
    %267 = vector.broadcast %cst_119 : f32 to vector<2x128xf32>
    %268 = arith.addf %267, %266 : vector<2x128xf32>
    %269 = arith.divf %267, %268 : vector<2x128xf32>
    %270 = vector.extract_strided_slice %263 {offsets = [0, 128], sizes = [2, 128], strides = [1, 1]} : vector<2x512xf32> to vector<2x128xf32>
    %271 = arith.negf %270 : vector<2x128xf32>
    %272 = math.exp %271 : vector<2x128xf32>
    %cst_120 = arith.constant 1.000000e+00 : f32
    %273 = vector.broadcast %cst_120 : f32 to vector<2x128xf32>
    %274 = arith.addf %273, %272 : vector<2x128xf32>
    %275 = arith.divf %273, %274 : vector<2x128xf32>
    %276 = vector.extract_strided_slice %263 {offsets = [0, 256], sizes = [2, 128], strides = [1, 1]} : vector<2x512xf32> to vector<2x128xf32>
    %277 = math.tanh %276 : vector<2x128xf32>
    %278 = vector.extract_strided_slice %263 {offsets = [0, 384], sizes = [2, 128], strides = [1, 1]} : vector<2x512xf32> to vector<2x128xf32>
    %279 = arith.negf %278 : vector<2x128xf32>
    %280 = math.exp %279 : vector<2x128xf32>
    %cst_121 = arith.constant 1.000000e+00 : f32
    %281 = vector.broadcast %cst_121 : f32 to vector<2x128xf32>
    %282 = arith.addf %281, %280 : vector<2x128xf32>
    %283 = arith.divf %281, %282 : vector<2x128xf32>
    %284 = arith.mulf %275, %246 : vector<2x128xf32>
    %285 = arith.mulf %269, %277 : vector<2x128xf32>
    %286 = arith.addf %284, %285 : vector<2x128xf32>
    %287 = math.tanh %286 : vector<2x128xf32>
    %288 = arith.mulf %283, %287 : vector<2x128xf32>
    %289 = vector.extract_strided_slice %288 {offsets = [0, 0], sizes = [1, 128], strides = [1, 1]} : vector<2x128xf32> to vector<1x128xf32>
    %c0_122 = arith.constant 0 : index
    %c5_123 = arith.constant 5 : index
    %c0_124 = arith.constant 0 : index
    %290 = vector.load %arg13[%c0_122, %c5_123, %c0_124] : memref<2x8x128xf32, #tpu.memory_space<vmem>>, vector<1x1x128xf32>
    %291 = vector.shape_cast %290 : vector<1x1x128xf32> to vector<1x128xf32>
    %292 = vector.shape_cast %289 : vector<1x128xf32> to vector<1x1x128xf32>
    tpu.vector_store %arg13[%c0_122, %c5_123, %c0_124], %292 {strides = array<i32>} : memref<2x8x128xf32, #tpu.memory_space<vmem>>, vector<1x1x128xf32>,
    %293 = vector.extract_strided_slice %288 {offsets = [1, 0], sizes = [1, 128], strides = [1, 1]} : vector<2x128xf32> to vector<1x128xf32>
    %c1_125 = arith.constant 1 : index
    %c5_126 = arith.constant 5 : index
    %c0_127 = arith.constant 0 : index
    %294 = vector.load %arg13[%c1_125, %c5_126, %c0_127] : memref<2x8x128xf32, #tpu.memory_space<vmem>>, vector<1x1x128xf32>
    %295 = vector.shape_cast %294 : vector<1x1x128xf32> to vector<1x128xf32>
    %296 = vector.shape_cast %293 : vector<1x128xf32> to vector<1x1x128xf32>
    tpu.vector_store %arg13[%c1_125, %c5_126, %c0_127], %296 {strides = array<i32>} : memref<2x8x128xf32, #tpu.memory_space<vmem>>, vector<1x1x128xf32>,
    %c0_128 = arith.constant 0 : index
    %c6 = arith.constant 6 : index
    %c0_129 = arith.constant 0 : index
    %297 = vector.load %arg12[%c0_128, %c6, %c0_129] : memref<2x8x512xf32, #tpu.memory_space<vmem>>, vector<1x1x512xf32>
    %298 = vector.shape_cast %297 : vector<1x1x512xf32> to vector<1x512xf32>
    %c1_130 = arith.constant 1 : index
    %c6_131 = arith.constant 6 : index
    %c0_132 = arith.constant 0 : index
    %299 = vector.load %arg12[%c1_130, %c6_131, %c0_132] : memref<2x8x512xf32, #tpu.memory_space<vmem>>, vector<1x1x512xf32>
    %300 = vector.shape_cast %299 : vector<1x1x512xf32> to vector<1x512xf32>
    %301 = tpu.concatenate %298, %300 in 0 : vector<1x512xf32>, vector<1x512xf32> -> vector<2x512xf32>
    %cst_133 = arith.constant dense<0.000000e+00> : vector<2x512xf32>
    %302 = tpu.matmul %288, %54, %cst_133 {dimension_numbers = #tpu.dot_dimension_numbers<[1], [0], [0], [1], [0, 0, 1, 1], [], []>} : vector<2x128xf32>, vector<128x512xf32>, vector<2x512xf32> -> vector<2x512xf32>
    %303 = arith.addf %301, %302 : vector<2x512xf32>
    %304 = vector.extract_strided_slice %303 {offsets = [0, 0], sizes = [2, 128], strides = [1, 1]} : vector<2x512xf32> to vector<2x128xf32>
    %305 = arith.negf %304 : vector<2x128xf32>
    %306 = math.exp %305 : vector<2x128xf32>
    %cst_134 = arith.constant 1.000000e+00 : f32
    %307 = vector.broadcast %cst_134 : f32 to vector<2x128xf32>
    %308 = arith.addf %307, %306 : vector<2x128xf32>
    %309 = arith.divf %307, %308 : vector<2x128xf32>
    %310 = vector.extract_strided_slice %303 {offsets = [0, 128], sizes = [2, 128], strides = [1, 1]} : vector<2x512xf32> to vector<2x128xf32>
    %311 = arith.negf %310 : vector<2x128xf32>
    %312 = math.exp %311 : vector<2x128xf32>
    %cst_135 = arith.constant 1.000000e+00 : f32
    %313 = vector.broadcast %cst_135 : f32 to vector<2x128xf32>
    %314 = arith.addf %313, %312 : vector<2x128xf32>
    %315 = arith.divf %313, %314 : vector<2x128xf32>
    %316 = vector.extract_strided_slice %303 {offsets = [0, 256], sizes = [2, 128], strides = [1, 1]} : vector<2x512xf32> to vector<2x128xf32>
    %317 = math.tanh %316 : vector<2x128xf32>
    %318 = vector.extract_strided_slice %303 {offsets = [0, 384], sizes = [2, 128], strides = [1, 1]} : vector<2x512xf32> to vector<2x128xf32>
    %319 = arith.negf %318 : vector<2x128xf32>
    %320 = math.exp %319 : vector<2x128xf32>
    %cst_136 = arith.constant 1.000000e+00 : f32
    %321 = vector.broadcast %cst_136 : f32 to vector<2x128xf32>
    %322 = arith.addf %321, %320 : vector<2x128xf32>
    %323 = arith.divf %321, %322 : vector<2x128xf32>
    %324 = arith.mulf %315, %286 : vector<2x128xf32>
    %325 = arith.mulf %309, %317 : vector<2x128xf32>
    %326 = arith.addf %324, %325 : vector<2x128xf32>
    %327 = math.tanh %326 : vector<2x128xf32>
    %328 = arith.mulf %323, %327 : vector<2x128xf32>
    %329 = vector.extract_strided_slice %328 {offsets = [0, 0], sizes = [1, 128], strides = [1, 1]} : vector<2x128xf32> to vector<1x128xf32>
    %c0_137 = arith.constant 0 : index
    %c6_138 = arith.constant 6 : index
    %c0_139 = arith.constant 0 : index
    %330 = vector.load %arg13[%c0_137, %c6_138, %c0_139] : memref<2x8x128xf32, #tpu.memory_space<vmem>>, vector<1x1x128xf32>
    %331 = vector.shape_cast %330 : vector<1x1x128xf32> to vector<1x128xf32>
    %332 = vector.shape_cast %329 : vector<1x128xf32> to vector<1x1x128xf32>
    tpu.vector_store %arg13[%c0_137, %c6_138, %c0_139], %332 {strides = array<i32>} : memref<2x8x128xf32, #tpu.memory_space<vmem>>, vector<1x1x128xf32>,
    %333 = vector.extract_strided_slice %328 {offsets = [1, 0], sizes = [1, 128], strides = [1, 1]} : vector<2x128xf32> to vector<1x128xf32>
    %c1_140 = arith.constant 1 : index
    %c6_141 = arith.constant 6 : index
    %c0_142 = arith.constant 0 : index
    %334 = vector.load %arg13[%c1_140, %c6_141, %c0_142] : memref<2x8x128xf32, #tpu.memory_space<vmem>>, vector<1x1x128xf32>
    %335 = vector.shape_cast %334 : vector<1x1x128xf32> to vector<1x128xf32>
    %336 = vector.shape_cast %333 : vector<1x128xf32> to vector<1x1x128xf32>
    tpu.vector_store %arg13[%c1_140, %c6_141, %c0_142], %336 {strides = array<i32>} : memref<2x8x128xf32, #tpu.memory_space<vmem>>, vector<1x1x128xf32>,
    %c0_143 = arith.constant 0 : index
    %c7 = arith.constant 7 : index
    %c0_144 = arith.constant 0 : index
    %337 = vector.load %arg12[%c0_143, %c7, %c0_144] : memref<2x8x512xf32, #tpu.memory_space<vmem>>, vector<1x1x512xf32>
    %338 = vector.shape_cast %337 : vector<1x1x512xf32> to vector<1x512xf32>
    %c1_145 = arith.constant 1 : index
    %c7_146 = arith.constant 7 : index
    %c0_147 = arith.constant 0 : index
    %339 = vector.load %arg12[%c1_145, %c7_146, %c0_147] : memref<2x8x512xf32, #tpu.memory_space<vmem>>, vector<1x1x512xf32>
    %340 = vector.shape_cast %339 : vector<1x1x512xf32> to vector<1x512xf32>
    %341 = tpu.concatenate %338, %340 in 0 : vector<1x512xf32>, vector<1x512xf32> -> vector<2x512xf32>
    %cst_148 = arith.constant dense<0.000000e+00> : vector<2x512xf32>
    %342 = tpu.matmul %328, %54, %cst_148 {dimension_numbers = #tpu.dot_dimension_numbers<[1], [0], [0], [1], [0, 0, 1, 1], [], []>} : vector<2x128xf32>, vector<128x512xf32>, vector<2x512xf32> -> vector<2x512xf32>
    %343 = arith.addf %341, %342 : vector<2x512xf32>
    %344 = vector.extract_strided_slice %343 {offsets = [0, 0], sizes = [2, 128], strides = [1, 1]} : vector<2x512xf32> to vector<2x128xf32>
    %345 = arith.negf %344 : vector<2x128xf32>
    %346 = math.exp %345 : vector<2x128xf32>
    %cst_149 = arith.constant 1.000000e+00 : f32
    %347 = vector.broadcast %cst_149 : f32 to vector<2x128xf32>
    %348 = arith.addf %347, %346 : vector<2x128xf32>
    %349 = arith.divf %347, %348 : vector<2x128xf32>
    %350 = vector.extract_strided_slice %343 {offsets = [0, 128], sizes = [2, 128], strides = [1, 1]} : vector<2x512xf32> to vector<2x128xf32>
    %351 = arith.negf %350 : vector<2x128xf32>
    %352 = math.exp %351 : vector<2x128xf32>
    %cst_150 = arith.constant 1.000000e+00 : f32
    %353 = vector.broadcast %cst_150 : f32 to vector<2x128xf32>
    %354 = arith.addf %353, %352 : vector<2x128xf32>
    %355 = arith.divf %353, %354 : vector<2x128xf32>
    %356 = vector.extract_strided_slice %343 {offsets = [0, 256], sizes = [2, 128], strides = [1, 1]} : vector<2x512xf32> to vector<2x128xf32>
    %357 = math.tanh %356 : vector<2x128xf32>
    %358 = vector.extract_strided_slice %343 {offsets = [0, 384], sizes = [2, 128], strides = [1, 1]} : vector<2x512xf32> to vector<2x128xf32>
    %359 = arith.negf %358 : vector<2x128xf32>
    %360 = math.exp %359 : vector<2x128xf32>
    %cst_151 = arith.constant 1.000000e+00 : f32
    %361 = vector.broadcast %cst_151 : f32 to vector<2x128xf32>
    %362 = arith.addf %361, %360 : vector<2x128xf32>
    %363 = arith.divf %361, %362 : vector<2x128xf32>
    %364 = arith.mulf %355, %326 : vector<2x128xf32>
    %365 = arith.mulf %349, %357 : vector<2x128xf32>
    %366 = arith.addf %364, %365 : vector<2x128xf32>
    %367 = math.tanh %366 : vector<2x128xf32>
    %368 = arith.mulf %363, %367 : vector<2x128xf32>
    %369 = vector.extract_strided_slice %368 {offsets = [0, 0], sizes = [1, 128], strides = [1, 1]} : vector<2x128xf32> to vector<1x128xf32>
    %c0_152 = arith.constant 0 : index
    %c7_153 = arith.constant 7 : index
    %c0_154 = arith.constant 0 : index
    %370 = vector.load %arg13[%c0_152, %c7_153, %c0_154] : memref<2x8x128xf32, #tpu.memory_space<vmem>>, vector<1x1x128xf32>
    %371 = vector.shape_cast %370 : vector<1x1x128xf32> to vector<1x128xf32>
    %372 = vector.shape_cast %369 : vector<1x128xf32> to vector<1x1x128xf32>
    tpu.vector_store %arg13[%c0_152, %c7_153, %c0_154], %372 {strides = array<i32>} : memref<2x8x128xf32, #tpu.memory_space<vmem>>, vector<1x1x128xf32>,
    %373 = vector.extract_strided_slice %368 {offsets = [1, 0], sizes = [1, 128], strides = [1, 1]} : vector<2x128xf32> to vector<1x128xf32>
    %c1_155 = arith.constant 1 : index
    %c7_156 = arith.constant 7 : index
    %c0_157 = arith.constant 0 : index
    %374 = vector.load %arg13[%c1_155, %c7_156, %c0_157] : memref<2x8x128xf32, #tpu.memory_space<vmem>>, vector<1x1x128xf32>
    %375 = vector.shape_cast %374 : vector<1x1x128xf32> to vector<1x128xf32>
    %376 = vector.shape_cast %373 : vector<1x128xf32> to vector<1x1x128xf32>
    tpu.vector_store %arg13[%c1_155, %c7_156, %c0_157], %376 {strides = array<i32>} : memref<2x8x128xf32, #tpu.memory_space<vmem>>, vector<1x1x128xf32>,
    %c0_158 = arith.constant 0 : index
    %c0_159 = arith.constant 0 : index
    %c0_160 = arith.constant 0 : index
    %377 = vector.load %arg13[%c0_158, %c0_159, %c0_160] : memref<2x8x128xf32, #tpu.memory_space<vmem>>, vector<1x8x128xf32>
    %378 = vector.shape_cast %377 : vector<1x8x128xf32> to vector<8x128xf32>
    %c1_161 = arith.constant 1 : index
    %c0_162 = arith.constant 0 : index
    %c0_163 = arith.constant 0 : index
    %379 = vector.load %arg13[%c1_161, %c0_162, %c0_163] : memref<2x8x128xf32, #tpu.memory_space<vmem>>, vector<1x8x128xf32>
    %380 = vector.shape_cast %379 : vector<1x8x128xf32> to vector<8x128xf32>
    %381 = tpu.concatenate %378, %380 in 0 : vector<8x128xf32>, vector<8x128xf32> -> vector<16x128xf32>
    %c0_164 = arith.constant 0 : index
    %c0_165 = arith.constant 0 : index
    %382 = vector.load %arg9[%c0_164, %c0_165] : memref<128x128xf32, #tpu.memory_space<vmem>>, vector<128x128xf32>
    %cst_166 = arith.constant dense<0.000000e+00> : vector<16x128xf32>
    %383 = tpu.matmul %381, %382, %cst_166 {dimension_numbers = #tpu.dot_dimension_numbers<[1], [0], [0], [1], [0, 0, 1, 1], [], []>} : vector<16x128xf32>, vector<128x128xf32>, vector<16x128xf32> -> vector<16x128xf32>
    %c0_167 = arith.constant 0 : index
    %c0_168 = arith.constant 0 : index
    %384 = vector.load %arg10[%c0_167, %c0_168] : memref<1x128xf32, #tpu.memory_space<vmem>>, vector<1x128xf32>
    %385 = vector.broadcast %384 : vector<1x128xf32> to vector<16x128xf32>
    %386 = arith.addf %383, %385 : vector<16x128xf32>
    %387 = vector.extract_strided_slice %386 {offsets = [0, 0], sizes = [8, 128], strides = [1, 1]} : vector<16x128xf32> to vector<8x128xf32>
    %c0_169 = arith.constant 0 : index
    %c0_170 = arith.constant 0 : index
    %c0_171 = arith.constant 0 : index
    %388 = vector.load %arg11[%c0_169, %c0_170, %c0_171] : memref<2x8x128xf32, #tpu.memory_space<vmem>>, vector<1x8x128xf32>
    %389 = vector.shape_cast %388 : vector<1x8x128xf32> to vector<8x128xf32>
    %390 = vector.shape_cast %387 : vector<8x128xf32> to vector<1x8x128xf32>
    tpu.vector_store %arg11[%c0_169, %c0_170, %c0_171], %390 {strides = array<i32>} : memref<2x8x128xf32, #tpu.memory_space<vmem>>, vector<1x8x128xf32>,
    %391 = vector.extract_strided_slice %386 {offsets = [8, 0], sizes = [8, 128], strides = [1, 1]} : vector<16x128xf32> to vector<8x128xf32>
    %c1_172 = arith.constant 1 : index
    %c0_173 = arith.constant 0 : index
    %c0_174 = arith.constant 0 : index
    %392 = vector.load %arg11[%c1_172, %c0_173, %c0_174] : memref<2x8x128xf32, #tpu.memory_space<vmem>>, vector<1x8x128xf32>
    %393 = vector.shape_cast %392 : vector<1x8x128xf32> to vector<8x128xf32>
    %394 = vector.shape_cast %391 : vector<8x128xf32> to vector<1x8x128xf32>
    tpu.vector_store %arg11[%c1_172, %c0_173, %c0_174], %394 {strides = array<i32>} : memref<2x8x128xf32, #tpu.memory_space<vmem>>, vector<1x8x128xf32>,
    return
  }
  func.func @transform_0(%arg0: i32) -> (i32, i32, i32) {
    %c0_i32 = arith.constant 0 : i32
    %c0_i32_0 = arith.constant 0 : i32
    %c0_i32_1 = arith.constant 0 : i32
    return %arg0, %c0_i32, %c0_i32_0 : i32, i32, i32
  }
  func.func @transform_1(%arg0: i32) -> (i32, i32) {
    %c0_i32 = arith.constant 0 : i32
    %c0_i32_0 = arith.constant 0 : i32
    %c0_i32_1 = arith.constant 0 : i32
    return %c0_i32, %c0_i32_0 : i32, i32
  }
  func.func @transform_2(%arg0: i32) -> (i32, i32) {
    %c0_i32 = arith.constant 0 : i32
    %c0_i32_0 = arith.constant 0 : i32
    %c0_i32_1 = arith.constant 0 : i32
    return %c0_i32, %c0_i32_0 : i32, i32
  }
  func.func @transform_3(%arg0: i32) -> (i32, i32) {
    %c0_i32 = arith.constant 0 : i32
    %c0_i32_0 = arith.constant 0 : i32
    %c0_i32_1 = arith.constant 0 : i32
    return %c0_i32, %c0_i32_0 : i32, i32
  }
  func.func @transform_4(%arg0: i32) -> (i32, i32) {
    %c0_i32 = arith.constant 0 : i32
    %c0_i32_0 = arith.constant 0 : i32
    %c0_i32_1 = arith.constant 0 : i32
    return %c0_i32, %c0_i32_0 : i32, i32
  }
  func.func @transform_5(%arg0: i32) -> (i32, i32) {
    %c0_i32 = arith.constant 0 : i32
    %c0_i32_0 = arith.constant 0 : i32
    %c0_i32_1 = arith.constant 0 : i32
    return %c0_i32, %c0_i32_0 : i32, i32
  }
  func.func @transform_6(%arg0: i32) -> (i32, i32) {
    %c0_i32 = arith.constant 0 : i32
    %c0_i32_0 = arith.constant 0 : i32
    %c0_i32_1 = arith.constant 0 : i32
    return %c0_i32, %c0_i32_0 : i32, i32
  }
  func.func @transform_7(%arg0: i32) -> (i32, i32) {
    %c0_i32 = arith.constant 0 : i32
    %c0_i32_0 = arith.constant 0 : i32
    %c0_i32_1 = arith.constant 0 : i32
    return %c0_i32, %c0_i32_0 : i32, i32
  }
  func.func @transform_8(%arg0: i32) -> (i32, i32) {
    %c0_i32 = arith.constant 0 : i32
    %c0_i32_0 = arith.constant 0 : i32
    %c0_i32_1 = arith.constant 0 : i32
    return %c0_i32, %c0_i32_0 : i32, i32
  }
  func.func @transform_9(%arg0: i32) -> (i32, i32) {
    %c0_i32 = arith.constant 0 : i32
    %c0_i32_0 = arith.constant 0 : i32
    %c0_i32_1 = arith.constant 0 : i32
    return %c0_i32, %c0_i32_0 : i32, i32
  }
  func.func @transform_10(%arg0: i32) -> (i32, i32, i32) {
    %c0_i32 = arith.constant 0 : i32
    %c0_i32_0 = arith.constant 0 : i32
    %c0_i32_1 = arith.constant 0 : i32
    return %arg0, %c0_i32, %c0_i32_0 : i32, i32, i32
  }
}

</mosaic_0001>

<llo_original>
// kernel: tpu_custom_call.1
$region0: #{tpu_custom_call.1}
  #allocation0 [shape = 'u32[]', space=smem, size = 0x4, offset = 0x4, fixed_abs, tag = 'smem constant byte address 0x4 - core index']
  #allocation1 [shape = 'u32[72,128]{1,0:T(1,128)}', space=vmem, size = 0x9000, scoped, tag = 'internal scratch']
  #allocation2 [shape = 'f32[2,8,512]{2,1,0:T(8,128)}', space=vmem, size = 0x8000, scoped, tag = 'scratch operand']
  #allocation3 [shape = 'f32[2,8,128]{2,1,0:T(8,128)}', space=vmem, size = 0x2000, scoped, tag = 'scratch operand']
  %s0 = inlined_call_operand.hbm [shape: f32[2,8,384], index: 0, kind: input, shape index: {}]
  %s1 = inlined_call_operand.hbm [shape: f32[384,256], index: 1, kind: input, shape index: {}]
  %s2 = inlined_call_operand.hbm [shape: f32[1,256], index: 2, kind: input, shape index: {}]
  %s3 = inlined_call_operand.hbm [shape: f32[256,128], index: 3, kind: input, shape index: {}]
  %s4 = inlined_call_operand.vmem [shape: f32[1,128], index: 4, kind: input, shape index: {}]
  %s5 = inlined_call_operand.hbm [shape: f32[128,512], index: 5, kind: input, shape index: {}]
  %s6 = inlined_call_operand.hbm [shape: f32[128,512], index: 6, kind: input, shape index: {}]
  %s7 = inlined_call_operand.vmem [shape: f32[1,512], index: 7, kind: input, shape index: {}]
  %s8 = inlined_call_operand.hbm [shape: f32[128,128], index: 8, kind: input, shape index: {}]
  %s9 = inlined_call_operand.vmem [shape: f32[1,128], index: 9, kind: input, shape index: {}]
  %s10 = inlined_call_operand.hbm [shape: f32[2,8,128], index: 10, kind: output, shape index: {}]
  %s11 = sld [smem:[#allocation0]]
  $region78: #{tpu_custom_call.1} parent=0
    _
  %s13 = ssub.s32 1, %s11
  %s14 = scalar_select 0, %s13, %s11
  $region1: #{tpu_custom_call.1} parent=0
    #allocation4 [shape = 'u8[24576]{0}', space=vmem, size = 0x6000, scoped, tag = 'input window, operand 0, single buffered']
    #allocation5 [shape = 's32[1]{0}', space=sflag, size = 0x4, scoped, tag = 'scoped memory for tpu_custom_call.1']
    #allocation6 [shape = 's32[1]{0}', space=sflag, size = 0x4, scoped, tag = 'scoped memory for tpu_custom_call.1']
    #allocation7 [shape = 'u8[393216]{0}', space=vmem, size = 0x60000, scoped, tag = 'input window, operand 1, single buffered']
    #allocation8 [shape = 's32[1]{0}', space=sflag, size = 0x4, scoped, tag = 'scoped memory for tpu_custom_call.1']
    #allocation9 [shape = 'u8[1024]{0}', space=vmem, size = 0x400, scoped, tag = 'input window, operand 2, single buffered']
    #allocation10 [shape = 'u8[131072]{0}', space=vmem, size = 0x20000, scoped, tag = 'input window, operand 3, single buffered']
    #allocation11 [shape = 's32[1]{0}', space=sflag, size = 0x4, scoped, tag = 'scoped memory for tpu_custom_call.1']
    #allocation12 [shape = 'u8[262144]{0}', space=vmem, size = 0x40000, scoped, tag = 'input window, operand 5, single buffered']
    #allocation13 [shape = 'u8[262144]{0}', space=vmem, size = 0x40000, scoped, tag = 'input window, operand 6, single buffered']
    #allocation14 [shape = 's32[1]{0}', space=sflag, size = 0x4, scoped, tag = 'scoped memory for tpu_custom_call.1']
    #allocation15 [shape = 'u8[65536]{0}', space=vmem, size = 0x10000, scoped, tag = 'input window, operand 8, single buffered']
    #allocation16 [shape = 'u8[8192]{0}', space=vmem, size = 0x2000, scoped, tag = 'output window, operand 0, single buffered']
    %15 = vsyncpa [#allocation5], 0
    %16 = vsyncpa [#allocation8], 0
    %17 = vsyncpa [#allocation11], 0
    %18 = vsyncpa [#allocation14], 0
    %19 = vsyncpa [#allocation6], 0
    // Predicated region
    $region2: #{tpu_custom_call.1} parent=1 // pred_check
      _
    $region3: #{tpu_custom_call.1} parent=1 // pred_check_branch
      %21 = sbr.rel (0) target = $region5
    $region4: #{tpu_custom_call.1} parent=1 // pred_region
      %23 = vsyncadd [#allocation5], 0
      %s24 = sshll.u32 %s0, 4
      %s25 = int_to_ptr.hbm [resolvable:$true] %s24
      %s26 = sshll.u32 [#allocation4], 4
      %s27 = int_to_ptr.vmem [resolvable:$true] %s26
      %32 = dma.hbm_to_vmem [thread:$0]  %s25, 768, %s27, [#allocation5], 384, 384, 24
    $region5: #{tpu_custom_call.1} parent=1 // pred_fallthru
      _
    // Predicated region
    $region6: #{tpu_custom_call.1} parent=1 // pred_check
      _
    $region7: #{tpu_custom_call.1} parent=1 // pred_check_branch
      %34 = sbr.rel (0) target = $region9
    $region8: #{tpu_custom_call.1} parent=1 // pred_region
      %36 = vsyncadd [#allocation8], 0
      %s37 = sshll.u32 %s1, 4
      %s38 = int_to_ptr.hbm [resolvable:$true] %s37
      %s39 = sshll.u32 [#allocation7], 4
      %s40 = int_to_ptr.vmem [resolvable:$true] %s39
      %45 = dma.hbm_to_vmem [thread:$0]  %s38, 12288, %s40, [#allocation8], 256, 256, 16
    $region9: #{tpu_custom_call.1} parent=1 // pred_fallthru
      _
    // Predicated region
    $region10: #{tpu_custom_call.1} parent=1 // pred_check
      _
    $region11: #{tpu_custom_call.1} parent=1 // pred_check_branch
      %47 = sbr.rel (0) target = $region13
    $region12: #{tpu_custom_call.1} parent=1 // pred_region
      %49 = vsyncadd [#allocation8], 0
      %s51 = sshll.u32 %s2, 4
      %s52 = int_to_ptr.hbm [resolvable:$true] %s51
      %s53 = sshll.u32 [#allocation9], 4
      %s54 = int_to_ptr.vmem [resolvable:$true] %s53
      %56 = dma.hbm_to_vmem [thread:$0]  %s52, 32, %s54, [#allocation8]
    $region13: #{tpu_custom_call.1} parent=1 // pred_fallthru
      _
    // Predicated region
    $region14: #{tpu_custom_call.1} parent=1 // pred_check
      _
    $region15: #{tpu_custom_call.1} parent=1 // pred_check_branch
      %58 = sbr.rel (0) target = $region17
    $region16: #{tpu_custom_call.1} parent=1 // pred_region
      %60 = vsyncadd [#allocation11], 0
      %s61 = sshll.u32 %s3, 4
      %s62 = int_to_ptr.hbm [resolvable:$true] %s61
      %s63 = sshll.u32 [#allocation10], 4
      %s64 = int_to_ptr.vmem [resolvable:$true] %s63
      %69 = dma.hbm_to_vmem [thread:$0]  %s62, 4096, %s64, [#allocation11], 128, 128, 8
    $region17: #{tpu_custom_call.1} parent=1 // pred_fallthru
      _
    // Predicated region
    $region18: #{tpu_custom_call.1} parent=1 // pred_check
      _
    $region19: #{tpu_custom_call.1} parent=1 // pred_check_branch
      %71 = sbr.rel (0) target = $region21
    $region20: #{tpu_custom_call.1} parent=1 // pred_region
      _
    $region21: #{tpu_custom_call.1} parent=1 // pred_fallthru
      _
    // Predicated region
    $region22: #{tpu_custom_call.1} parent=1 // pred_check
      _
    $region23: #{tpu_custom_call.1} parent=1 // pred_check_branch
      %73 = sbr.rel (0) target = $region25
    $region24: #{tpu_custom_call.1} parent=1 // pred_region
      %75 = vsyncadd [#allocation11], 0
      %s76 = sshll.u32 %s5, 4
      %s77 = int_to_ptr.hbm [resolvable:$true] %s76
      %s78 = sshll.u32 [#allocation12], 4
      %s79 = int_to_ptr.vmem [resolvable:$true] %s78
      %84 = dma.hbm_to_vmem [thread:$0]  %s77, 8192, %s79, [#allocation11], 512, 512, 32
    $region25: #{tpu_custom_call.1} parent=1 // pred_fallthru
      _
    // Predicated region
    $region26: #{tpu_custom_call.1} parent=1 // pred_check
      _
    $region27: #{tpu_custom_call.1} parent=1 // pred_check_branch
      %86 = sbr.rel (0) target = $region29
    $region28: #{tpu_custom_call.1} parent=1 // pred_region
      %88 = vsyncadd [#allocation14], 0
      %s89 = sshll.u32 %s6, 4
      %s90 = int_to_ptr.hbm [resolvable:$true] %s89
      %s91 = sshll.u32 [#allocation13], 4
      %s92 = int_to_ptr.vmem [resolvable:$true] %s91
      %97 = dma.hbm_to_vmem [thread:$0]  %s90, 8192, %s92, [#allocation14], 512, 512, 32
    $region29: #{tpu_custom_call.1} parent=1 // pred_fallthru
      _
    // Predicated region
    $region30: #{tpu_custom_call.1} parent=1 // pred_check
      _
    $region31: #{tpu_custom_call.1} parent=1 // pred_check_branch
      %99 = sbr.rel (0) target = $region33
    $region32: #{tpu_custom_call.1} parent=1 // pred_region
      _
    $region33: #{tpu_custom_call.1} parent=1 // pred_fallthru
      _
    // Predicated region
    $region34: #{tpu_custom_call.1} parent=1 // pred_check
      _
    $region35: #{tpu_custom_call.1} parent=1 // pred_check_branch
      %101 = sbr.rel (0) target = $region37
    $region36: #{tpu_custom_call.1} parent=1 // pred_region
      %103 = vsyncadd [#allocation14], 0
      %s104 = sshll.u32 %s8, 4
      %s105 = int_to_ptr.hbm [resolvable:$true] %s104
      %s106 = sshll.u32 [#allocation15], 4
      %s107 = int_to_ptr.vmem [resolvable:$true] %s106
      %112 = dma.hbm_to_vmem [thread:$0]  %s105, 2048, %s107, [#allocation14], 128, 128, 8
    $region37: #{tpu_custom_call.1} parent=1 // pred_fallthru
      _
    // Predicated region
    $region38: #{tpu_custom_call.1} parent=1 // pred_check
      _
    $region39: #{tpu_custom_call.1} parent=1 // pred_check_branch
      %114 = sbr.rel (0) target = $region41
    $region40: #{tpu_custom_call.1} parent=1 // pred_region
      _
    $region41: #{tpu_custom_call.1} parent=1 // pred_fallthru
      _
    // Predicated region
    $region42: #{tpu_custom_call.1} parent=1 // pred_check
      _
    $region43: #{tpu_custom_call.1} parent=1 // pred_check_branch
      %116 = sbr.rel (0) target = $region45
    $region44: #{tpu_custom_call.1} parent=1 // pred_region
      %118 = dma.done [#allocation5], 768
    $region45: #{tpu_custom_call.1} parent=1 // pred_fallthru
      _
    // Predicated region
    $region46: #{tpu_custom_call.1} parent=1 // pred_check
      _
    $region47: #{tpu_custom_call.1} parent=1 // pred_check_branch
      %120 = sbr.rel (0) target = $region49
    $region48: #{tpu_custom_call.1} parent=1 // pred_region
      %122 = dma.done [#allocation8], 12288
    $region49: #{tpu_custom_call.1} parent=1 // pred_fallthru
      _
    // Predicated region
    $region50: #{tpu_custom_call.1} parent=1 // pred_check
      _
    $region51: #{tpu_custom_call.1} parent=1 // pred_check_branch
      %124 = sbr.rel (0) target = $region53
    $region52: #{tpu_custom_call.1} parent=1 // pred_region
      %126 = dma.done [#allocation8], 32
    $region53: #{tpu_custom_call.1} parent=1 // pred_fallthru
      _
    // Predicated region
    $region54: #{tpu_custom_call.1} parent=1 // pred_check
      _
    $region55: #{tpu_custom_call.1} parent=1 // pred_check_branch
      %128 = sbr.rel (0) target = $region57
    $region56: #{tpu_custom_call.1} parent=1 // pred_region
      %130 = dma.done [#allocation11], 4096
    $region57: #{tpu_custom_call.1} parent=1 // pred_fallthru
      _
    // Predicated region
    $region58: #{tpu_custom_call.1} parent=1 // pred_check
      _
    $region59: #{tpu_custom_call.1} parent=1 // pred_check_branch
      %132 = sbr.rel (0) target = $region61
    $region60: #{tpu_custom_call.1} parent=1 // pred_region
      %134 = dma.done [#allocation11], 8192
    $region61: #{tpu_custom_call.1} parent=1 // pred_fallthru
      _
    // Predicated region
    $region62: #{tpu_custom_call.1} parent=1 // pred_check
      _
    $region63: #{tpu_custom_call.1} parent=1 // pred_check_branch
      %136 = sbr.rel (0) target = $region65
    $region64: #{tpu_custom_call.1} parent=1 // pred_region
      %138 = dma.done [#allocation14], 8192
    $region65: #{tpu_custom_call.1} parent=1 // pred_fallthru
      _
    // Predicated region
    $region66: #{tpu_custom_call.1} parent=1 // pred_check
      _
    $region67: #{tpu_custom_call.1} parent=1 // pred_check_branch
      %140 = sbr.rel (0) target = $region69
    $region68: #{tpu_custom_call.1} parent=1 // pred_region
      %142 = dma.done [#allocation14], 2048
    $region69: #{tpu_custom_call.1} parent=1 // pred_fallthru
      _
    %v143 = vld [vmem:[#allocation4] sm:$0xff]
    %v144 = vld [vmem:[#allocation4 + $0x8] sm:$0xff]
    %v145 = vld [vmem:[#allocation4 + $0x10] sm:$0xff]
    %v146 = vmul.f32 %v143, %v143
    %v147 = vmul.f32 %v144, %v144
    %v148 = vmul.f32 %v145, %v145
    %v149 = vrot.slane %v146, 4
    %v150 = vadd.f32 %v146, %v149
    %v151 = vrot.slane %v150, 2
    %v152 = vadd.f32 %v150, %v151
    %v153 = vrot.slane %v152, 1
    %v154 = vadd.f32 %v152, %v153
    %v155 = vrot.slane %v147, 4
    %v156 = vadd.f32 %v147, %v155
    %v157 = vrot.slane %v156, 2
    %v158 = vadd.f32 %v156, %v157
    %v159 = vrot.slane %v158, 1
    %v160 = vadd.f32 %v158, %v159
    %v161 = vrot.slane %v148, 4
    %v162 = vadd.f32 %v148, %v161
    %v163 = vrot.slane %v162, 2
    %v164 = vadd.f32 %v162, %v163
    %v165 = vrot.slane %v164, 1
    %v166 = vadd.f32 %v164, %v165
    %v167 = vrsqrt.pop %v154
    %v168 = vmul.f32 %v167, %v154
    %v169 = vmul.f32 %v168, %v167
    %v170 = vmul.f32 0.5, %v169
    %v171 = vsub.f32 1.5, %v170
    %v172 = vmul.f32 %v167, %v171
    %v173 = vmul.f32 %v154, %v172
    %vm174 = vcmp.eq.f32.partialorder %v154, inf
    %v175 = vsel %vm174, %v154, %v173
    %vm176 = vcmp.eq.f32.partialorder %v154, 0.0
    %v177 = vand.u32 %v154, 2147483648
    %v178 = vsel %vm176, %v177, %v175
    %v179 = vrsqrt.pop %v160
    %v180 = vmul.f32 %v179, %v160
    %v181 = vmul.f32 %v180, %v179
    %v182 = vmul.f32 0.5, %v181
    %v183 = vsub.f32 1.5, %v182
    %v184 = vmul.f32 %v179, %v183
    %v185 = vmul.f32 %v160, %v184
    %vm186 = vcmp.eq.f32.partialorder %v160, inf
    %v187 = vsel %vm186, %v160, %v185
    %vm188 = vcmp.eq.f32.partialorder %v160, 0.0
    %v189 = vand.u32 %v160, 2147483648
    %v190 = vsel %vm188, %v189, %v187
    %v191 = vrsqrt.pop %v166
    %v192 = vmul.f32 %v191, %v166
    %v193 = vmul.f32 %v192, %v191
    %v194 = vmul.f32 0.5, %v193
    %v195 = vsub.f32 1.5, %v194
    %v196 = vmul.f32 %v191, %v195
    %v197 = vmul.f32 %v166, %v196
    %vm198 = vcmp.eq.f32.partialorder %v166, inf
    %v199 = vsel %vm198, %v166, %v197
    %vm200 = vcmp.eq.f32.partialorder %v166, 0.0
    %v201 = vand.u32 %v166, 2147483648
    %v202 = vsel %vm200, %v201, %v199
    %v203 = vmax.f32 %v178, 1e-12
    %v204 = vmax.f32 %v190, 1e-12
    %v205 = vmax.f32 %v202, 1e-12
    %v206 = vrcp.pop %v203
    %v207 = vmul.f32 %v203, %v206
    %v208 = vsub.f32 1.0, %v207
    %v209 = vmul.f32 %v206, %v208
    %v210 = vadd.f32 %v206, %v209
    %vm211 = vweird.f32 %v203
    %vm212 = vweird.f32 %v206
    %vm213 = vmor %vm211, %vm212
    %v214 = vsel %vm213, %v206, %v210
    %v215 = vand.u32 2147483647, %v203
    %vm216 = vcmp.eq.f32.partialorder %v215, 8.507059e+37
    %v217 = vand.u32 %v203, 2147483648
    %v218 = vor.u32 1.1754944e-38, %v217
    %v219 = vsel %vm216, %v218, %v214
    %v220 = vmul.f32 %v143, %v219
    %v221 = vrcp.pop %v204
    %v222 = vmul.f32 %v204, %v221
    %v223 = vsub.f32 1.0, %v222
    %v224 = vmul.f32 %v221, %v223
    %v225 = vadd.f32 %v221, %v224
    %vm226 = vweird.f32 %v204
    %vm227 = vweird.f32 %v221
    %vm228 = vmor %vm226, %vm227
    %v229 = vsel %vm228, %v221, %v225
    %v230 = vand.u32 2147483647, %v204
    %vm231 = vcmp.eq.f32.partialorder %v230, 8.507059e+37
    %v232 = vand.u32 %v204, 2147483648
    %v233 = vor.u32 1.1754944e-38, %v232
    %v234 = vsel %vm231, %v233, %v229
    %v235 = vmul.f32 %v144, %v234
    %v236 = vrcp.pop %v205
    %v237 = vmul.f32 %v205, %v236
    %v238 = vsub.f32 1.0, %v237
    %v239 = vmul.f32 %v236, %v238
    %v240 = vadd.f32 %v236, %v239
    %vm241 = vweird.f32 %v205
    %vm242 = vweird.f32 %v236
    %vm243 = vmor %vm241, %vm242
    %v244 = vsel %vm243, %v236, %v240
    %v245 = vand.u32 2147483647, %v205
    %vm246 = vcmp.eq.f32.partialorder %v245, 8.507059e+37
    %v247 = vand.u32 %v205, 2147483648
    %v248 = vor.u32 1.1754944e-38, %v247
    %v249 = vsel %vm246, %v248, %v244
    %v250 = vmul.f32 %v145, %v249
    %s251 = scalar_lea.vmem [#allocation4], 24
    %v252 = vld [vmem:[%s251] sm:$0xff]
    %v253 = vld [vmem:[%s251 + $0x8] sm:$0xff]
    %v254 = vld [vmem:[%s251 + $0x10] sm:$0xff]
    %v255 = vmul.f32 %v252, %v252
    %v256 = vmul.f32 %v253, %v253
    %v257 = vmul.f32 %v254, %v254
    %v258 = vrot.slane %v255, 4
    %v259 = vadd.f32 %v255, %v258
    %v260 = vrot.slane %v259, 2
    %v261 = vadd.f32 %v259, %v260
    %v262 = vrot.slane %v261, 1
    %v263 = vadd.f32 %v261, %v262
    %v264 = vrot.slane %v256, 4
    %v265 = vadd.f32 %v256, %v264
    %v266 = vrot.slane %v265, 2
    %v267 = vadd.f32 %v265, %v266
    %v268 = vrot.slane %v267, 1
    %v269 = vadd.f32 %v267, %v268
    %v270 = vrot.slane %v257, 4
    %v271 = vadd.f32 %v257, %v270
    %v272 = vrot.slane %v271, 2
    %v273 = vadd.f32 %v271, %v272
    %v274 = vrot.slane %v273, 1
    %v275 = vadd.f32 %v273, %v274
    %v276 = vrsqrt.pop %v263
    %v277 = vmul.f32 %v276, %v263
    %v278 = vmul.f32 %v277, %v276
    %v279 = vmul.f32 0.5, %v278
    %v280 = vsub.f32 1.5, %v279
    %v281 = vmul.f32 %v276, %v280
    %v282 = vmul.f32 %v263, %v281
    %vm283 = vcmp.eq.f32.partialorder %v263, inf
    %v284 = vsel %vm283, %v263, %v282
    %vm285 = vcmp.eq.f32.partialorder %v263, 0.0
    %v286 = vand.u32 %v263, 2147483648
    %v287 = vsel %vm285, %v286, %v284
    %v288 = vrsqrt.pop %v269
    %v289 = vmul.f32 %v288, %v269
    %v290 = vmul.f32 %v289, %v288
    %v291 = vmul.f32 0.5, %v290
    %v292 = vsub.f32 1.5, %v291
    %v293 = vmul.f32 %v288, %v292
    %v294 = vmul.f32 %v269, %v293
    %vm295 = vcmp.eq.f32.partialorder %v269, inf
    %v296 = vsel %vm295, %v269, %v294
    %vm297 = vcmp.eq.f32.partialorder %v269, 0.0
    %v298 = vand.u32 %v269, 2147483648
    %v299 = vsel %vm297, %v298, %v296
    %v300 = vrsqrt.pop %v275
    %v301 = vmul.f32 %v300, %v275
    %v302 = vmul.f32 %v301, %v300
    %v303 = vmul.f32 0.5, %v302
    %v304 = vsub.f32 1.5, %v303
    %v305 = vmul.f32 %v300, %v304
    %v306 = vmul.f32 %v275, %v305
    %vm307 = vcmp.eq.f32.partialorder %v275, inf
    %v308 = vsel %vm307, %v275, %v306
    %vm309 = vcmp.eq.f32.partialorder %v275, 0.0
    %v310 = vand.u32 %v275, 2147483648
    %v311 = vsel %vm309, %v310, %v308
    %v312 = vmax.f32 %v287, 1e-12
    %v313 = vmax.f32 %v299, 1e-12
    %v314 = vmax.f32 %v311, 1e-12
    %v315 = vrcp.pop %v312
    %v316 = vmul.f32 %v312, %v315
    %v317 = vsub.f32 1.0, %v316
    %v318 = vmul.f32 %v315, %v317
    %v319 = vadd.f32 %v315, %v318
    %vm320 = vweird.f32 %v312
    %vm321 = vweird.f32 %v315
    %vm322 = vmor %vm320, %vm321
    %v323 = vsel %vm322, %v315, %v319
    %v324 = vand.u32 2147483647, %v312
    %vm325 = vcmp.eq.f32.partialorder %v324, 8.507059e+37
    %v326 = vand.u32 %v312, 2147483648
    %v327 = vor.u32 1.1754944e-38, %v326
    %v328 = vsel %vm325, %v327, %v323
    %v329 = vmul.f32 %v252, %v328
    %v330 = vrcp.pop %v313
    %v331 = vmul.f32 %v313, %v330
    %v332 = vsub.f32 1.0, %v331
    %v333 = vmul.f32 %v330, %v332
    %v334 = vadd.f32 %v330, %v333
    %vm335 = vweird.f32 %v313
    %vm336 = vweird.f32 %v330
    %vm337 = vmor %vm335, %vm336
    %v338 = vsel %vm337, %v330, %v334
    %v339 = vand.u32 2147483647, %v313
    %vm340 = vcmp.eq.f32.partialorder %v339, 8.507059e+37
    %v341 = vand.u32 %v313, 2147483648
    %v342 = vor.u32 1.1754944e-38, %v341
    %v343 = vsel %vm340, %v342, %v338
    %v344 = vmul.f32 %v253, %v343
    %v345 = vrcp.pop %v314
    %v346 = vmul.f32 %v314, %v345
    %v347 = vsub.f32 1.0, %v346
    %v348 = vmul.f32 %v345, %v347
    %v349 = vadd.f32 %v345, %v348
    %vm350 = vweird.f32 %v314
    %vm351 = vweird.f32 %v345
    %vm352 = vmor %vm350, %vm351
    %v353 = vsel %vm352, %v345, %v349
    %v354 = vand.u32 2147483647, %v314
    %vm355 = vcmp.eq.f32.partialorder %v354, 8.507059e+37
    %v356 = vand.u32 %v314, 2147483648
    %v357 = vor.u32 1.1754944e-38, %v356
    %v358 = vsel %vm355, %v357, %v353
    %v359 = vmul.f32 %v254, %v358
    %v360 = vld [vmem:[#allocation7] sm:$0xff]
    %v361 = vld [vmem:[#allocation7 + $0x8] sm:$0xff]
    %v362 = vld [vmem:[#allocation7 + $0x10] sm:$0xff]
    %v363 = vld [vmem:[#allocation7 + $0x18] sm:$0xff]
    %v364 = vld [vmem:[#allocation7 + $0x20] sm:$0xff]
    %v365 = vld [vmem:[#allocation7 + $0x28] sm:$0xff]
    %v366 = vld [vmem:[#allocation7 + $0x30] sm:$0xff]
    %v367 = vld [vmem:[#allocation7 + $0x38] sm:$0xff]
    %v368 = vld [vmem:[#allocation7 + $0x40] sm:$0xff]
    %v369 = vld [vmem:[#allocation7 + $0x48] sm:$0xff]
    %v370 = vld [vmem:[#allocation7 + $0x50] sm:$0xff]
    %v371 = vld [vmem:[#allocation7 + $0x58] sm:$0xff]
    %v372 = vld [vmem:[#allocation7 + $0x60] sm:$0xff]
    %v373 = vld [vmem:[#allocation7 + $0x68] sm:$0xff]
    %v374 = vld [vmem:[#allocation7 + $0x70] sm:$0xff]
    %v375 = vld [vmem:[#allocation7 + $0x78] sm:$0xff]
    %v376 = vld [vmem:[#allocation7 + $0x80] sm:$0xff]
    %v377 = vld [vmem:[#allocation7 + $0x88] sm:$0xff]
    %v378 = vld [vmem:[#allocation7 + $0x90] sm:$0xff]
    %v379 = vld [vmem:[#allocation7 + $0x98] sm:$0xff]
    %v380 = vld [vmem:[#allocation7 + $0xa0] sm:$0xff]
    %v381 = vld [vmem:[#allocation7 + $0xa8] sm:$0xff]
    %v382 = vld [vmem:[#allocation7 + $0xb0] sm:$0xff]
    %v383 = vld [vmem:[#allocation7 + $0xb8] sm:$0xff]
    %v384 = vld [vmem:[#allocation7 + $0xc0] sm:$0xff]
    %v385 = vld [vmem:[#allocation7 + $0xc8] sm:$0xff]
    %v386 = vld [vmem:[#allocation7 + $0xd0] sm:$0xff]
    %v387 = vld [vmem:[#allocation7 + $0xd8] sm:$0xff]
    %v388 = vld [vmem:[#allocation7 + $0xe0] sm:$0xff]
    %v389 = vld [vmem:[#allocation7 + $0xe8] sm:$0xff]
    %v390 = vld [vmem:[#allocation7 + $0xf0] sm:$0xff]
    %v391 = vld [vmem:[#allocation7 + $0xf8] sm:$0xff]
    %v392 = vld [vmem:[#allocation7 + $0x100] sm:$0xff]
    %v393 = vld [vmem:[#allocation7 + $0x108] sm:$0xff]
    %v394 = vld [vmem:[#allocation7 + $0x110] sm:$0xff]
    %v395 = vld [vmem:[#allocation7 + $0x118] sm:$0xff]
    %v396 = vld [vmem:[#allocation7 + $0x120] sm:$0xff]
    %v397 = vld [vmem:[#allocation7 + $0x128] sm:$0xff]
    %v398 = vld [vmem:[#allocation7 + $0x130] sm:$0xff]
    %v399 = vld [vmem:[#allocation7 + $0x138] sm:$0xff]
    %v400 = vld [vmem:[#allocation7 + $0x140] sm:$0xff]
    %v401 = vld [vmem:[#allocation7 + $0x148] sm:$0xff]
    %v402 = vld [vmem:[#allocation7 + $0x150] sm:$0xff]
    %v403 = vld [vmem:[#allocation7 + $0x158] sm:$0xff]
    %v404 = vld [vmem:[#allocation7 + $0x160] sm:$0xff]
    %v405 = vld [vmem:[#allocation7 + $0x168] sm:$0xff]
    %v406 = vld [vmem:[#allocation7 + $0x170] sm:$0xff]
    %v407 = vld [vmem:[#allocation7 + $0x178] sm:$0xff]
    %v408 = vld [vmem:[#allocation7 + $0x180] sm:$0xff]
    %v409 = vld [vmem:[#allocation7 + $0x188] sm:$0xff]
    %v410 = vld [vmem:[#allocation7 + $0x190] sm:$0xff]
    %v411 = vld [vmem:[#allocation7 + $0x198] sm:$0xff]
    %v412 = vld [vmem:[#allocation7 + $0x1a0] sm:$0xff]
    %v413 = vld [vmem:[#allocation7 + $0x1a8] sm:$0xff]
    %v414 = vld [vmem:[#allocation7 + $0x1b0] sm:$0xff]
    %v415 = vld [vmem:[#allocation7 + $0x1b8] sm:$0xff]
    %v416 = vld [vmem:[#allocation7 + $0x1c0] sm:$0xff]
    %v417 = vld [vmem:[#allocation7 + $0x1c8] sm:$0xff]
    %v418 = vld [vmem:[#allocation7 + $0x1d0] sm:$0xff]
    %v419 = vld [vmem:[#allocation7 + $0x1d8] sm:$0xff]
    %v420 = vld [vmem:[#allocation7 + $0x1e0] sm:$0xff]
    %v421 = vld [vmem:[#allocation7 + $0x1e8] sm:$0xff]
    %v422 = vld [vmem:[#allocation7 + $0x1f0] sm:$0xff]
    %v423 = vld [vmem:[#allocation7 + $0x1f8] sm:$0xff]
    %v424 = vld [vmem:[#allocation7 + $0x200] sm:$0xff]
    %v425 = vld [vmem:[#allocation7 + $0x208] sm:$0xff]
    %v426 = vld [vmem:[#allocation7 + $0x210] sm:$0xff]
    %v427 = vld [vmem:[#allocation7 + $0x218] sm:$0xff]
    %v428 = vld [vmem:[#allocation7 + $0x220] sm:$0xff]
    %v429 = vld [vmem:[#allocation7 + $0x228] sm:$0xff]
    %v430 = vld [vmem:[#allocation7 + $0x230] sm:$0xff]
    %v431 = vld [vmem:[#allocation7 + $0x238] sm:$0xff]
    %v432 = vld [vmem:[#allocation7 + $0x240] sm:$0xff]
    %v433 = vld [vmem:[#allocation7 + $0x248] sm:$0xff]
    %v434 = vld [vmem:[#allocation7 + $0x250] sm:$0xff]
    %v435 = vld [vmem:[#allocation7 + $0x258] sm:$0xff]
    %v436 = vld [vmem:[#allocation7 + $0x260] sm:$0xff]
    %v437 = vld [vmem:[#allocation7 + $0x268] sm:$0xff]
    %v438 = vld [vmem:[#allocation7 + $0x270] sm:$0xff]
    %v439 = vld [vmem:[#allocation7 + $0x278] sm:$0xff]
    %v440 = vld [vmem:[#allocation7 + $0x280] sm:$0xff]
    %v441 = vld [vmem:[#allocation7 + $0x288] sm:$0xff]
    %v442 = vld [vmem:[#allocation7 + $0x290] sm:$0xff]
    %v443 = vld [vmem:[#allocation7 + $0x298] sm:$0xff]
    %v444 = vld [vmem:[#allocation7 + $0x2a0] sm:$0xff]
    %v445 = vld [vmem:[#allocation7 + $0x2a8] sm:$0xff]
    %v446 = vld [vmem:[#allocation7 + $0x2b0] sm:$0xff]
    %v447 = vld [vmem:[#allocation7 + $0x2b8] sm:$0xff]
    %v448 = vld [vmem:[#allocation7 + $0x2c0] sm:$0xff]
    %v449 = vld [vmem:[#allocation7 + $0x2c8] sm:$0xff]
    %v450 = vld [vmem:[#allocation7 + $0x2d0] sm:$0xff]
    %v451 = vld [vmem:[#allocation7 + $0x2d8] sm:$0xff]
    %v452 = vld [vmem:[#allocation7 + $0x2e0] sm:$0xff]
    %v453 = vld [vmem:[#allocation7 + $0x2e8] sm:$0xff]
    %v454 = vld [vmem:[#allocation7 + $0x2f0] sm:$0xff]
    %v455 = vld [vmem:[#allocation7 + $0x2f8] sm:$0xff]
    %v456 = vld [vmem:[#allocation9] sm:$0x3]
    %v458 = vperm.slane %v456, 0
    %v459 = vperm.slane %v456, 1
    %462 = vmatpush.msra.mxu0 %v390
    %463 = vmatpush.msra.mxu0 %v388
    %464 = vmatpush.msra.mxu0 %v386
    %465 = vmatpush.msra.mxu0 %v384
    %466 = vmatpush.msra.mxu0 %v382
    %467 = vmatpush.msra.mxu0 %v380
    %468 = vmatpush.msra.mxu0 %v378
    %469 = vmatpush.msra.mxu0 %v376
    %470 = vmatpush.msra.mxu0 %v374
    %471 = vmatpush.msra.mxu0 %v372
    %472 = vmatpush.msra.mxu0 %v370
    %473 = vmatpush.msra.mxu0 %v368
    %474 = vmatpush.msra.mxu0 %v366
    %475 = vmatpush.msra.mxu0 %v364
    %476 = vmatpush.msra.mxu0 %v362
    %477 = vmatpush.msra.mxu0 %v360
    %478 = vmatmul.f32.gmra.mxu0 %v220
    %v479 = vpop.f32.mrf.mxu0
    %v480 = vadd.f32 %v458, %v479
    %481 = vmatmul.f32.gmra.mxu0 %v329
    %v482 = vpop.f32.mrf.mxu0
    %v483 = vadd.f32 %v458, %v482
    %484 = vdwg.mxu0
    %485 = vmatpush.msra.mxu0 %v422
    %486 = vmatpush.msra.mxu0 %v420
    %487 = vmatpush.msra.mxu0 %v418
    %488 = vmatpush.msra.mxu0 %v416
    %489 = vmatpush.msra.mxu0 %v414
    %490 = vmatpush.msra.mxu0 %v412
    %491 = vmatpush.msra.mxu0 %v410
    %492 = vmatpush.msra.mxu0 %v408
    %493 = vmatpush.msra.mxu0 %v406
    %494 = vmatpush.msra.mxu0 %v404
    %495 = vmatpush.msra.mxu0 %v402
    %496 = vmatpush.msra.mxu0 %v400
    %497 = vmatpush.msra.mxu0 %v398
    %498 = vmatpush.msra.mxu0 %v396
    %499 = vmatpush.msra.mxu0 %v394
    %500 = vmatpush.msra.mxu0 %v392
    %501 = vmatmul.f32.gmra.mxu0 %v235
    %v502 = vpop.f32.mrf.mxu0
    %v503 = vadd.f32 %v480, %v502
    %504 = vmatmul.f32.gmra.mxu0 %v344
    %v505 = vpop.f32.mrf.mxu0
    %v506 = vadd.f32 %v483, %v505
    %507 = vdwg.mxu0
    %508 = vmatpush.msra.mxu0 %v454
    %509 = vmatpush.msra.mxu0 %v452
    %510 = vmatpush.msra.mxu0 %v450
    %511 = vmatpush.msra.mxu0 %v448
    %512 = vmatpush.msra.mxu0 %v446
    %513 = vmatpush.msra.mxu0 %v444
    %514 = vmatpush.msra.mxu0 %v442
    %515 = vmatpush.msra.mxu0 %v440
    %516 = vmatpush.msra.mxu0 %v438
    %517 = vmatpush.msra.mxu0 %v436
    %518 = vmatpush.msra.mxu0 %v434
    %519 = vmatpush.msra.mxu0 %v432
    %520 = vmatpush.msra.mxu0 %v430
    %521 = vmatpush.msra.mxu0 %v428
    %522 = vmatpush.msra.mxu0 %v426
    %523 = vmatpush.msra.mxu0 %v424
    %524 = vmatmul.f32.gmra.mxu0 %v250
    %v525 = vpop.f32.mrf.mxu0
    %v526 = vadd.f32 %v503, %v525
    %527 = vmatmul.f32.gmra.mxu0 %v359
    %v528 = vpop.f32.mrf.mxu0
    %v529 = vadd.f32 %v506, %v528
    %530 = vdwg.mxu0
    %531 = vmatpush.msra.mxu0 %v391
    %532 = vmatpush.msra.mxu0 %v389
    %533 = vmatpush.msra.mxu0 %v387
    %534 = vmatpush.msra.mxu0 %v385
    %535 = vmatpush.msra.mxu0 %v383
    %536 = vmatpush.msra.mxu0 %v381
    %537 = vmatpush.msra.mxu0 %v379
    %538 = vmatpush.msra.mxu0 %v377
    %539 = vmatpush.msra.mxu0 %v375
    %540 = vmatpush.msra.mxu0 %v373
    %541 = vmatpush.msra.mxu0 %v371
    %542 = vmatpush.msra.mxu0 %v369
    %543 = vmatpush.msra.mxu0 %v367
    %544 = vmatpush.msra.mxu0 %v365
    %545 = vmatpush.msra.mxu0 %v363
    %546 = vmatpush.msra.mxu0 %v361
    %547 = vmatmul.f32.gmra.mxu0 %v220
    %v548 = vpop.f32.mrf.mxu0
    %v549 = vadd.f32 %v459, %v548
    %550 = vmatmul.f32.gmra.mxu0 %v329
    %v551 = vpop.f32.mrf.mxu0
    %v552 = vadd.f32 %v459, %v551
    %553 = vdwg.mxu0
    %554 = vmatpush.msra.mxu0 %v423
    %555 = vmatpush.msra.mxu0 %v421
    %556 = vmatpush.msra.mxu0 %v419
    %557 = vmatpush.msra.mxu0 %v417
    %558 = vmatpush.msra.mxu0 %v415
    %559 = vmatpush.msra.mxu0 %v413
    %560 = vmatpush.msra.mxu0 %v411
    %561 = vmatpush.msra.mxu0 %v409
    %562 = vmatpush.msra.mxu0 %v407
    %563 = vmatpush.msra.mxu0 %v405
    %564 = vmatpush.msra.mxu0 %v403
    %565 = vmatpush.msra.mxu0 %v401
    %566 = vmatpush.msra.mxu0 %v399
    %567 = vmatpush.msra.mxu0 %v397
    %568 = vmatpush.msra.mxu0 %v395
    %569 = vmatpush.msra.mxu0 %v393
    %570 = vmatmul.f32.gmra.mxu0 %v235
    %v571 = vpop.f32.mrf.mxu0
    %v572 = vadd.f32 %v549, %v571
    %573 = vmatmul.f32.gmra.mxu0 %v344
    %v574 = vpop.f32.mrf.mxu0
    %v575 = vadd.f32 %v552, %v574
    %576 = vdwg.mxu0
    %577 = vmatpush.msra.mxu0 %v455
    %578 = vmatpush.msra.mxu0 %v453
    %579 = vmatpush.msra.mxu0 %v451
    %580 = vmatpush.msra.mxu0 %v449
    %581 = vmatpush.msra.mxu0 %v447
    %582 = vmatpush.msra.mxu0 %v445
    %583 = vmatpush.msra.mxu0 %v443
    %584 = vmatpush.msra.mxu0 %v441
    %585 = vmatpush.msra.mxu0 %v439
    %586 = vmatpush.msra.mxu0 %v437
    %587 = vmatpush.msra.mxu0 %v435
    %588 = vmatpush.msra.mxu0 %v433
    %589 = vmatpush.msra.mxu0 %v431
    %590 = vmatpush.msra.mxu0 %v429
    %591 = vmatpush.msra.mxu0 %v427
    %592 = vmatpush.msra.mxu0 %v425
    %593 = vmatmul.f32.gmra.mxu0 %v250
    %v594 = vpop.f32.mrf.mxu0
    %v595 = vadd.f32 %v572, %v594
    %596 = vmatmul.f32.gmra.mxu0 %v359
    %v597 = vpop.f32.mrf.mxu0
    %v598 = vadd.f32 %v575, %v597
    %599 = vdwg.mxu0
    %vm600 = vcmp.ge.f32.partialorder %v526, 0.0
    %vm601 = vcmp.ge.f32.partialorder %v595, 0.0
    %vm602 = vcmp.ge.f32.partialorder %v529, 0.0
    %vm603 = vcmp.ge.f32.partialorder %v598, 0.0
    %v604 = vmul.f32 %v526, 0.2
    %v605 = vmul.f32 %v595, 0.2
    %v606 = vmul.f32 %v529, 0.2
    %v607 = vmul.f32 %v598, 0.2
    %v608 = vsel %vm600, %v526, %v604
    %v609 = vsel %vm601, %v595, %v605
    %v610 = vsel %vm602, %v529, %v606
    %v611 = vsel %vm603, %v598, %v607
    %v612 = vld [vmem:[#allocation10] sm:$0xff]
    %v613 = vld [vmem:[#allocation10 + $0x8] sm:$0xff]
    %v614 = vld [vmem:[#allocation10 + $0x10] sm:$0xff]
    %v615 = vld [vmem:[#allocation10 + $0x18] sm:$0xff]
    %v616 = vld [vmem:[#allocation10 + $0x20] sm:$0xff]
    %v617 = vld [vmem:[#allocation10 + $0x28] sm:$0xff]
    %v618 = vld [vmem:[#allocation10 + $0x30] sm:$0xff]
    %v619 = vld [vmem:[#allocation10 + $0x38] sm:$0xff]
    %v620 = vld [vmem:[#allocation10 + $0x40] sm:$0xff]
    %v621 = vld [vmem:[#allocation10 + $0x48] sm:$0xff]
    %v622 = vld [vmem:[#allocation10 + $0x50] sm:$0xff]
    %v623 = vld [vmem:[#allocation10 + $0x58] sm:$0xff]
    %v624 = vld [vmem:[#allocation10 + $0x60] sm:$0xff]
    %v625 = vld [vmem:[#allocation10 + $0x68] sm:$0xff]
    %v626 = vld [vmem:[#allocation10 + $0x70] sm:$0xff]
    %v627 = vld [vmem:[#allocation10 + $0x78] sm:$0xff]
    %v628 = vld [vmem:[#allocation10 + $0x80] sm:$0xff]
    %v629 = vld [vmem:[#allocation10 + $0x88] sm:$0xff]
    %v630 = vld [vmem:[#allocation10 + $0x90] sm:$0xff]
    %v631 = vld [vmem:[#allocation10 + $0x98] sm:$0xff]
    %v632 = vld [vmem:[#allocation10 + $0xa0] sm:$0xff]
    %v633 = vld [vmem:[#allocation10 + $0xa8] sm:$0xff]
    %v634 = vld [vmem:[#allocation10 + $0xb0] sm:$0xff]
    %v635 = vld [vmem:[#allocation10 + $0xb8] sm:$0xff]
    %v636 = vld [vmem:[#allocation10 + $0xc0] sm:$0xff]
    %v637 = vld [vmem:[#allocation10 + $0xc8] sm:$0xff]
    %v638 = vld [vmem:[#allocation10 + $0xd0] sm:$0xff]
    %v639 = vld [vmem:[#allocation10 + $0xd8] sm:$0xff]
    %v640 = vld [vmem:[#allocation10 + $0xe0] sm:$0xff]
    %v641 = vld [vmem:[#allocation10 + $0xe8] sm:$0xff]
    %v642 = vld [vmem:[#allocation10 + $0xf0] sm:$0xff]
    %v643 = vld [vmem:[#allocation10 + $0xf8] sm:$0xff]
    %v644 = vld [vmem:[%s4] sm:$0x1]
    %v646 = vperm.slane %v644, 0
    %648 = vmatpush.msra.mxu0 %v627
    %649 = vmatpush.msra.mxu0 %v626
    %650 = vmatpush.msra.mxu0 %v625
    %651 = vmatpush.msra.mxu0 %v624
    %652 = vmatpush.msra.mxu0 %v623
    %653 = vmatpush.msra.mxu0 %v622
    %654 = vmatpush.msra.mxu0 %v621
    %655 = vmatpush.msra.mxu0 %v620
    %656 = vmatpush.msra.mxu0 %v619
    %657 = vmatpush.msra.mxu0 %v618
    %658 = vmatpush.msra.mxu0 %v617
    %659 = vmatpush.msra.mxu0 %v616
    %660 = vmatpush.msra.mxu0 %v615
    %661 = vmatpush.msra.mxu0 %v614
    %662 = vmatpush.msra.mxu0 %v613
    %663 = vmatpush.msra.mxu0 %v612
    %664 = vmatmul.f32.gmra.mxu0 %v608
    %v665 = vpop.f32.mrf.mxu0
    %v666 = vadd.f32 %v646, %v665
    %667 = vmatmul.f32.gmra.mxu0 %v610
    %v668 = vpop.f32.mrf.mxu0
    %v669 = vadd.f32 %v646, %v668
    %670 = vdwg.mxu0
    %671 = vmatpush.msra.mxu0 %v643
    %672 = vmatpush.msra.mxu0 %v642
    %673 = vmatpush.msra.mxu0 %v641
    %674 = vmatpush.msra.mxu0 %v640
    %675 = vmatpush.msra.mxu0 %v639
    %676 = vmatpush.msra.mxu0 %v638
    %677 = vmatpush.msra.mxu0 %v637
    %678 = vmatpush.msra.mxu0 %v636
    %679 = vmatpush.msra.mxu0 %v635
    %680 = vmatpush.msra.mxu0 %v634
    %681 = vmatpush.msra.mxu0 %v633
    %682 = vmatpush.msra.mxu0 %v632
    %683 = vmatpush.msra.mxu0 %v631
    %684 = vmatpush.msra.mxu0 %v630
    %685 = vmatpush.msra.mxu0 %v629
    %686 = vmatpush.msra.mxu0 %v628
    %687 = vmatmul.f32.gmra.mxu0 %v609
    %v688 = vpop.f32.mrf.mxu0
    %v689 = vadd.f32 %v666, %v688
    %690 = vmatmul.f32.gmra.mxu0 %v611
    %v691 = vpop.f32.mrf.mxu0
    %v692 = vadd.f32 %v669, %v691
    %693 = vdwg.mxu0
    %vm694 = vcmp.ge.f32.partialorder %v689, 0.0
    %vm695 = vcmp.ge.f32.partialorder %v692, 0.0
    %v696 = vmul.f32 %v689, 0.2
    %v697 = vmul.f32 %v692, 0.2
    %v698 = vsel %vm694, %v689, %v696
    %v699 = vsel %vm695, %v692, %v697
    %v700 = vld [vmem:[#allocation12] sm:$0xff]
    %v701 = vld [vmem:[#allocation12 + $0x8] sm:$0xff]
    %v702 = vld [vmem:[#allocation12 + $0x10] sm:$0xff]
    %v703 = vld [vmem:[#allocation12 + $0x18] sm:$0xff]
    %v704 = vld [vmem:[#allocation12 + $0x20] sm:$0xff]
    %v705 = vld [vmem:[#allocation12 + $0x28] sm:$0xff]
    %v706 = vld [vmem:[#allocation12 + $0x30] sm:$0xff]
    %v707 = vld [vmem:[#allocation12 + $0x38] sm:$0xff]
    %v708 = vld [vmem:[#allocation12 + $0x40] sm:$0xff]
    %v709 = vld [vmem:[#allocation12 + $0x48] sm:$0xff]
    %v710 = vld [vmem:[#allocation12 + $0x50] sm:$0xff]
    %v711 = vld [vmem:[#allocation12 + $0x58] sm:$0xff]
    %v712 = vld [vmem:[#allocation12 + $0x60] sm:$0xff]
    %v713 = vld [vmem:[#allocation12 + $0x68] sm:$0xff]
    %v714 = vld [vmem:[#allocation12 + $0x70] sm:$0xff]
    %v715 = vld [vmem:[#allocation12 + $0x78] sm:$0xff]
    %v716 = vld [vmem:[#allocation12 + $0x80] sm:$0xff]
    %v717 = vld [vmem:[#allocation12 + $0x88] sm:$0xff]
    %v718 = vld [vmem:[#allocation12 + $0x90] sm:$0xff]
    %v719 = vld [vmem:[#allocation12 + $0x98] sm:$0xff]
    %v720 = vld [vmem:[#allocation12 + $0xa0] sm:$0xff]
    %v721 = vld [vmem:[#allocation12 + $0xa8] sm:$0xff]
    %v722 = vld [vmem:[#allocation12 + $0xb0] sm:$0xff]
    %v723 = vld [vmem:[#allocation12 + $0xb8] sm:$0xff]
    %v724 = vld [vmem:[#allocation12 + $0xc0] sm:$0xff]
    %v725 = vld [vmem:[#allocation12 + $0xc8] sm:$0xff]
    %v726 = vld [vmem:[#allocation12 + $0xd0] sm:$0xff]
    %v727 = vld [vmem:[#allocation12 + $0xd8] sm:$0xff]
    %v728 = vld [vmem:[#allocation12 + $0xe0] sm:$0xff]
    %v729 = vld [vmem:[#allocation12 + $0xe8] sm:$0xff]
    %v730 = vld [vmem:[#allocation12 + $0xf0] sm:$0xff]
    %v731 = vld [vmem:[#allocation12 + $0xf8] sm:$0xff]
    %v732 = vld [vmem:[#allocation12 + $0x100] sm:$0xff]
    %v733 = vld [vmem:[#allocation12 + $0x108] sm:$0xff]
    %v734 = vld [vmem:[#allocation12 + $0x110] sm:$0xff]
    %v735 = vld [vmem:[#allocation12 + $0x118] sm:$0xff]
    %v736 = vld [vmem:[#allocation12 + $0x120] sm:$0xff]
    %v737 = vld [vmem:[#allocation12 + $0x128] sm:$0xff]
    %v738 = vld [vmem:[#allocation12 + $0x130] sm:$0xff]
    %v739 = vld [vmem:[#allocation12 + $0x138] sm:$0xff]
    %v740 = vld [vmem:[#allocation12 + $0x140] sm:$0xff]
    %v741 = vld [vmem:[#allocation12 + $0x148] sm:$0xff]
    %v742 = vld [vmem:[#allocation12 + $0x150] sm:$0xff]
    %v743 = vld [vmem:[#allocation12 + $0x158] sm:$0xff]
    %v744 = vld [vmem:[#allocation12 + $0x160] sm:$0xff]
    %v745 = vld [vmem:[#allocation12 + $0x168] sm:$0xff]
    %v746 = vld [vmem:[#allocation12 + $0x170] sm:$0xff]
    %v747 = vld [vmem:[#allocation12 + $0x178] sm:$0xff]
    %v748 = vld [vmem:[#allocation12 + $0x180] sm:$0xff]
    %v749 = vld [vmem:[#allocation12 + $0x188] sm:$0xff]
    %v750 = vld [vmem:[#allocation12 + $0x190] sm:$0xff]
    %v751 = vld [vmem:[#allocation12 + $0x198] sm:$0xff]
    %v752 = vld [vmem:[#allocation12 + $0x1a0] sm:$0xff]
    %v753 = vld [vmem:[#allocation12 + $0x1a8] sm:$0xff]
    %v754 = vld [vmem:[#allocation12 + $0x1b0] sm:$0xff]
    %v755 = vld [vmem:[#allocation12 + $0x1b8] sm:$0xff]
    %v756 = vld [vmem:[#allocation12 + $0x1c0] sm:$0xff]
    %v757 = vld [vmem:[#allocation12 + $0x1c8] sm:$0xff]
    %v758 = vld [vmem:[#allocation12 + $0x1d0] sm:$0xff]
    %v759 = vld [vmem:[#allocation12 + $0x1d8] sm:$0xff]
    %v760 = vld [vmem:[#allocation12 + $0x1e0] sm:$0xff]
    %v761 = vld [vmem:[#allocation12 + $0x1e8] sm:$0xff]
    %v762 = vld [vmem:[#allocation12 + $0x1f0] sm:$0xff]
    %v763 = vld [vmem:[#allocation12 + $0x1f8] sm:$0xff]
    %v764 = vld [vmem:[%s7] sm:$0xf]
    %v766 = vperm.slane %v764, 0
    %v767 = vperm.slane %v764, 1
    %v768 = vperm.slane %v764, 2
    %v769 = vperm.slane %v764, 3
    %774 = vmatpush.msra.mxu0 %v760
    %775 = vmatpush.msra.mxu0 %v756
    %776 = vmatpush.msra.mxu0 %v752
    %777 = vmatpush.msra.mxu0 %v748
    %778 = vmatpush.msra.mxu0 %v744
    %779 = vmatpush.msra.mxu0 %v740
    %780 = vmatpush.msra.mxu0 %v736
    %781 = vmatpush.msra.mxu0 %v732
    %782 = vmatpush.msra.mxu0 %v728
    %783 = vmatpush.msra.mxu0 %v724
    %784 = vmatpush.msra.mxu0 %v720
    %785 = vmatpush.msra.mxu0 %v716
    %786 = vmatpush.msra.mxu0 %v712
    %787 = vmatpush.msra.mxu0 %v708
    %788 = vmatpush.msra.mxu0 %v704
    %789 = vmatpush.msra.mxu0 %v700
    %790 = vmatmul.f32.gmra.mxu0 %v698
    %v791 = vpop.f32.mrf.mxu0
    %v792 = vadd.f32 %v766, %v791
    %793 = vmatmul.f32.gmra.mxu0 %v699
    %v794 = vpop.f32.mrf.mxu0
    %v795 = vadd.f32 %v766, %v794
    %796 = vdwg.mxu0
    %797 = vmatpush.msra.mxu0 %v761
    %798 = vmatpush.msra.mxu0 %v757
    %799 = vmatpush.msra.mxu0 %v753
    %800 = vmatpush.msra.mxu0 %v749
    %801 = vmatpush.msra.mxu0 %v745
    %802 = vmatpush.msra.mxu0 %v741
    %803 = vmatpush.msra.mxu0 %v737
    %804 = vmatpush.msra.mxu0 %v733
    %805 = vmatpush.msra.mxu0 %v729
    %806 = vmatpush.msra.mxu0 %v725
    %807 = vmatpush.msra.mxu0 %v721
    %808 = vmatpush.msra.mxu0 %v717
    %809 = vmatpush.msra.mxu0 %v713
    %810 = vmatpush.msra.mxu0 %v709
    %811 = vmatpush.msra.mxu0 %v705
    %812 = vmatpush.msra.mxu0 %v701
    %813 = vmatmul.f32.gmra.mxu0 %v698
    %v814 = vpop.f32.mrf.mxu0
    %v815 = vadd.f32 %v767, %v814
    %816 = vmatmul.f32.gmra.mxu0 %v699
    %v817 = vpop.f32.mrf.mxu0
    %v818 = vadd.f32 %v767, %v817
    %819 = vdwg.mxu0
    %820 = vmatpush.msra.mxu0 %v762
    %821 = vmatpush.msra.mxu0 %v758
    %822 = vmatpush.msra.mxu0 %v754
    %823 = vmatpush.msra.mxu0 %v750
    %824 = vmatpush.msra.mxu0 %v746
    %825 = vmatpush.msra.mxu0 %v742
    %826 = vmatpush.msra.mxu0 %v738
    %827 = vmatpush.msra.mxu0 %v734
    %828 = vmatpush.msra.mxu0 %v730
    %829 = vmatpush.msra.mxu0 %v726
    %830 = vmatpush.msra.mxu0 %v722
    %831 = vmatpush.msra.mxu0 %v718
    %832 = vmatpush.msra.mxu0 %v714
    %833 = vmatpush.msra.mxu0 %v710
    %834 = vmatpush.msra.mxu0 %v706
    %835 = vmatpush.msra.mxu0 %v702
    %836 = vmatmul.f32.gmra.mxu0 %v698
    %v837 = vpop.f32.mrf.mxu0
    %v838 = vadd.f32 %v768, %v837
    %839 = vmatmul.f32.gmra.mxu0 %v699
    %v840 = vpop.f32.mrf.mxu0
    %v841 = vadd.f32 %v768, %v840
    %842 = vdwg.mxu0
    %843 = vmatpush.msra.mxu0 %v763
    %844 = vmatpush.msra.mxu0 %v759
    %845 = vmatpush.msra.mxu0 %v755
    %846 = vmatpush.msra.mxu0 %v751
    %847 = vmatpush.msra.mxu0 %v747
    %848 = vmatpush.msra.mxu0 %v743
    %849 = vmatpush.msra.mxu0 %v739
    %850 = vmatpush.msra.mxu0 %v735
    %851 = vmatpush.msra.mxu0 %v731
    %852 = vmatpush.msra.mxu0 %v727
    %853 = vmatpush.msra.mxu0 %v723
    %854 = vmatpush.msra.mxu0 %v719
    %855 = vmatpush.msra.mxu0 %v715
    %856 = vmatpush.msra.mxu0 %v711
    %857 = vmatpush.msra.mxu0 %v707
    %858 = vmatpush.msra.mxu0 %v703
    %859 = vmatmul.f32.gmra.mxu0 %v698
    %v860 = vpop.f32.mrf.mxu0
    %v861 = vadd.f32 %v769, %v860
    %862 = vmatmul.f32.gmra.mxu0 %v699
    %v863 = vpop.f32.mrf.mxu0
    %v864 = vadd.f32 %v769, %v863
    %865 = vdwg.mxu0
    %866 = vst [vmem:[#allocation2] sm:$0xff] %v792
    %867 = vst [vmem:[#allocation2 + $0x8] sm:$0xff] %v815
    %868 = vst [vmem:[#allocation2 + $0x10] sm:$0xff] %v838
    %869 = vst [vmem:[#allocation2 + $0x18] sm:$0xff] %v861
    %s870 = scalar_lea.vmem [#allocation2], 32
    %871 = vst [vmem:[%s870] sm:$0xff] %v795
    %872 = vst [vmem:[%s870 + $0x8] sm:$0xff] %v818
    %873 = vst [vmem:[%s870 + $0x10] sm:$0xff] %v841
    %874 = vst [vmem:[%s870 + $0x18] sm:$0xff] %v864
    %v875 = vld [vmem:[#allocation13] sm:$0xff]
    %v876 = vld [vmem:[#allocation13 + $0x8] sm:$0xff]
    %v877 = vld [vmem:[#allocation13 + $0x10] sm:$0xff]
    %v878 = vld [vmem:[#allocation13 + $0x18] sm:$0xff]
    %v879 = vld [vmem:[#allocation13 + $0x20] sm:$0xff]
    %v880 = vld [vmem:[#allocation13 + $0x28] sm:$0xff]
    %v881 = vld [vmem:[#allocation13 + $0x30] sm:$0xff]
    %v882 = vld [vmem:[#allocation13 + $0x38] sm:$0xff]
    %v883 = vld [vmem:[#allocation13 + $0x40] sm:$0xff]
    %v884 = vld [vmem:[#allocation13 + $0x48] sm:$0xff]
    %v885 = vld [vmem:[#allocation13 + $0x50] sm:$0xff]
    %v886 = vld [vmem:[#allocation13 + $0x58] sm:$0xff]
    %v887 = vld [vmem:[#allocation13 + $0x60] sm:$0xff]
    %v888 = vld [vmem:[#allocation13 + $0x68] sm:$0xff]
    %v889 = vld [vmem:[#allocation13 + $0x70] sm:$0xff]
    %v890 = vld [vmem:[#allocation13 + $0x78] sm:$0xff]
    %v891 = vld [vmem:[#allocation13 + $0x80] sm:$0xff]
    %v892 = vld [vmem:[#allocation13 + $0x88] sm:$0xff]
    %v893 = vld [vmem:[#allocation13 + $0x90] sm:$0xff]
    %v894 = vld [vmem:[#allocation13 + $0x98] sm:$0xff]
    %v895 = vld [vmem:[#allocation13 + $0xa0] sm:$0xff]
    %v896 = vld [vmem:[#allocation13 + $0xa8] sm:$0xff]
    %v897 = vld [vmem:[#allocation13 + $0xb0] sm:$0xff]
    %v898 = vld [vmem:[#allocation13 + $0xb8] sm:$0xff]
    %v899 = vld [vmem:[#allocation13 + $0xc0] sm:$0xff]
    %v900 = vld [vmem:[#allocation13 + $0xc8] sm:$0xff]
    %v901 = vld [vmem:[#allocation13 + $0xd0] sm:$0xff]
    %v902 = vld [vmem:[#allocation13 + $0xd8] sm:$0xff]
    %v903 = vld [vmem:[#allocation13 + $0xe0] sm:$0xff]
    %v904 = vld [vmem:[#allocation13 + $0xe8] sm:$0xff]
    %v905 = vld [vmem:[#allocation13 + $0xf0] sm:$0xff]
    %v906 = vld [vmem:[#allocation13 + $0xf8] sm:$0xff]
    %v907 = vld [vmem:[#allocation13 + $0x100] sm:$0xff]
    %v908 = vld [vmem:[#allocation13 + $0x108] sm:$0xff]
    %v909 = vld [vmem:[#allocation13 + $0x110] sm:$0xff]
    %v910 = vld [vmem:[#allocation13 + $0x118] sm:$0xff]
    %v911 = vld [vmem:[#allocation13 + $0x120] sm:$0xff]
    %v912 = vld [vmem:[#allocation13 + $0x128] sm:$0xff]
    %v913 = vld [vmem:[#allocation13 + $0x130] sm:$0xff]
    %v914 = vld [vmem:[#allocation13 + $0x138] sm:$0xff]
    %v915 = vld [vmem:[#allocation13 + $0x140] sm:$0xff]
    %v916 = vld [vmem:[#allocation13 + $0x148] sm:$0xff]
    %v917 = vld [vmem:[#allocation13 + $0x150] sm:$0xff]
    %v918 = vld [vmem:[#allocation13 + $0x158] sm:$0xff]
    %v919 = vld [vmem:[#allocation13 + $0x160] sm:$0xff]
    %v920 = vld [vmem:[#allocation13 + $0x168] sm:$0xff]
    %v921 = vld [vmem:[#allocation13 + $0x170] sm:$0xff]
    %v922 = vld [vmem:[#allocation13 + $0x178] sm:$0xff]
    %v923 = vld [vmem:[#allocation13 + $0x180] sm:$0xff]
    %v924 = vld [vmem:[#allocation13 + $0x188] sm:$0xff]
    %v925 = vld [vmem:[#allocation13 + $0x190] sm:$0xff]
    %v926 = vld [vmem:[#allocation13 + $0x198] sm:$0xff]
    %v927 = vld [vmem:[#allocation13 + $0x1a0] sm:$0xff]
    %v928 = vld [vmem:[#allocation13 + $0x1a8] sm:$0xff]
    %v929 = vld [vmem:[#allocation13 + $0x1b0] sm:$0xff]
    %v930 = vld [vmem:[#allocation13 + $0x1b8] sm:$0xff]
    %v931 = vld [vmem:[#allocation13 + $0x1c0] sm:$0xff]
    %v932 = vld [vmem:[#allocation13 + $0x1c8] sm:$0xff]
    %v933 = vld [vmem:[#allocation13 + $0x1d0] sm:$0xff]
    %v934 = vld [vmem:[#allocation13 + $0x1d8] sm:$0xff]
    %v935 = vld [vmem:[#allocation13 + $0x1e0] sm:$0xff]
    %v936 = vld [vmem:[#allocation13 + $0x1e8] sm:$0xff]
    %v937 = vld [vmem:[#allocation13 + $0x1f0] sm:$0xff]
    %v938 = vld [vmem:[#allocation13 + $0x1f8] sm:$0xff]
    %v939 = vld [vmem:[#allocation2] ss:$8 sm:$0xf]
    %v940 = vld [vmem:[%s870] ss:$8 sm:$0xf]
    %v942 = vperm.slane %v939, 0
    %v943 = vperm.slane %v939, 1
    %v944 = vperm.slane %v939, 2
    %v945 = vperm.slane %v939, 3
    %v951 = vperm.slane %v940, 0
    %v952 = vperm.slane %v940, 1
    %v953 = vperm.slane %v940, 2
    %v954 = vperm.slane %v940, 3
    %vm959 = vcmask 1040384
    %v960 = vsel %vm959, %v942, %v951
    %v961 = vsel %vm959, %v943, %v952
    %v962 = vsel %vm959, %v944, %v953
    %v963 = vsel %vm959, %v945, %v954
    %964 = vmatpush.msra.mxu0 %v935
    %965 = vmatpush.msra.mxu0 %v931
    %966 = vmatpush.msra.mxu0 %v927
    %967 = vmatpush.msra.mxu0 %v923
    %968 = vmatpush.msra.mxu0 %v919
    %969 = vmatpush.msra.mxu0 %v915
    %970 = vmatpush.msra.mxu0 %v911
    %971 = vmatpush.msra.mxu0 %v907
    %972 = vmatpush.msra.mxu0 %v903
    %973 = vmatpush.msra.mxu0 %v899
    %974 = vmatpush.msra.mxu0 %v895
    %975 = vmatpush.msra.mxu0 %v891
    %976 = vmatpush.msra.mxu0 %v887
    %977 = vmatpush.msra.mxu0 %v883
    %978 = vmatpush.msra.mxu0 %v879
    %979 = vmatpush.msra.mxu0 %v875
    %980 = vmatmul.f32.gmra.mxu0 0.0
    %v981 = vpop.f32.mrf.mxu0
    %v982 = vadd.f32 0.0, %v981
    %983 = vdwg.mxu0
    %984 = vmatpush.msra.mxu0 %v936
    %985 = vmatpush.msra.mxu0 %v932
    %986 = vmatpush.msra.mxu0 %v928
    %987 = vmatpush.msra.mxu0 %v924
    %988 = vmatpush.msra.mxu0 %v920
    %989 = vmatpush.msra.mxu0 %v916
    %990 = vmatpush.msra.mxu0 %v912
    %991 = vmatpush.msra.mxu0 %v908
    %992 = vmatpush.msra.mxu0 %v904
    %993 = vmatpush.msra.mxu0 %v900
    %994 = vmatpush.msra.mxu0 %v896
    %995 = vmatpush.msra.mxu0 %v892
    %996 = vmatpush.msra.mxu0 %v888
    %997 = vmatpush.msra.mxu0 %v884
    %998 = vmatpush.msra.mxu0 %v880
    %999 = vmatpush.msra.mxu0 %v876
    %1000 = vmatmul.f32.gmra.mxu0 0.0
    %v1001 = vpop.f32.mrf.mxu0
    %v1002 = vadd.f32 0.0, %v1001
    %1003 = vdwg.mxu0
    %1004 = vmatpush.msra.mxu0 %v937
    %1005 = vmatpush.msra.mxu0 %v933
    %1006 = vmatpush.msra.mxu0 %v929
    %1007 = vmatpush.msra.mxu0 %v925
    %1008 = vmatpush.msra.mxu0 %v921
    %1009 = vmatpush.msra.mxu0 %v917
    %1010 = vmatpush.msra.mxu0 %v913
    %1011 = vmatpush.msra.mxu0 %v909
    %1012 = vmatpush.msra.mxu0 %v905
    %1013 = vmatpush.msra.mxu0 %v901
    %1014 = vmatpush.msra.mxu0 %v897
    %1015 = vmatpush.msra.mxu0 %v893
    %1016 = vmatpush.msra.mxu0 %v889
    %1017 = vmatpush.msra.mxu0 %v885
    %1018 = vmatpush.msra.mxu0 %v881
    %1019 = vmatpush.msra.mxu0 %v877
    %1020 = vmatmul.f32.gmra.mxu0 0.0
    %v1021 = vpop.f32.mrf.mxu0
    %v1022 = vadd.f32 0.0, %v1021
    %1023 = vdwg.mxu0
    %1024 = vmatpush.msra.mxu0 %v938
    %1025 = vmatpush.msra.mxu0 %v934
    %1026 = vmatpush.msra.mxu0 %v930
    %1027 = vmatpush.msra.mxu0 %v926
    %1028 = vmatpush.msra.mxu0 %v922
    %1029 = vmatpush.msra.mxu0 %v918
    %1030 = vmatpush.msra.mxu0 %v914
    %1031 = vmatpush.msra.mxu0 %v910
    %1032 = vmatpush.msra.mxu0 %v906
    %1033 = vmatpush.msra.mxu0 %v902
    %1034 = vmatpush.msra.mxu0 %v898
    %1035 = vmatpush.msra.mxu0 %v894
    %1036 = vmatpush.msra.mxu0 %v890
    %1037 = vmatpush.msra.mxu0 %v886
    %1038 = vmatpush.msra.mxu0 %v882
    %1039 = vmatpush.msra.mxu0 %v878
    %1040 = vmatmul.f32.gmra.mxu0 0.0
    %v1041 = vpop.f32.mrf.mxu0
    %v1042 = vadd.f32 0.0, %v1041
    %1043 = vdwg.mxu0
    %v1044 = vadd.f32 %v960, %v982
    %v1045 = vadd.f32 %v961, %v1002
    %v1046 = vadd.f32 %v962, %v1022
    %v1047 = vadd.f32 %v963, %v1042
    %v1048 = vxor.u32 %v1044, 2147483648
    %v1049 = vmul.f32 %v1048, 1.442695
    %v1050 = vpow.pop %v1049
    %v1051 = vadd.f32 %v1050, 1.0
    %v1052 = vrcp.pop %v1051
    %v1053 = vmul.f32 %v1051, %v1052
    %v1054 = vsub.f32 1.0, %v1053
    %v1055 = vmul.f32 %v1052, %v1054
    %v1056 = vadd.f32 %v1052, %v1055
    %vm1057 = vweird.f32 %v1051
    %vm1058 = vweird.f32 %v1052
    %vm1059 = vmor %vm1057, %vm1058
    %v1060 = vsel %vm1059, %v1052, %v1056
    %v1061 = vand.u32 2147483647, %v1051
    %vm1062 = vcmp.eq.f32.partialorder %v1061, 8.507059e+37
    %v1063 = vand.u32 %v1051, 2147483648
    %v1064 = vor.u32 1.1754944e-38, %v1063
    %v1065 = vsel %vm1062, %v1064, %v1060
    %v1066 = vmul.f32 1.0, %v1065
    %v1067 = vxor.u32 %v1045, 2147483648
    %v1068 = vmul.f32 %v1067, 1.442695
    %v1069 = vpow.pop %v1068
    %v1070 = vadd.f32 %v1069, 1.0
    %v1071 = vrcp.pop %v1070
    %v1072 = vmul.f32 %v1070, %v1071
    %v1073 = vsub.f32 1.0, %v1072
    %v1074 = vmul.f32 %v1071, %v1073
    %v1075 = vadd.f32 %v1071, %v1074
    %vm1076 = vweird.f32 %v1070
    %vm1077 = vweird.f32 %v1071
    %vm1078 = vmor %vm1076, %vm1077
    %v1079 = vsel %vm1078, %v1071, %v1075
    %v1080 = vand.u32 2147483647, %v1070
    %vm1081 = vcmp.eq.f32.partialorder %v1080, 8.507059e+37
    %v1082 = vand.u32 %v1070, 2147483648
    %v1083 = vor.u32 1.1754944e-38, %v1082
    %v1084 = vsel %vm1081, %v1083, %v1079
    %v1085 = vmul.f32 1.0, %v1084
    %v1086 = vtanh.pop %v1046
    %v1087 = vxor.u32 %v1047, 2147483648
    %v1088 = vmul.f32 %v1087, 1.442695
    %v1089 = vpow.pop %v1088
    %v1090 = vadd.f32 %v1089, 1.0
    %v1091 = vrcp.pop %v1090
    %v1092 = vmul.f32 %v1090, %v1091
    %v1093 = vsub.f32 1.0, %v1092
    %v1094 = vmul.f32 %v1091, %v1093
    %v1095 = vadd.f32 %v1091, %v1094
    %vm1096 = vweird.f32 %v1090
    %vm1097 = vweird.f32 %v1091
    %vm1098 = vmor %vm1096, %vm1097
    %v1099 = vsel %vm1098, %v1091, %v1095
    %v1100 = vand.u32 2147483647, %v1090
    %vm1101 = vcmp.eq.f32.partialorder %v1100, 8.507059e+37
    %v1102 = vand.u32 %v1090, 2147483648
    %v1103 = vor.u32 1.1754944e-38, %v1102
    %v1104 = vsel %vm1101, %v1103, %v1099
    %v1105 = vmul.f32 1.0, %v1104
    %v1106 = vmul.f32 %v1085, 0.0
    %v1107 = vmul.f32 %v1066, %v1086
    %v1108 = vadd.f32 %v1106, %v1107
    %v1109 = vtanh.pop %v1108
    %v1110 = vmul.f32 %v1105, %v1109
    %1111 = vst [vmem:[#allocation3] sm:$0x1] %v1110
    %s1112 = scalar_lea.vmem [#allocation3], 8
    %1113 = vst [vmem:[%s1112 - $0x1] sm:$0x2] %v1110
    %s1114 = scalar_lea.vmem [#allocation2], 1
    %v1115 = vld [vmem:[%s1114] ss:$8 sm:$0xf]
    %s1116 = scalar_lea.vmem %s870, 1 [#allocation2]
    %v1117 = vld [vmem:[%s1116] ss:$8 sm:$0xf]
    %v1119 = vperm.slane %v1115, 0
    %v1120 = vperm.slane %v1115, 1
    %v1121 = vperm.slane %v1115, 2
    %v1122 = vperm.slane %v1115, 3
    %v1128 = vperm.slane %v1117, 0
    %v1129 = vperm.slane %v1117, 1
    %v1130 = vperm.slane %v1117, 2
    %v1131 = vperm.slane %v1117, 3
    %v1136 = vsel %vm959, %v1119, %v1128
    %v1137 = vsel %vm959, %v1120, %v1129
    %v1138 = vsel %vm959, %v1121, %v1130
    %v1139 = vsel %vm959, %v1122, %v1131
    %1140 = vmatpush.msra.mxu0 %v935
    %1141 = vmatpush.msra.mxu0 %v931
    %1142 = vmatpush.msra.mxu0 %v927
    %1143 = vmatpush.msra.mxu0 %v923
    %1144 = vmatpush.msra.mxu0 %v919
    %1145 = vmatpush.msra.mxu0 %v915
    %1146 = vmatpush.msra.mxu0 %v911
    %1147 = vmatpush.msra.mxu0 %v907
    %1148 = vmatpush.msra.mxu0 %v903
    %1149 = vmatpush.msra.mxu0 %v899
    %1150 = vmatpush.msra.mxu0 %v895
    %1151 = vmatpush.msra.mxu0 %v891
    %1152 = vmatpush.msra.mxu0 %v887
    %1153 = vmatpush.msra.mxu0 %v883
    %1154 = vmatpush.msra.mxu0 %v879
    %1155 = vmatpush.msra.mxu0 %v875
    %1156 = vmatmul.f32.gmra.mxu0 %v1110
    %v1157 = vpop.f32.mrf.mxu0
    %v1158 = vadd.f32 0.0, %v1157
    %1159 = vdwg.mxu0
    %1160 = vmatpush.msra.mxu0 %v936
    %1161 = vmatpush.msra.mxu0 %v932
    %1162 = vmatpush.msra.mxu0 %v928
    %1163 = vmatpush.msra.mxu0 %v924
    %1164 = vmatpush.msra.mxu0 %v920
    %1165 = vmatpush.msra.mxu0 %v916
    %1166 = vmatpush.msra.mxu0 %v912
    %1167 = vmatpush.msra.mxu0 %v908
    %1168 = vmatpush.msra.mxu0 %v904
    %1169 = vmatpush.msra.mxu0 %v900
    %1170 = vmatpush.msra.mxu0 %v896
    %1171 = vmatpush.msra.mxu0 %v892
    %1172 = vmatpush.msra.mxu0 %v888
    %1173 = vmatpush.msra.mxu0 %v884
    %1174 = vmatpush.msra.mxu0 %v880
    %1175 = vmatpush.msra.mxu0 %v876
    %1176 = vmatmul.f32.gmra.mxu0 %v1110
    %v1177 = vpop.f32.mrf.mxu0
    %v1178 = vadd.f32 0.0, %v1177
    %1179 = vdwg.mxu0
    %1180 = vmatpush.msra.mxu0 %v937
    %1181 = vmatpush.msra.mxu0 %v933
    %1182 = vmatpush.msra.mxu0 %v929
    %1183 = vmatpush.msra.mxu0 %v925
    %1184 = vmatpush.msra.mxu0 %v921
    %1185 = vmatpush.msra.mxu0 %v917
    %1186 = vmatpush.msra.mxu0 %v913
    %1187 = vmatpush.msra.mxu0 %v909
    %1188 = vmatpush.msra.mxu0 %v905
    %1189 = vmatpush.msra.mxu0 %v901
    %1190 = vmatpush.msra.mxu0 %v897
    %1191 = vmatpush.msra.mxu0 %v893
    %1192 = vmatpush.msra.mxu0 %v889
    %1193 = vmatpush.msra.mxu0 %v885
    %1194 = vmatpush.msra.mxu0 %v881
    %1195 = vmatpush.msra.mxu0 %v877
    %1196 = vmatmul.f32.gmra.mxu0 %v1110
    %v1197 = vpop.f32.mrf.mxu0
    %v1198 = vadd.f32 0.0, %v1197
    %1199 = vdwg.mxu0
    %1200 = vmatpush.msra.mxu0 %v938
    %1201 = vmatpush.msra.mxu0 %v934
    %1202 = vmatpush.msra.mxu0 %v930
    %1203 = vmatpush.msra.mxu0 %v926
    %1204 = vmatpush.msra.mxu0 %v922
    %1205 = vmatpush.msra.mxu0 %v918
    %1206 = vmatpush.msra.mxu0 %v914
    %1207 = vmatpush.msra.mxu0 %v910
    %1208 = vmatpush.msra.mxu0 %v906
    %1209 = vmatpush.msra.mxu0 %v902
    %1210 = vmatpush.msra.mxu0 %v898
    %1211 = vmatpush.msra.mxu0 %v894
    %1212 = vmatpush.msra.mxu0 %v890
    %1213 = vmatpush.msra.mxu0 %v886
    %1214 = vmatpush.msra.mxu0 %v882
    %1215 = vmatpush.msra.mxu0 %v878
    %1216 = vmatmul.f32.gmra.mxu0 %v1110
    %v1217 = vpop.f32.mrf.mxu0
    %v1218 = vadd.f32 0.0, %v1217
    %1219 = vdwg.mxu0
    %v1220 = vadd.f32 %v1136, %v1158
    %v1221 = vadd.f32 %v1137, %v1178
    %v1222 = vadd.f32 %v1138, %v1198
    %v1223 = vadd.f32 %v1139, %v1218
    %v1224 = vxor.u32 %v1220, 2147483648
    %v1225 = vmul.f32 %v1224, 1.442695
    %v1226 = vpow.pop %v1225
    %v1227 = vadd.f32 %v1226, 1.0
    %v1228 = vrcp.pop %v1227
    %v1229 = vmul.f32 %v1227, %v1228
    %v1230 = vsub.f32 1.0, %v1229
    %v1231 = vmul.f32 %v1228, %v1230
    %v1232 = vadd.f32 %v1228, %v1231
    %vm1233 = vweird.f32 %v1227
    %vm1234 = vweird.f32 %v1228
    %vm1235 = vmor %vm1233, %vm1234
    %v1236 = vsel %vm1235, %v1228, %v1232
    %v1237 = vand.u32 2147483647, %v1227
    %vm1238 = vcmp.eq.f32.partialorder %v1237, 8.507059e+37
    %v1239 = vand.u32 %v1227, 2147483648
    %v1240 = vor.u32 1.1754944e-38, %v1239
    %v1241 = vsel %vm1238, %v1240, %v1236
    %v1242 = vmul.f32 1.0, %v1241
    %v1243 = vxor.u32 %v1221, 2147483648
    %v1244 = vmul.f32 %v1243, 1.442695
    %v1245 = vpow.pop %v1244
    %v1246 = vadd.f32 %v1245, 1.0
    %v1247 = vrcp.pop %v1246
    %v1248 = vmul.f32 %v1246, %v1247
    %v1249 = vsub.f32 1.0, %v1248
    %v1250 = vmul.f32 %v1247, %v1249
    %v1251 = vadd.f32 %v1247, %v1250
    %vm1252 = vweird.f32 %v1246
    %vm1253 = vweird.f32 %v1247
    %vm1254 = vmor %vm1252, %vm1253
    %v1255 = vsel %vm1254, %v1247, %v1251
    %v1256 = vand.u32 2147483647, %v1246
    %vm1257 = vcmp.eq.f32.partialorder %v1256, 8.507059e+37
    %v1258 = vand.u32 %v1246, 2147483648
    %v1259 = vor.u32 1.1754944e-38, %v1258
    %v1260 = vsel %vm1257, %v1259, %v1255
    %v1261 = vmul.f32 1.0, %v1260
    %v1262 = vtanh.pop %v1222
    %v1263 = vxor.u32 %v1223, 2147483648
    %v1264 = vmul.f32 %v1263, 1.442695
    %v1265 = vpow.pop %v1264
    %v1266 = vadd.f32 %v1265, 1.0
    %v1267 = vrcp.pop %v1266
    %v1268 = vmul.f32 %v1266, %v1267
    %v1269 = vsub.f32 1.0, %v1268
    %v1270 = vmul.f32 %v1267, %v1269
    %v1271 = vadd.f32 %v1267, %v1270
    %vm1272 = vweird.f32 %v1266
    %vm1273 = vweird.f32 %v1267
    %vm1274 = vmor %vm1272, %vm1273
    %v1275 = vsel %vm1274, %v1267, %v1271
    %v1276 = vand.u32 2147483647, %v1266
    %vm1277 = vcmp.eq.f32.partialorder %v1276, 8.507059e+37
    %v1278 = vand.u32 %v1266, 2147483648
    %v1279 = vor.u32 1.1754944e-38, %v1278
    %v1280 = vsel %vm1277, %v1279, %v1275
    %v1281 = vmul.f32 1.0, %v1280
    %v1282 = vmul.f32 %v1261, %v1108
    %v1283 = vmul.f32 %v1242, %v1262
    %v1284 = vadd.f32 %v1282, %v1283
    %v1285 = vtanh.pop %v1284
    %v1286 = vmul.f32 %v1281, %v1285
    %1287 = vst [vmem:[#allocation3 + $0x1] sm:$0x1] %v1286
    %1288 = vst [vmem:[%s1112] sm:$0x2] %v1286
    %s1289 = scalar_lea.vmem [#allocation2], 2
    %v1290 = vld [vmem:[%s1289] ss:$8 sm:$0xf]
    %s1291 = scalar_lea.vmem %s870, 2 [#allocation2]
    %v1292 = vld [vmem:[%s1291] ss:$8 sm:$0xf]
    %v1294 = vperm.slane %v1290, 0
    %v1295 = vperm.slane %v1290, 1
    %v1296 = vperm.slane %v1290, 2
    %v1297 = vperm.slane %v1290, 3
    %v1303 = vperm.slane %v1292, 0
    %v1304 = vperm.slane %v1292, 1
    %v1305 = vperm.slane %v1292, 2
    %v1306 = vperm.slane %v1292, 3
    %v1311 = vsel %vm959, %v1294, %v1303
    %v1312 = vsel %vm959, %v1295, %v1304
    %v1313 = vsel %vm959, %v1296, %v1305
    %v1314 = vsel %vm959, %v1297, %v1306
    %1315 = vmatpush.msra.mxu0 %v935
    %1316 = vmatpush.msra.mxu0 %v931
    %1317 = vmatpush.msra.mxu0 %v927
    %1318 = vmatpush.msra.mxu0 %v923
    %1319 = vmatpush.msra.mxu0 %v919
    %1320 = vmatpush.msra.mxu0 %v915
    %1321 = vmatpush.msra.mxu0 %v911
    %1322 = vmatpush.msra.mxu0 %v907
    %1323 = vmatpush.msra.mxu0 %v903
    %1324 = vmatpush.msra.mxu0 %v899
    %1325 = vmatpush.msra.mxu0 %v895
    %1326 = vmatpush.msra.mxu0 %v891
    %1327 = vmatpush.msra.mxu0 %v887
    %1328 = vmatpush.msra.mxu0 %v883
    %1329 = vmatpush.msra.mxu0 %v879
    %1330 = vmatpush.msra.mxu0 %v875
    %1331 = vmatmul.f32.gmra.mxu0 %v1286
    %v1332 = vpop.f32.mrf.mxu0
    %v1333 = vadd.f32 0.0, %v1332
    %1334 = vdwg.mxu0
    %1335 = vmatpush.msra.mxu0 %v936
    %1336 = vmatpush.msra.mxu0 %v932
    %1337 = vmatpush.msra.mxu0 %v928
    %1338 = vmatpush.msra.mxu0 %v924
    %1339 = vmatpush.msra.mxu0 %v920
    %1340 = vmatpush.msra.mxu0 %v916
    %1341 = vmatpush.msra.mxu0 %v912
    %1342 = vmatpush.msra.mxu0 %v908
    %1343 = vmatpush.msra.mxu0 %v904
    %1344 = vmatpush.msra.mxu0 %v900
    %1345 = vmatpush.msra.mxu0 %v896
    %1346 = vmatpush.msra.mxu0 %v892
    %1347 = vmatpush.msra.mxu0 %v888
    %1348 = vmatpush.msra.mxu0 %v884
    %1349 = vmatpush.msra.mxu0 %v880
    %1350 = vmatpush.msra.mxu0 %v876
    %1351 = vmatmul.f32.gmra.mxu0 %v1286
    %v1352 = vpop.f32.mrf.mxu0
    %v1353 = vadd.f32 0.0, %v1352
    %1354 = vdwg.mxu0
    %1355 = vmatpush.msra.mxu0 %v937
    %1356 = vmatpush.msra.mxu0 %v933
    %1357 = vmatpush.msra.mxu0 %v929
    %1358 = vmatpush.msra.mxu0 %v925
    %1359 = vmatpush.msra.mxu0 %v921
    %1360 = vmatpush.msra.mxu0 %v917
    %1361 = vmatpush.msra.mxu0 %v913
    %1362 = vmatpush.msra.mxu0 %v909
    %1363 = vmatpush.msra.mxu0 %v905
    %1364 = vmatpush.msra.mxu0 %v901
    %1365 = vmatpush.msra.mxu0 %v897
    %1366 = vmatpush.msra.mxu0 %v893
    %1367 = vmatpush.msra.mxu0 %v889
    %1368 = vmatpush.msra.mxu0 %v885
    %1369 = vmatpush.msra.mxu0 %v881
    %1370 = vmatpush.msra.mxu0 %v877
    %1371 = vmatmul.f32.gmra.mxu0 %v1286
    %v1372 = vpop.f32.mrf.mxu0
    %v1373 = vadd.f32 0.0, %v1372
    %1374 = vdwg.mxu0
    %1375 = vmatpush.msra.mxu0 %v938
    %1376 = vmatpush.msra.mxu0 %v934
    %1377 = vmatpush.msra.mxu0 %v930
    %1378 = vmatpush.msra.mxu0 %v926
    %1379 = vmatpush.msra.mxu0 %v922
    %1380 = vmatpush.msra.mxu0 %v918
    %1381 = vmatpush.msra.mxu0 %v914
    %1382 = vmatpush.msra.mxu0 %v910
    %1383 = vmatpush.msra.mxu0 %v906
    %1384 = vmatpush.msra.mxu0 %v902
    %1385 = vmatpush.msra.mxu0 %v898
    %1386 = vmatpush.msra.mxu0 %v894
    %1387 = vmatpush.msra.mxu0 %v890
    %1388 = vmatpush.msra.mxu0 %v886
    %1389 = vmatpush.msra.mxu0 %v882
    %1390 = vmatpush.msra.mxu0 %v878
    %1391 = vmatmul.f32.gmra.mxu0 %v1286
    %v1392 = vpop.f32.mrf.mxu0
    %v1393 = vadd.f32 0.0, %v1392
    %1394 = vdwg.mxu0
    %v1395 = vadd.f32 %v1311, %v1333
    %v1396 = vadd.f32 %v1312, %v1353
    %v1397 = vadd.f32 %v1313, %v1373
    %v1398 = vadd.f32 %v1314, %v1393
    %v1399 = vxor.u32 %v1395, 2147483648
    %v1400 = vmul.f32 %v1399, 1.442695
    %v1401 = vpow.pop %v1400
    %v1402 = vadd.f32 %v1401, 1.0
    %v1403 = vrcp.pop %v1402
    %v1404 = vmul.f32 %v1402, %v1403
    %v1405 = vsub.f32 1.0, %v1404
    %v1406 = vmul.f32 %v1403, %v1405
    %v1407 = vadd.f32 %v1403, %v1406
    %vm1408 = vweird.f32 %v1402
    %vm1409 = vweird.f32 %v1403
    %vm1410 = vmor %vm1408, %vm1409
    %v1411 = vsel %vm1410, %v1403, %v1407
    %v1412 = vand.u32 2147483647, %v1402
    %vm1413 = vcmp.eq.f32.partialorder %v1412, 8.507059e+37
    %v1414 = vand.u32 %v1402, 2147483648
    %v1415 = vor.u32 1.1754944e-38, %v1414
    %v1416 = vsel %vm1413, %v1415, %v1411
    %v1417 = vmul.f32 1.0, %v1416
    %v1418 = vxor.u32 %v1396, 2147483648
    %v1419 = vmul.f32 %v1418, 1.442695
    %v1420 = vpow.pop %v1419
    %v1421 = vadd.f32 %v1420, 1.0
    %v1422 = vrcp.pop %v1421
    %v1423 = vmul.f32 %v1421, %v1422
    %v1424 = vsub.f32 1.0, %v1423
    %v1425 = vmul.f32 %v1422, %v1424
    %v1426 = vadd.f32 %v1422, %v1425
    %vm1427 = vweird.f32 %v1421
    %vm1428 = vweird.f32 %v1422
    %vm1429 = vmor %vm1427, %vm1428
    %v1430 = vsel %vm1429, %v1422, %v1426
    %v1431 = vand.u32 2147483647, %v1421
    %vm1432 = vcmp.eq.f32.partialorder %v1431, 8.507059e+37
    %v1433 = vand.u32 %v1421, 2147483648
    %v1434 = vor.u32 1.1754944e-38, %v1433
    %v1435 = vsel %vm1432, %v1434, %v1430
    %v1436 = vmul.f32 1.0, %v1435
    %v1437 = vtanh.pop %v1397
    %v1438 = vxor.u32 %v1398, 2147483648
    %v1439 = vmul.f32 %v1438, 1.442695
    %v1440 = vpow.pop %v1439
    %v1441 = vadd.f32 %v1440, 1.0
    %v1442 = vrcp.pop %v1441
    %v1443 = vmul.f32 %v1441, %v1442
    %v1444 = vsub.f32 1.0, %v1443
    %v1445 = vmul.f32 %v1442, %v1444
    %v1446 = vadd.f32 %v1442, %v1445
    %vm1447 = vweird.f32 %v1441
    %vm1448 = vweird.f32 %v1442
    %vm1449 = vmor %vm1447, %vm1448
    %v1450 = vsel %vm1449, %v1442, %v1446
    %v1451 = vand.u32 2147483647, %v1441
    %vm1452 = vcmp.eq.f32.partialorder %v1451, 8.507059e+37
    %v1453 = vand.u32 %v1441, 2147483648
    %v1454 = vor.u32 1.1754944e-38, %v1453
    %v1455 = vsel %vm1452, %v1454, %v1450
    %v1456 = vmul.f32 1.0, %v1455
    %v1457 = vmul.f32 %v1436, %v1284
    %v1458 = vmul.f32 %v1417, %v1437
    %v1459 = vadd.f32 %v1457, %v1458
    %v1460 = vtanh.pop %v1459
    %v1461 = vmul.f32 %v1456, %v1460
    %1462 = vst [vmem:[#allocation3 + $0x2] sm:$0x1] %v1461
    %1463 = vst [vmem:[%s1112 + $0x1] sm:$0x2] %v1461
    %s1464 = scalar_lea.vmem [#allocation2], 3
    %v1465 = vld [vmem:[%s1464] ss:$8 sm:$0xf]
    %s1466 = scalar_lea.vmem %s870, 3 [#allocation2]
    %v1467 = vld [vmem:[%s1466] ss:$8 sm:$0xf]
    %v1469 = vperm.slane %v1465, 0
    %v1470 = vperm.slane %v1465, 1
    %v1471 = vperm.slane %v1465, 2
    %v1472 = vperm.slane %v1465, 3
    %v1478 = vperm.slane %v1467, 0
    %v1479 = vperm.slane %v1467, 1
    %v1480 = vperm.slane %v1467, 2
    %v1481 = vperm.slane %v1467, 3
    %v1486 = vsel %vm959, %v1469, %v1478
    %v1487 = vsel %vm959, %v1470, %v1479
    %v1488 = vsel %vm959, %v1471, %v1480
    %v1489 = vsel %vm959, %v1472, %v1481
    %1490 = vmatpush.msra.mxu0 %v935
    %1491 = vmatpush.msra.mxu0 %v931
    %1492 = vmatpush.msra.mxu0 %v927
    %1493 = vmatpush.msra.mxu0 %v923
    %1494 = vmatpush.msra.mxu0 %v919
    %1495 = vmatpush.msra.mxu0 %v915
    %1496 = vmatpush.msra.mxu0 %v911
    %1497 = vmatpush.msra.mxu0 %v907
    %1498 = vmatpush.msra.mxu0 %v903
    %1499 = vmatpush.msra.mxu0 %v899
    %1500 = vmatpush.msra.mxu0 %v895
    %1501 = vmatpush.msra.mxu0 %v891
    %1502 = vmatpush.msra.mxu0 %v887
    %1503 = vmatpush.msra.mxu0 %v883
    %1504 = vmatpush.msra.mxu0 %v879
    %1505 = vmatpush.msra.mxu0 %v875
    %1506 = vmatmul.f32.gmra.mxu0 %v1461
    %v1507 = vpop.f32.mrf.mxu0
    %v1508 = vadd.f32 0.0, %v1507
    %1509 = vdwg.mxu0
    %1510 = vmatpush.msra.mxu0 %v936
    %1511 = vmatpush.msra.mxu0 %v932
    %1512 = vmatpush.msra.mxu0 %v928
    %1513 = vmatpush.msra.mxu0 %v924
    %1514 = vmatpush.msra.mxu0 %v920
    %1515 = vmatpush.msra.mxu0 %v916
    %1516 = vmatpush.msra.mxu0 %v912
    %1517 = vmatpush.msra.mxu0 %v908
    %1518 = vmatpush.msra.mxu0 %v904
    %1519 = vmatpush.msra.mxu0 %v900
    %1520 = vmatpush.msra.mxu0 %v896
    %1521 = vmatpush.msra.mxu0 %v892
    %1522 = vmatpush.msra.mxu0 %v888
    %1523 = vmatpush.msra.mxu0 %v884
    %1524 = vmatpush.msra.mxu0 %v880
    %1525 = vmatpush.msra.mxu0 %v876
    %1526 = vmatmul.f32.gmra.mxu0 %v1461
    %v1527 = vpop.f32.mrf.mxu0
    %v1528 = vadd.f32 0.0, %v1527
    %1529 = vdwg.mxu0
    %1530 = vmatpush.msra.mxu0 %v937
    %1531 = vmatpush.msra.mxu0 %v933
    %1532 = vmatpush.msra.mxu0 %v929
    %1533 = vmatpush.msra.mxu0 %v925
    %1534 = vmatpush.msra.mxu0 %v921
    %1535 = vmatpush.msra.mxu0 %v917
    %1536 = vmatpush.msra.mxu0 %v913
    %1537 = vmatpush.msra.mxu0 %v909
    %1538 = vmatpush.msra.mxu0 %v905
    %1539 = vmatpush.msra.mxu0 %v901
    %1540 = vmatpush.msra.mxu0 %v897
    %1541 = vmatpush.msra.mxu0 %v893
    %1542 = vmatpush.msra.mxu0 %v889
    %1543 = vmatpush.msra.mxu0 %v885
    %1544 = vmatpush.msra.mxu0 %v881
    %1545 = vmatpush.msra.mxu0 %v877
    %1546 = vmatmul.f32.gmra.mxu0 %v1461
    %v1547 = vpop.f32.mrf.mxu0
    %v1548 = vadd.f32 0.0, %v1547
    %1549 = vdwg.mxu0
    %1550 = vmatpush.msra.mxu0 %v938
    %1551 = vmatpush.msra.mxu0 %v934
    %1552 = vmatpush.msra.mxu0 %v930
    %1553 = vmatpush.msra.mxu0 %v926
    %1554 = vmatpush.msra.mxu0 %v922
    %1555 = vmatpush.msra.mxu0 %v918
    %1556 = vmatpush.msra.mxu0 %v914
    %1557 = vmatpush.msra.mxu0 %v910
    %1558 = vmatpush.msra.mxu0 %v906
    %1559 = vmatpush.msra.mxu0 %v902
    %1560 = vmatpush.msra.mxu0 %v898
    %1561 = vmatpush.msra.mxu0 %v894
    %1562 = vmatpush.msra.mxu0 %v890
    %1563 = vmatpush.msra.mxu0 %v886
    %1564 = vmatpush.msra.mxu0 %v882
    %1565 = vmatpush.msra.mxu0 %v878
    %1566 = vmatmul.f32.gmra.mxu0 %v1461
    %v1567 = vpop.f32.mrf.mxu0
    %v1568 = vadd.f32 0.0, %v1567
    %1569 = vdwg.mxu0
    %v1570 = vadd.f32 %v1486, %v1508
    %v1571 = vadd.f32 %v1487, %v1528
    %v1572 = vadd.f32 %v1488, %v1548
    %v1573 = vadd.f32 %v1489, %v1568
    %v1574 = vxor.u32 %v1570, 2147483648
    %v1575 = vmul.f32 %v1574, 1.442695
    %v1576 = vpow.pop %v1575
    %v1577 = vadd.f32 %v1576, 1.0
    %v1578 = vrcp.pop %v1577
    %v1579 = vmul.f32 %v1577, %v1578
    %v1580 = vsub.f32 1.0, %v1579
    %v1581 = vmul.f32 %v1578, %v1580
    %v1582 = vadd.f32 %v1578, %v1581
    %vm1583 = vweird.f32 %v1577
    %vm1584 = vweird.f32 %v1578
    %vm1585 = vmor %vm1583, %vm1584
    %v1586 = vsel %vm1585, %v1578, %v1582
    %v1587 = vand.u32 2147483647, %v1577
    %vm1588 = vcmp.eq.f32.partialorder %v1587, 8.507059e+37
    %v1589 = vand.u32 %v1577, 2147483648
    %v1590 = vor.u32 1.1754944e-38, %v1589
    %v1591 = vsel %vm1588, %v1590, %v1586
    %v1592 = vmul.f32 1.0, %v1591
    %v1593 = vxor.u32 %v1571, 2147483648
    %v1594 = vmul.f32 %v1593, 1.442695
    %v1595 = vpow.pop %v1594
    %v1596 = vadd.f32 %v1595, 1.0
    %v1597 = vrcp.pop %v1596
    %v1598 = vmul.f32 %v1596, %v1597
    %v1599 = vsub.f32 1.0, %v1598
    %v1600 = vmul.f32 %v1597, %v1599
    %v1601 = vadd.f32 %v1597, %v1600
    %vm1602 = vweird.f32 %v1596
    %vm1603 = vweird.f32 %v1597
    %vm1604 = vmor %vm1602, %vm1603
    %v1605 = vsel %vm1604, %v1597, %v1601
    %v1606 = vand.u32 2147483647, %v1596
    %vm1607 = vcmp.eq.f32.partialorder %v1606, 8.507059e+37
    %v1608 = vand.u32 %v1596, 2147483648
    %v1609 = vor.u32 1.1754944e-38, %v1608
    %v1610 = vsel %vm1607, %v1609, %v1605
    %v1611 = vmul.f32 1.0, %v1610
    %v1612 = vtanh.pop %v1572
    %v1613 = vxor.u32 %v1573, 2147483648
    %v1614 = vmul.f32 %v1613, 1.442695
    %v1615 = vpow.pop %v1614
    %v1616 = vadd.f32 %v1615, 1.0
    %v1617 = vrcp.pop %v1616
    %v1618 = vmul.f32 %v1616, %v1617
    %v1619 = vsub.f32 1.0, %v1618
    %v1620 = vmul.f32 %v1617, %v1619
    %v1621 = vadd.f32 %v1617, %v1620
    %vm1622 = vweird.f32 %v1616
    %vm1623 = vweird.f32 %v1617
    %vm1624 = vmor %vm1622, %vm1623
    %v1625 = vsel %vm1624, %v1617, %v1621
    %v1626 = vand.u32 2147483647, %v1616
    %vm1627 = vcmp.eq.f32.partialorder %v1626, 8.507059e+37
    %v1628 = vand.u32 %v1616, 2147483648
    %v1629 = vor.u32 1.1754944e-38, %v1628
    %v1630 = vsel %vm1627, %v1629, %v1625
    %v1631 = vmul.f32 1.0, %v1630
    %v1632 = vmul.f32 %v1611, %v1459
    %v1633 = vmul.f32 %v1592, %v1612
    %v1634 = vadd.f32 %v1632, %v1633
    %v1635 = vtanh.pop %v1634
    %v1636 = vmul.f32 %v1631, %v1635
    %1637 = vst [vmem:[#allocation3 + $0x3] sm:$0x1] %v1636
    %1638 = vst [vmem:[%s1112 + $0x2] sm:$0x2] %v1636
    %s1639 = scalar_lea.vmem [#allocation2], 4
    %v1640 = vld [vmem:[%s1639] ss:$8 sm:$0xf]
    %s1641 = scalar_lea.vmem %s870, 4 [#allocation2]
    %v1642 = vld [vmem:[%s1641] ss:$8 sm:$0xf]
    %v1644 = vperm.slane %v1640, 0
    %v1645 = vperm.slane %v1640, 1
    %v1646 = vperm.slane %v1640, 2
    %v1647 = vperm.slane %v1640, 3
    %v1653 = vperm.slane %v1642, 0
    %v1654 = vperm.slane %v1642, 1
    %v1655 = vperm.slane %v1642, 2
    %v1656 = vperm.slane %v1642, 3
    %v1661 = vsel %vm959, %v1644, %v1653
    %v1662 = vsel %vm959, %v1645, %v1654
    %v1663 = vsel %vm959, %v1646, %v1655
    %v1664 = vsel %vm959, %v1647, %v1656
    %1665 = vmatpush.msra.mxu0 %v935
    %1666 = vmatpush.msra.mxu0 %v931
    %1667 = vmatpush.msra.mxu0 %v927
    %1668 = vmatpush.msra.mxu0 %v923
    %1669 = vmatpush.msra.mxu0 %v919
    %1670 = vmatpush.msra.mxu0 %v915
    %1671 = vmatpush.msra.mxu0 %v911
    %1672 = vmatpush.msra.mxu0 %v907
    %1673 = vmatpush.msra.mxu0 %v903
    %1674 = vmatpush.msra.mxu0 %v899
    %1675 = vmatpush.msra.mxu0 %v895
    %1676 = vmatpush.msra.mxu0 %v891
    %1677 = vmatpush.msra.mxu0 %v887
    %1678 = vmatpush.msra.mxu0 %v883
    %1679 = vmatpush.msra.mxu0 %v879
    %1680 = vmatpush.msra.mxu0 %v875
    %1681 = vmatmul.f32.gmra.mxu0 %v1636
    %v1682 = vpop.f32.mrf.mxu0
    %v1683 = vadd.f32 0.0, %v1682
    %1684 = vdwg.mxu0
    %1685 = vmatpush.msra.mxu0 %v936
    %1686 = vmatpush.msra.mxu0 %v932
    %1687 = vmatpush.msra.mxu0 %v928
    %1688 = vmatpush.msra.mxu0 %v924
    %1689 = vmatpush.msra.mxu0 %v920
    %1690 = vmatpush.msra.mxu0 %v916
    %1691 = vmatpush.msra.mxu0 %v912
    %1692 = vmatpush.msra.mxu0 %v908
    %1693 = vmatpush.msra.mxu0 %v904
    %1694 = vmatpush.msra.mxu0 %v900
    %1695 = vmatpush.msra.mxu0 %v896
    %1696 = vmatpush.msra.mxu0 %v892
    %1697 = vmatpush.msra.mxu0 %v888
    %1698 = vmatpush.msra.mxu0 %v884
    %1699 = vmatpush.msra.mxu0 %v880
    %1700 = vmatpush.msra.mxu0 %v876
    %1701 = vmatmul.f32.gmra.mxu0 %v1636
    %v1702 = vpop.f32.mrf.mxu0
    %v1703 = vadd.f32 0.0, %v1702
    %1704 = vdwg.mxu0
    %1705 = vmatpush.msra.mxu0 %v937
    %1706 = vmatpush.msra.mxu0 %v933
    %1707 = vmatpush.msra.mxu0 %v929
    %1708 = vmatpush.msra.mxu0 %v925
    %1709 = vmatpush.msra.mxu0 %v921
    %1710 = vmatpush.msra.mxu0 %v917
    %1711 = vmatpush.msra.mxu0 %v913
    %1712 = vmatpush.msra.mxu0 %v909
    %1713 = vmatpush.msra.mxu0 %v905
    %1714 = vmatpush.msra.mxu0 %v901
    %1715 = vmatpush.msra.mxu0 %v897
    %1716 = vmatpush.msra.mxu0 %v893
    %1717 = vmatpush.msra.mxu0 %v889
    %1718 = vmatpush.msra.mxu0 %v885
    %1719 = vmatpush.msra.mxu0 %v881
    %1720 = vmatpush.msra.mxu0 %v877
    %1721 = vmatmul.f32.gmra.mxu0 %v1636
    %v1722 = vpop.f32.mrf.mxu0
    %v1723 = vadd.f32 0.0, %v1722
    %1724 = vdwg.mxu0
    %1725 = vmatpush.msra.mxu0 %v938
    %1726 = vmatpush.msra.mxu0 %v934
    %1727 = vmatpush.msra.mxu0 %v930
    %1728 = vmatpush.msra.mxu0 %v926
    %1729 = vmatpush.msra.mxu0 %v922
    %1730 = vmatpush.msra.mxu0 %v918
    %1731 = vmatpush.msra.mxu0 %v914
    %1732 = vmatpush.msra.mxu0 %v910
    %1733 = vmatpush.msra.mxu0 %v906
    %1734 = vmatpush.msra.mxu0 %v902
    %1735 = vmatpush.msra.mxu0 %v898
    %1736 = vmatpush.msra.mxu0 %v894
    %1737 = vmatpush.msra.mxu0 %v890
    %1738 = vmatpush.msra.mxu0 %v886
    %1739 = vmatpush.msra.mxu0 %v882
    %1740 = vmatpush.msra.mxu0 %v878
    %1741 = vmatmul.f32.gmra.mxu0 %v1636
    %v1742 = vpop.f32.mrf.mxu0
    %v1743 = vadd.f32 0.0, %v1742
    %1744 = vdwg.mxu0
    %v1745 = vadd.f32 %v1661, %v1683
    %v1746 = vadd.f32 %v1662, %v1703
    %v1747 = vadd.f32 %v1663, %v1723
    %v1748 = vadd.f32 %v1664, %v1743
    %v1749 = vxor.u32 %v1745, 2147483648
    %v1750 = vmul.f32 %v1749, 1.442695
    %v1751 = vpow.pop %v1750
    %v1752 = vadd.f32 %v1751, 1.0
    %v1753 = vrcp.pop %v1752
    %v1754 = vmul.f32 %v1752, %v1753
    %v1755 = vsub.f32 1.0, %v1754
    %v1756 = vmul.f32 %v1753, %v1755
    %v1757 = vadd.f32 %v1753, %v1756
    %vm1758 = vweird.f32 %v1752
    %vm1759 = vweird.f32 %v1753
    %vm1760 = vmor %vm1758, %vm1759
    %v1761 = vsel %vm1760, %v1753, %v1757
    %v1762 = vand.u32 2147483647, %v1752
    %vm1763 = vcmp.eq.f32.partialorder %v1762, 8.507059e+37
    %v1764 = vand.u32 %v1752, 2147483648
    %v1765 = vor.u32 1.1754944e-38, %v1764
    %v1766 = vsel %vm1763, %v1765, %v1761
    %v1767 = vmul.f32 1.0, %v1766
    %v1768 = vxor.u32 %v1746, 2147483648
    %v1769 = vmul.f32 %v1768, 1.442695
    %v1770 = vpow.pop %v1769
    %v1771 = vadd.f32 %v1770, 1.0
    %v1772 = vrcp.pop %v1771
    %v1773 = vmul.f32 %v1771, %v1772
    %v1774 = vsub.f32 1.0, %v1773
    %v1775 = vmul.f32 %v1772, %v1774
    %v1776 = vadd.f32 %v1772, %v1775
    %vm1777 = vweird.f32 %v1771
    %vm1778 = vweird.f32 %v1772
    %vm1779 = vmor %vm1777, %vm1778
    %v1780 = vsel %vm1779, %v1772, %v1776
    %v1781 = vand.u32 2147483647, %v1771
    %vm1782 = vcmp.eq.f32.partialorder %v1781, 8.507059e+37
    %v1783 = vand.u32 %v1771, 2147483648
    %v1784 = vor.u32 1.1754944e-38, %v1783
    %v1785 = vsel %vm1782, %v1784, %v1780
    %v1786 = vmul.f32 1.0, %v1785
    %v1787 = vtanh.pop %v1747
    %v1788 = vxor.u32 %v1748, 2147483648
    %v1789 = vmul.f32 %v1788, 1.442695
    %v1790 = vpow.pop %v1789
    %v1791 = vadd.f32 %v1790, 1.0
    %v1792 = vrcp.pop %v1791
    %v1793 = vmul.f32 %v1791, %v1792
    %v1794 = vsub.f32 1.0, %v1793
    %v1795 = vmul.f32 %v1792, %v1794
    %v1796 = vadd.f32 %v1792, %v1795
    %vm1797 = vweird.f32 %v1791
    %vm1798 = vweird.f32 %v1792
    %vm1799 = vmor %vm1797, %vm1798
    %v1800 = vsel %vm1799, %v1792, %v1796
    %v1801 = vand.u32 2147483647, %v1791
    %vm1802 = vcmp.eq.f32.partialorder %v1801, 8.507059e+37
    %v1803 = vand.u32 %v1791, 2147483648
    %v1804 = vor.u32 1.1754944e-38, %v1803
    %v1805 = vsel %vm1802, %v1804, %v1800
    %v1806 = vmul.f32 1.0, %v1805
    %v1807 = vmul.f32 %v1786, %v1634
    %v1808 = vmul.f32 %v1767, %v1787
    %v1809 = vadd.f32 %v1807, %v1808
    %v1810 = vtanh.pop %v1809
    %v1811 = vmul.f32 %v1806, %v1810
    %1812 = vst [vmem:[#allocation3 + $0x4] sm:$0x1] %v1811
    %1813 = vst [vmem:[%s1112 + $0x3] sm:$0x2] %v1811
    %s1814 = scalar_lea.vmem [#allocation2], 5
    %v1815 = vld [vmem:[%s1814] ss:$8 sm:$0xf]
    %s1816 = scalar_lea.vmem %s870, 5 [#allocation2]
    %v1817 = vld [vmem:[%s1816] ss:$8 sm:$0xf]
    %v1819 = vperm.slane %v1815, 0
    %v1820 = vperm.slane %v1815, 1
    %v1821 = vperm.slane %v1815, 2
    %v1822 = vperm.slane %v1815, 3
    %v1828 = vperm.slane %v1817, 0
    %v1829 = vperm.slane %v1817, 1
    %v1830 = vperm.slane %v1817, 2
    %v1831 = vperm.slane %v1817, 3
    %v1836 = vsel %vm959, %v1819, %v1828
    %v1837 = vsel %vm959, %v1820, %v1829
    %v1838 = vsel %vm959, %v1821, %v1830
    %v1839 = vsel %vm959, %v1822, %v1831
    %1840 = vmatpush.msra.mxu0 %v935
    %1841 = vmatpush.msra.mxu0 %v931
    %1842 = vmatpush.msra.mxu0 %v927
    %1843 = vmatpush.msra.mxu0 %v923
    %1844 = vmatpush.msra.mxu0 %v919
    %1845 = vmatpush.msra.mxu0 %v915
    %1846 = vmatpush.msra.mxu0 %v911
    %1847 = vmatpush.msra.mxu0 %v907
    %1848 = vmatpush.msra.mxu0 %v903
    %1849 = vmatpush.msra.mxu0 %v899
    %1850 = vmatpush.msra.mxu0 %v895
    %1851 = vmatpush.msra.mxu0 %v891
    %1852 = vmatpush.msra.mxu0 %v887
    %1853 = vmatpush.msra.mxu0 %v883
    %1854 = vmatpush.msra.mxu0 %v879
    %1855 = vmatpush.msra.mxu0 %v875
    %1856 = vmatmul.f32.gmra.mxu0 %v1811
    %v1857 = vpop.f32.mrf.mxu0
    %v1858 = vadd.f32 0.0, %v1857
    %1859 = vdwg.mxu0
    %1860 = vmatpush.msra.mxu0 %v936
    %1861 = vmatpush.msra.mxu0 %v932
    %1862 = vmatpush.msra.mxu0 %v928
    %1863 = vmatpush.msra.mxu0 %v924
    %1864 = vmatpush.msra.mxu0 %v920
    %1865 = vmatpush.msra.mxu0 %v916
    %1866 = vmatpush.msra.mxu0 %v912
    %1867 = vmatpush.msra.mxu0 %v908
    %1868 = vmatpush.msra.mxu0 %v904
    %1869 = vmatpush.msra.mxu0 %v900
    %1870 = vmatpush.msra.mxu0 %v896
    %1871 = vmatpush.msra.mxu0 %v892
    %1872 = vmatpush.msra.mxu0 %v888
    %1873 = vmatpush.msra.mxu0 %v884
    %1874 = vmatpush.msra.mxu0 %v880
    %1875 = vmatpush.msra.mxu0 %v876
    %1876 = vmatmul.f32.gmra.mxu0 %v1811
    %v1877 = vpop.f32.mrf.mxu0
    %v1878 = vadd.f32 0.0, %v1877
    %1879 = vdwg.mxu0
    %1880 = vmatpush.msra.mxu0 %v937
    %1881 = vmatpush.msra.mxu0 %v933
    %1882 = vmatpush.msra.mxu0 %v929
    %1883 = vmatpush.msra.mxu0 %v925
    %1884 = vmatpush.msra.mxu0 %v921
    %1885 = vmatpush.msra.mxu0 %v917
    %1886 = vmatpush.msra.mxu0 %v913
    %1887 = vmatpush.msra.mxu0 %v909
    %1888 = vmatpush.msra.mxu0 %v905
    %1889 = vmatpush.msra.mxu0 %v901
    %1890 = vmatpush.msra.mxu0 %v897
    %1891 = vmatpush.msra.mxu0 %v893
    %1892 = vmatpush.msra.mxu0 %v889
    %1893 = vmatpush.msra.mxu0 %v885
    %1894 = vmatpush.msra.mxu0 %v881
    %1895 = vmatpush.msra.mxu0 %v877
    %1896 = vmatmul.f32.gmra.mxu0 %v1811
    %v1897 = vpop.f32.mrf.mxu0
    %v1898 = vadd.f32 0.0, %v1897
    %1899 = vdwg.mxu0
    %1900 = vmatpush.msra.mxu0 %v938
    %1901 = vmatpush.msra.mxu0 %v934
    %1902 = vmatpush.msra.mxu0 %v930
    %1903 = vmatpush.msra.mxu0 %v926
    %1904 = vmatpush.msra.mxu0 %v922
    %1905 = vmatpush.msra.mxu0 %v918
    %1906 = vmatpush.msra.mxu0 %v914
    %1907 = vmatpush.msra.mxu0 %v910
    %1908 = vmatpush.msra.mxu0 %v906
    %1909 = vmatpush.msra.mxu0 %v902
    %1910 = vmatpush.msra.mxu0 %v898
    %1911 = vmatpush.msra.mxu0 %v894
    %1912 = vmatpush.msra.mxu0 %v890
    %1913 = vmatpush.msra.mxu0 %v886
    %1914 = vmatpush.msra.mxu0 %v882
    %1915 = vmatpush.msra.mxu0 %v878
    %1916 = vmatmul.f32.gmra.mxu0 %v1811
    %v1917 = vpop.f32.mrf.mxu0
    %v1918 = vadd.f32 0.0, %v1917
    %1919 = vdwg.mxu0
    %v1920 = vadd.f32 %v1836, %v1858
    %v1921 = vadd.f32 %v1837, %v1878
    %v1922 = vadd.f32 %v1838, %v1898
    %v1923 = vadd.f32 %v1839, %v1918
    %v1924 = vxor.u32 %v1920, 2147483648
    %v1925 = vmul.f32 %v1924, 1.442695
    %v1926 = vpow.pop %v1925
    %v1927 = vadd.f32 %v1926, 1.0
    %v1928 = vrcp.pop %v1927
    %v1929 = vmul.f32 %v1927, %v1928
    %v1930 = vsub.f32 1.0, %v1929
    %v1931 = vmul.f32 %v1928, %v1930
    %v1932 = vadd.f32 %v1928, %v1931
    %vm1933 = vweird.f32 %v1927
    %vm1934 = vweird.f32 %v1928
    %vm1935 = vmor %vm1933, %vm1934
    %v1936 = vsel %vm1935, %v1928, %v1932
    %v1937 = vand.u32 2147483647, %v1927
    %vm1938 = vcmp.eq.f32.partialorder %v1937, 8.507059e+37
    %v1939 = vand.u32 %v1927, 2147483648
    %v1940 = vor.u32 1.1754944e-38, %v1939
    %v1941 = vsel %vm1938, %v1940, %v1936
    %v1942 = vmul.f32 1.0, %v1941
    %v1943 = vxor.u32 %v1921, 2147483648
    %v1944 = vmul.f32 %v1943, 1.442695
    %v1945 = vpow.pop %v1944
    %v1946 = vadd.f32 %v1945, 1.0
    %v1947 = vrcp.pop %v1946
    %v1948 = vmul.f32 %v1946, %v1947
    %v1949 = vsub.f32 1.0, %v1948
    %v1950 = vmul.f32 %v1947, %v1949
    %v1951 = vadd.f32 %v1947, %v1950
    %vm1952 = vweird.f32 %v1946
    %vm1953 = vweird.f32 %v1947
    %vm1954 = vmor %vm1952, %vm1953
    %v1955 = vsel %vm1954, %v1947, %v1951
    %v1956 = vand.u32 2147483647, %v1946
    %vm1957 = vcmp.eq.f32.partialorder %v1956, 8.507059e+37
    %v1958 = vand.u32 %v1946, 2147483648
    %v1959 = vor.u32 1.1754944e-38, %v1958
    %v1960 = vsel %vm1957, %v1959, %v1955
    %v1961 = vmul.f32 1.0, %v1960
    %v1962 = vtanh.pop %v1922
    %v1963 = vxor.u32 %v1923, 2147483648
    %v1964 = vmul.f32 %v1963, 1.442695
    %v1965 = vpow.pop %v1964
    %v1966 = vadd.f32 %v1965, 1.0
    %v1967 = vrcp.pop %v1966
    %v1968 = vmul.f32 %v1966, %v1967
    %v1969 = vsub.f32 1.0, %v1968
    %v1970 = vmul.f32 %v1967, %v1969
    %v1971 = vadd.f32 %v1967, %v1970
    %vm1972 = vweird.f32 %v1966
    %vm1973 = vweird.f32 %v1967
    %vm1974 = vmor %vm1972, %vm1973
    %v1975 = vsel %vm1974, %v1967, %v1971
    %v1976 = vand.u32 2147483647, %v1966
    %vm1977 = vcmp.eq.f32.partialorder %v1976, 8.507059e+37
    %v1978 = vand.u32 %v1966, 2147483648
    %v1979 = vor.u32 1.1754944e-38, %v1978
    %v1980 = vsel %vm1977, %v1979, %v1975
    %v1981 = vmul.f32 1.0, %v1980
    %v1982 = vmul.f32 %v1961, %v1809
    %v1983 = vmul.f32 %v1942, %v1962
    %v1984 = vadd.f32 %v1982, %v1983
    %v1985 = vtanh.pop %v1984
    %v1986 = vmul.f32 %v1981, %v1985
    %1987 = vst [vmem:[#allocation3 + $0x5] sm:$0x1] %v1986
    %1988 = vst [vmem:[%s1112 + $0x4] sm:$0x2] %v1986
    %s1989 = scalar_lea.vmem [#allocation2], 6
    %v1990 = vld [vmem:[%s1989] ss:$8 sm:$0xf]
    %s1991 = scalar_lea.vmem %s870, 6 [#allocation2]
    %v1992 = vld [vmem:[%s1991] ss:$8 sm:$0xf]
    %v1994 = vperm.slane %v1990, 0
    %v1995 = vperm.slane %v1990, 1
    %v1996 = vperm.slane %v1990, 2
    %v1997 = vperm.slane %v1990, 3
    %v2003 = vperm.slane %v1992, 0
    %v2004 = vperm.slane %v1992, 1
    %v2005 = vperm.slane %v1992, 2
    %v2006 = vperm.slane %v1992, 3
    %v2011 = vsel %vm959, %v1994, %v2003
    %v2012 = vsel %vm959, %v1995, %v2004
    %v2013 = vsel %vm959, %v1996, %v2005
    %v2014 = vsel %vm959, %v1997, %v2006
    %2015 = vmatpush.msra.mxu0 %v935
    %2016 = vmatpush.msra.mxu0 %v931
    %2017 = vmatpush.msra.mxu0 %v927
    %2018 = vmatpush.msra.mxu0 %v923
    %2019 = vmatpush.msra.mxu0 %v919
    %2020 = vmatpush.msra.mxu0 %v915
    %2021 = vmatpush.msra.mxu0 %v911
    %2022 = vmatpush.msra.mxu0 %v907
    %2023 = vmatpush.msra.mxu0 %v903
    %2024 = vmatpush.msra.mxu0 %v899
    %2025 = vmatpush.msra.mxu0 %v895
    %2026 = vmatpush.msra.mxu0 %v891
    %2027 = vmatpush.msra.mxu0 %v887
    %2028 = vmatpush.msra.mxu0 %v883
    %2029 = vmatpush.msra.mxu0 %v879
    %2030 = vmatpush.msra.mxu0 %v875
    %2031 = vmatmul.f32.gmra.mxu0 %v1986
    %v2032 = vpop.f32.mrf.mxu0
    %v2033 = vadd.f32 0.0, %v2032
    %2034 = vdwg.mxu0
    %2035 = vmatpush.msra.mxu0 %v936
    %2036 = vmatpush.msra.mxu0 %v932
    %2037 = vmatpush.msra.mxu0 %v928
    %2038 = vmatpush.msra.mxu0 %v924
    %2039 = vmatpush.msra.mxu0 %v920
    %2040 = vmatpush.msra.mxu0 %v916
    %2041 = vmatpush.msra.mxu0 %v912
    %2042 = vmatpush.msra.mxu0 %v908
    %2043 = vmatpush.msra.mxu0 %v904
    %2044 = vmatpush.msra.mxu0 %v900
    %2045 = vmatpush.msra.mxu0 %v896
    %2046 = vmatpush.msra.mxu0 %v892
    %2047 = vmatpush.msra.mxu0 %v888
    %2048 = vmatpush.msra.mxu0 %v884
    %2049 = vmatpush.msra.mxu0 %v880
    %2050 = vmatpush.msra.mxu0 %v876
    %2051 = vmatmul.f32.gmra.mxu0 %v1986
    %v2052 = vpop.f32.mrf.mxu0
    %v2053 = vadd.f32 0.0, %v2052
    %2054 = vdwg.mxu0
    %2055 = vmatpush.msra.mxu0 %v937
    %2056 = vmatpush.msra.mxu0 %v933
    %2057 = vmatpush.msra.mxu0 %v929
    %2058 = vmatpush.msra.mxu0 %v925
    %2059 = vmatpush.msra.mxu0 %v921
    %2060 = vmatpush.msra.mxu0 %v917
    %2061 = vmatpush.msra.mxu0 %v913
    %2062 = vmatpush.msra.mxu0 %v909
    %2063 = vmatpush.msra.mxu0 %v905
    %2064 = vmatpush.msra.mxu0 %v901
    %2065 = vmatpush.msra.mxu0 %v897
    %2066 = vmatpush.msra.mxu0 %v893
    %2067 = vmatpush.msra.mxu0 %v889
    %2068 = vmatpush.msra.mxu0 %v885
    %2069 = vmatpush.msra.mxu0 %v881
    %2070 = vmatpush.msra.mxu0 %v877
    %2071 = vmatmul.f32.gmra.mxu0 %v1986
    %v2072 = vpop.f32.mrf.mxu0
    %v2073 = vadd.f32 0.0, %v2072
    %2074 = vdwg.mxu0
    %2075 = vmatpush.msra.mxu0 %v938
    %2076 = vmatpush.msra.mxu0 %v934
    %2077 = vmatpush.msra.mxu0 %v930
    %2078 = vmatpush.msra.mxu0 %v926
    %2079 = vmatpush.msra.mxu0 %v922
    %2080 = vmatpush.msra.mxu0 %v918
    %2081 = vmatpush.msra.mxu0 %v914
    %2082 = vmatpush.msra.mxu0 %v910
    %2083 = vmatpush.msra.mxu0 %v906
    %2084 = vmatpush.msra.mxu0 %v902
    %2085 = vmatpush.msra.mxu0 %v898
    %2086 = vmatpush.msra.mxu0 %v894
    %2087 = vmatpush.msra.mxu0 %v890
    %2088 = vmatpush.msra.mxu0 %v886
    %2089 = vmatpush.msra.mxu0 %v882
    %2090 = vmatpush.msra.mxu0 %v878
    %2091 = vmatmul.f32.gmra.mxu0 %v1986
    %v2092 = vpop.f32.mrf.mxu0
    %v2093 = vadd.f32 0.0, %v2092
    %2094 = vdwg.mxu0
    %v2095 = vadd.f32 %v2011, %v2033
    %v2096 = vadd.f32 %v2012, %v2053
    %v2097 = vadd.f32 %v2013, %v2073
    %v2098 = vadd.f32 %v2014, %v2093
    %v2099 = vxor.u32 %v2095, 2147483648
    %v2100 = vmul.f32 %v2099, 1.442695
    %v2101 = vpow.pop %v2100
    %v2102 = vadd.f32 %v2101, 1.0
    %v2103 = vrcp.pop %v2102
    %v2104 = vmul.f32 %v2102, %v2103
    %v2105 = vsub.f32 1.0, %v2104
    %v2106 = vmul.f32 %v2103, %v2105
    %v2107 = vadd.f32 %v2103, %v2106
    %vm2108 = vweird.f32 %v2102
    %vm2109 = vweird.f32 %v2103
    %vm2110 = vmor %vm2108, %vm2109
    %v2111 = vsel %vm2110, %v2103, %v2107
    %v2112 = vand.u32 2147483647, %v2102
    %vm2113 = vcmp.eq.f32.partialorder %v2112, 8.507059e+37
    %v2114 = vand.u32 %v2102, 2147483648
    %v2115 = vor.u32 1.1754944e-38, %v2114
    %v2116 = vsel %vm2113, %v2115, %v2111
    %v2117 = vmul.f32 1.0, %v2116
    %v2118 = vxor.u32 %v2096, 2147483648
    %v2119 = vmul.f32 %v2118, 1.442695
    %v2120 = vpow.pop %v2119
    %v2121 = vadd.f32 %v2120, 1.0
    %v2122 = vrcp.pop %v2121
    %v2123 = vmul.f32 %v2121, %v2122
    %v2124 = vsub.f32 1.0, %v2123
    %v2125 = vmul.f32 %v2122, %v2124
    %v2126 = vadd.f32 %v2122, %v2125
    %vm2127 = vweird.f32 %v2121
    %vm2128 = vweird.f32 %v2122
    %vm2129 = vmor %vm2127, %vm2128
    %v2130 = vsel %vm2129, %v2122, %v2126
    %v2131 = vand.u32 2147483647, %v2121
    %vm2132 = vcmp.eq.f32.partialorder %v2131, 8.507059e+37
    %v2133 = vand.u32 %v2121, 2147483648
    %v2134 = vor.u32 1.1754944e-38, %v2133
    %v2135 = vsel %vm2132, %v2134, %v2130
    %v2136 = vmul.f32 1.0, %v2135
    %v2137 = vtanh.pop %v2097
    %v2138 = vxor.u32 %v2098, 2147483648
    %v2139 = vmul.f32 %v2138, 1.442695
    %v2140 = vpow.pop %v2139
    %v2141 = vadd.f32 %v2140, 1.0
    %v2142 = vrcp.pop %v2141
    %v2143 = vmul.f32 %v2141, %v2142
    %v2144 = vsub.f32 1.0, %v2143
    %v2145 = vmul.f32 %v2142, %v2144
    %v2146 = vadd.f32 %v2142, %v2145
    %vm2147 = vweird.f32 %v2141
    %vm2148 = vweird.f32 %v2142
    %vm2149 = vmor %vm2147, %vm2148
    %v2150 = vsel %vm2149, %v2142, %v2146
    %v2151 = vand.u32 2147483647, %v2141
    %vm2152 = vcmp.eq.f32.partialorder %v2151, 8.507059e+37
    %v2153 = vand.u32 %v2141, 2147483648
    %v2154 = vor.u32 1.1754944e-38, %v2153
    %v2155 = vsel %vm2152, %v2154, %v2150
    %v2156 = vmul.f32 1.0, %v2155
    %v2157 = vmul.f32 %v2136, %v1984
    %v2158 = vmul.f32 %v2117, %v2137
    %v2159 = vadd.f32 %v2157, %v2158
    %v2160 = vtanh.pop %v2159
    %v2161 = vmul.f32 %v2156, %v2160
    %2162 = vst [vmem:[#allocation3 + $0x6] sm:$0x1] %v2161
    %2163 = vst [vmem:[%s1112 + $0x5] sm:$0x2] %v2161
    %s2164 = scalar_lea.vmem [#allocation2], 7
    %v2165 = vld [vmem:[%s2164] ss:$8 sm:$0xf]
    %s2166 = scalar_lea.vmem %s870, 7 [#allocation2]
    %v2167 = vld [vmem:[%s2166] ss:$8 sm:$0xf]
    %v2169 = vperm.slane %v2165, 0
    %v2170 = vperm.slane %v2165, 1
    %v2171 = vperm.slane %v2165, 2
    %v2172 = vperm.slane %v2165, 3
    %v2178 = vperm.slane %v2167, 0
    %v2179 = vperm.slane %v2167, 1
    %v2180 = vperm.slane %v2167, 2
    %v2181 = vperm.slane %v2167, 3
    %v2186 = vsel %vm959, %v2169, %v2178
    %v2187 = vsel %vm959, %v2170, %v2179
    %v2188 = vsel %vm959, %v2171, %v2180
    %v2189 = vsel %vm959, %v2172, %v2181
    %2190 = vmatpush.msra.mxu0 %v935
    %2191 = vmatpush.msra.mxu0 %v931
    %2192 = vmatpush.msra.mxu0 %v927
    %2193 = vmatpush.msra.mxu0 %v923
    %2194 = vmatpush.msra.mxu0 %v919
    %2195 = vmatpush.msra.mxu0 %v915
    %2196 = vmatpush.msra.mxu0 %v911
    %2197 = vmatpush.msra.mxu0 %v907
    %2198 = vmatpush.msra.mxu0 %v903
    %2199 = vmatpush.msra.mxu0 %v899
    %2200 = vmatpush.msra.mxu0 %v895
    %2201 = vmatpush.msra.mxu0 %v891
    %2202 = vmatpush.msra.mxu0 %v887
    %2203 = vmatpush.msra.mxu0 %v883
    %2204 = vmatpush.msra.mxu0 %v879
    %2205 = vmatpush.msra.mxu0 %v875
    %2206 = vmatmul.f32.gmra.mxu0 %v2161
    %v2207 = vpop.f32.mrf.mxu0
    %v2208 = vadd.f32 0.0, %v2207
    %2209 = vdwg.mxu0
    %2210 = vmatpush.msra.mxu0 %v936
    %2211 = vmatpush.msra.mxu0 %v932
    %2212 = vmatpush.msra.mxu0 %v928
    %2213 = vmatpush.msra.mxu0 %v924
    %2214 = vmatpush.msra.mxu0 %v920
    %2215 = vmatpush.msra.mxu0 %v916
    %2216 = vmatpush.msra.mxu0 %v912
    %2217 = vmatpush.msra.mxu0 %v908
    %2218 = vmatpush.msra.mxu0 %v904
    %2219 = vmatpush.msra.mxu0 %v900
    %2220 = vmatpush.msra.mxu0 %v896
    %2221 = vmatpush.msra.mxu0 %v892
    %2222 = vmatpush.msra.mxu0 %v888
    %2223 = vmatpush.msra.mxu0 %v884
    %2224 = vmatpush.msra.mxu0 %v880
    %2225 = vmatpush.msra.mxu0 %v876
    %2226 = vmatmul.f32.gmra.mxu0 %v2161
    %v2227 = vpop.f32.mrf.mxu0
    %v2228 = vadd.f32 0.0, %v2227
    %2229 = vdwg.mxu0
    %2230 = vmatpush.msra.mxu0 %v937
    %2231 = vmatpush.msra.mxu0 %v933
    %2232 = vmatpush.msra.mxu0 %v929
    %2233 = vmatpush.msra.mxu0 %v925
    %2234 = vmatpush.msra.mxu0 %v921
    %2235 = vmatpush.msra.mxu0 %v917
    %2236 = vmatpush.msra.mxu0 %v913
    %2237 = vmatpush.msra.mxu0 %v909
    %2238 = vmatpush.msra.mxu0 %v905
    %2239 = vmatpush.msra.mxu0 %v901
    %2240 = vmatpush.msra.mxu0 %v897
    %2241 = vmatpush.msra.mxu0 %v893
    %2242 = vmatpush.msra.mxu0 %v889
    %2243 = vmatpush.msra.mxu0 %v885
    %2244 = vmatpush.msra.mxu0 %v881
    %2245 = vmatpush.msra.mxu0 %v877
    %2246 = vmatmul.f32.gmra.mxu0 %v2161
    %v2247 = vpop.f32.mrf.mxu0
    %v2248 = vadd.f32 0.0, %v2247
    %2249 = vdwg.mxu0
    %2250 = vmatpush.msra.mxu0 %v938
    %2251 = vmatpush.msra.mxu0 %v934
    %2252 = vmatpush.msra.mxu0 %v930
    %2253 = vmatpush.msra.mxu0 %v926
    %2254 = vmatpush.msra.mxu0 %v922
    %2255 = vmatpush.msra.mxu0 %v918
    %2256 = vmatpush.msra.mxu0 %v914
    %2257 = vmatpush.msra.mxu0 %v910
    %2258 = vmatpush.msra.mxu0 %v906
    %2259 = vmatpush.msra.mxu0 %v902
    %2260 = vmatpush.msra.mxu0 %v898
    %2261 = vmatpush.msra.mxu0 %v894
    %2262 = vmatpush.msra.mxu0 %v890
    %2263 = vmatpush.msra.mxu0 %v886
    %2264 = vmatpush.msra.mxu0 %v882
    %2265 = vmatpush.msra.mxu0 %v878
    %2266 = vmatmul.f32.gmra.mxu0 %v2161
    %v2267 = vpop.f32.mrf.mxu0
    %v2268 = vadd.f32 0.0, %v2267
    %2269 = vdwg.mxu0
    %v2270 = vadd.f32 %v2186, %v2208
    %v2271 = vadd.f32 %v2187, %v2228
    %v2272 = vadd.f32 %v2188, %v2248
    %v2273 = vadd.f32 %v2189, %v2268
    %v2274 = vxor.u32 %v2270, 2147483648
    %v2275 = vmul.f32 %v2274, 1.442695
    %v2276 = vpow.pop %v2275
    %v2277 = vadd.f32 %v2276, 1.0
    %v2278 = vrcp.pop %v2277
    %v2279 = vmul.f32 %v2277, %v2278
    %v2280 = vsub.f32 1.0, %v2279
    %v2281 = vmul.f32 %v2278, %v2280
    %v2282 = vadd.f32 %v2278, %v2281
    %vm2283 = vweird.f32 %v2277
    %vm2284 = vweird.f32 %v2278
    %vm2285 = vmor %vm2283, %vm2284
    %v2286 = vsel %vm2285, %v2278, %v2282
    %v2287 = vand.u32 2147483647, %v2277
    %vm2288 = vcmp.eq.f32.partialorder %v2287, 8.507059e+37
    %v2289 = vand.u32 %v2277, 2147483648
    %v2290 = vor.u32 1.1754944e-38, %v2289
    %v2291 = vsel %vm2288, %v2290, %v2286
    %v2292 = vmul.f32 1.0, %v2291
    %v2293 = vxor.u32 %v2271, 2147483648
    %v2294 = vmul.f32 %v2293, 1.442695
    %v2295 = vpow.pop %v2294
    %v2296 = vadd.f32 %v2295, 1.0
    %v2297 = vrcp.pop %v2296
    %v2298 = vmul.f32 %v2296, %v2297
    %v2299 = vsub.f32 1.0, %v2298
    %v2300 = vmul.f32 %v2297, %v2299
    %v2301 = vadd.f32 %v2297, %v2300
    %vm2302 = vweird.f32 %v2296
    %vm2303 = vweird.f32 %v2297
    %vm2304 = vmor %vm2302, %vm2303
    %v2305 = vsel %vm2304, %v2297, %v2301
    %v2306 = vand.u32 2147483647, %v2296
    %vm2307 = vcmp.eq.f32.partialorder %v2306, 8.507059e+37
    %v2308 = vand.u32 %v2296, 2147483648
    %v2309 = vor.u32 1.1754944e-38, %v2308
    %v2310 = vsel %vm2307, %v2309, %v2305
    %v2311 = vmul.f32 1.0, %v2310
    %v2312 = vtanh.pop %v2272
    %v2313 = vxor.u32 %v2273, 2147483648
    %v2314 = vmul.f32 %v2313, 1.442695
    %v2315 = vpow.pop %v2314
    %v2316 = vadd.f32 %v2315, 1.0
    %v2317 = vrcp.pop %v2316
    %v2318 = vmul.f32 %v2316, %v2317
    %v2319 = vsub.f32 1.0, %v2318
    %v2320 = vmul.f32 %v2317, %v2319
    %v2321 = vadd.f32 %v2317, %v2320
    %vm2322 = vweird.f32 %v2316
    %vm2323 = vweird.f32 %v2317
    %vm2324 = vmor %vm2322, %vm2323
    %v2325 = vsel %vm2324, %v2317, %v2321
    %v2326 = vand.u32 2147483647, %v2316
    %vm2327 = vcmp.eq.f32.partialorder %v2326, 8.507059e+37
    %v2328 = vand.u32 %v2316, 2147483648
    %v2329 = vor.u32 1.1754944e-38, %v2328
    %v2330 = vsel %vm2327, %v2329, %v2325
    %v2331 = vmul.f32 1.0, %v2330
    %v2332 = vmul.f32 %v2311, %v2159
    %v2333 = vmul.f32 %v2292, %v2312
    %v2334 = vadd.f32 %v2332, %v2333
    %v2335 = vtanh.pop %v2334
    %v2336 = vmul.f32 %v2331, %v2335
    %2337 = vst [vmem:[#allocation3 + $0x7] sm:$0x1] %v2336
    %2338 = vst [vmem:[%s1112 + $0x6] sm:$0x2] %v2336
    %v2339 = vld [vmem:[#allocation3] sm:$0xff]
    %v2340 = vld [vmem:[%s1112] sm:$0xff]
    %v2341 = vld [vmem:[#allocation15] sm:$0xff]
    %v2342 = vld [vmem:[#allocation15 + $0x8] sm:$0xff]
    %v2343 = vld [vmem:[#allocation15 + $0x10] sm:$0xff]
    %v2344 = vld [vmem:[#allocation15 + $0x18] sm:$0xff]
    %v2345 = vld [vmem:[#allocation15 + $0x20] sm:$0xff]
    %v2346 = vld [vmem:[#allocation15 + $0x28] sm:$0xff]
    %v2347 = vld [vmem:[#allocation15 + $0x30] sm:$0xff]
    %v2348 = vld [vmem:[#allocation15 + $0x38] sm:$0xff]
    %v2349 = vld [vmem:[#allocation15 + $0x40] sm:$0xff]
    %v2350 = vld [vmem:[#allocation15 + $0x48] sm:$0xff]
    %v2351 = vld [vmem:[#allocation15 + $0x50] sm:$0xff]
    %v2352 = vld [vmem:[#allocation15 + $0x58] sm:$0xff]
    %v2353 = vld [vmem:[#allocation15 + $0x60] sm:$0xff]
    %v2354 = vld [vmem:[#allocation15 + $0x68] sm:$0xff]
    %v2355 = vld [vmem:[#allocation15 + $0x70] sm:$0xff]
    %v2356 = vld [vmem:[#allocation15 + $0x78] sm:$0xff]
    %v2357 = vld [vmem:[%s9] sm:$0x1]
    %v2359 = vperm.slane %v2357, 0
    %2361 = vmatpush.msra.mxu0 %v2356
    %2362 = vmatpush.msra.mxu0 %v2355
    %2363 = vmatpush.msra.mxu0 %v2354
    %2364 = vmatpush.msra.mxu0 %v2353
    %2365 = vmatpush.msra.mxu0 %v2352
    %2366 = vmatpush.msra.mxu0 %v2351
    %2367 = vmatpush.msra.mxu0 %v2350
    %2368 = vmatpush.msra.mxu0 %v2349
    %2369 = vmatpush.msra.mxu0 %v2348
    %2370 = vmatpush.msra.mxu0 %v2347
    %2371 = vmatpush.msra.mxu0 %v2346
    %2372 = vmatpush.msra.mxu0 %v2345
    %2373 = vmatpush.msra.mxu0 %v2344
    %2374 = vmatpush.msra.mxu0 %v2343
    %2375 = vmatpush.msra.mxu0 %v2342
    %2376 = vmatpush.msra.mxu0 %v2341
    %2377 = vmatmul.f32.gmra.mxu0 %v2339
    %v2378 = vpop.f32.mrf.mxu0
    %v2379 = vadd.f32 %v2359, %v2378
    %2380 = vmatmul.f32.gmra.mxu0 %v2340
    %v2381 = vpop.f32.mrf.mxu0
    %v2382 = vadd.f32 %v2359, %v2381
    %2383 = vdwg.mxu0
    %2384 = vst [vmem:[#allocation16] sm:$0xff] %v2379
    %s2385 = scalar_lea.vmem [#allocation16], 8
    %2386 = vst [vmem:[%s2385] sm:$0xff] %v2382
    // Predicated region
    $region70: #{tpu_custom_call.1} parent=1 // pred_check
      _
    $region71: #{tpu_custom_call.1} parent=1 // pred_check_branch
      %2388 = sbr.rel (0) target = $region73
    $region72: #{tpu_custom_call.1} parent=1 // pred_region
      %2390 = vsyncadd [#allocation6], 0
      %s2391 = sshll.u32 [#allocation16], 4
      %s2392 = int_to_ptr.vmem [resolvable:$true] %s2391
      %s2393 = sshll.u32 %s10, 4
      %s2394 = int_to_ptr.hbm [resolvable:$true] %s2393
      %2399 = dma.vmem_to_hbm [thread:$0]  %s2392, 256, %s2394, [#allocation6], 128, 128, 8
    $region73: #{tpu_custom_call.1} parent=1 // pred_fallthru
      _
    // Predicated region
    $region74: #{tpu_custom_call.1} parent=1 // pred_check
      _
    $region75: #{tpu_custom_call.1} parent=1 // pred_check_branch
      %2401 = sbr.rel (0) target = $region77
    $region76: #{tpu_custom_call.1} parent=1 // pred_region
      %2403 = dma.done [#allocation6], 256
    $region77: #{tpu_custom_call.1} parent=1 // pred_fallthru
      _
    %2404 = vsyncpa [#allocation5], 1
    %2405 = vsyncpa [#allocation8], 1
    %2406 = vsyncpa [#allocation11], 1
    %2407 = vsyncpa [#allocation14], 1
    %2408 = vsyncpa [#allocation6], 1

</llo_original>
